<compile_context>
chip_gen: v7x
topology: tpu7x:2x2x1
jax: 0.10.0
libtpu: 0.0.40
codegen_flags: <defaults>
</compile_context>

<pallas_src>
import functools
import math

import numpy as np
import jax
import jax.numpy as jnp
from jax import lax
from jax.experimental import pallas as pl
from jax.experimental.pallas import tpu as pltpu

EPS = 1e-5                      # nn.LayerNorm default
NEG_INF = -1e30                 # large-negative causal mask (robust vs -inf)


# ----------------------------- hardware-aware knobs --------------------------

@functools.lru_cache(maxsize=None)
def _vmem_limit_bytes():
    """Per-generation VMEM limit: ~75% of physical (96 MiB on v5e/v6e 128 MiB,
    48 MiB on v7x 64 MiB).  Falls back to 48 MiB if the query is unavailable."""
    cap = 64 * 1024 * 1024
    try:
        info = pltpu.get_tpu_info()
        cap = int(getattr(info, "vmem_capacity_bytes", cap))
    except Exception:
        pass
    return int(cap * 3 // 4)


def _pick_batch_tile(N, L, E):
    """Largest divisor of N whose f32 activation block fits a slice of VMEM.
    Bigger B_tile => per-layer weights streamed from HBM fewer times."""
    budget = max(4 * 1024 * 1024, _vmem_limit_bytes() // 12)
    cap = max(1, budget // (4 * E * L))
    bt = 1
    for cand in range(1, N + 1):
        if N % cand == 0 and cand <= cap:
            bt = cand
    return bt


def _pick_row_tile(M):
    """LM-head row tile: largest multiple-of-8 divisor of M, capped at 256."""
    for t in range(256, 0, -8):
        if M % t == 0:
            return t
    return M


# ----------------------------- in-kernel helpers -----------------------------

def _layernorm(x, w, b):
    mu = jnp.mean(x, axis=-1, keepdims=True)
    xc = x - mu
    var = jnp.mean(xc * xc, axis=-1, keepdims=True)
    return xc * lax.rsqrt(var + EPS) * w + b


def _erf(x):
    # Abramowitz & Stegun 7.1.26 polynomial (|err| < 1.5e-7), built only from
    # ops guaranteed to lower on Mosaic (exp / mul / add / where).
    a1, a2, a3, a4, a5 = 0.254829592, -0.284496736, 1.421413741, -1.453152027, 1.061405429
    p = 0.3275911
    z = jnp.abs(x)
    t = 1.0 / (1.0 + p * z)
    poly = ((((a5 * t + a4) * t + a3) * t + a2) * t + a1) * t
    y = 1.0 - poly * jnp.exp(-z * z)
    return jnp.where(x < 0.0, -y, y)


def _gelu_exact(x):
    # nn.GELU() default = exact (erf) formulation
    return 0.5 * x * (1.0 + _erf(x * 0.7071067811865476))


# ----------------------------- transformer stack kernel ----------------------

def _make_block_kernel(B, L, H, E):
    hd = E // H
    rows = B * L
    scale = 1.0 / math.sqrt(hd)

    def kernel(x_ref, mask_ref, ln1w, ln1b, wqkv, bqkv, wo, bo,
               ln2w, ln2b, w1, b1, w2, b2, h_ref):
        layer = pl.program_id(1)

        # Layer 0: seed the residual stream.  The output block stays resident
        # across the whole layer sweep of this batch tile (same block index).
        @pl.when(layer == 0)
        def _():
            h_ref[...] = x_ref[...]

        x = h_ref[...]                                      # (rows, E) f32
        h1 = _layernorm(x, ln1w[0], ln1b[0])                # ln_1 (f32)
        h1b = h1.astype(jnp.bfloat16)

        # --- fused QKV projection: single wide bf16 matmul, f32 accumulate.
        qkv = jnp.dot(h1b, wqkv[0],
                      preferred_element_type=jnp.float32) + bqkv[0]   # (rows, 3E)

        mask = mask_ref[...]                                # (L, L) additive causal

        # --- attention, one head at a time (only one (B, L, L) score block is
        # live at a time); per-head context is folded into the output
        # projection via MXU accumulation (no (H, rows, E) intermediate).
        attn = jnp.zeros((rows, E), jnp.float32)
        for hh in range(H):                                 # static unroll, H small
            q = qkv[:, hh * hd:(hh + 1) * hd].reshape(B, L, hd)
            k = qkv[:, E + hh * hd:E + (hh + 1) * hd].reshape(B, L, hd)
            v = qkv[:, 2 * E + hh * hd:2 * E + (hh + 1) * hd].reshape(B, L, hd)

            s = jnp.einsum('bqd,bkd->bqk', (q * scale).astype(jnp.bfloat16),
                           k.astype(jnp.bfloat16),
                           preferred_element_type=jnp.float32)        # (B, L, L)
            s = s + mask
            s = s - jnp.max(s, axis=-1, keepdims=True)
            p = jnp.exp(s)
            p = p * pl.reciprocal(jnp.sum(p, axis=-1, keepdims=True), approx=True)

            ctx = jnp.einsum('bqk,bkd->bqd', p.astype(jnp.bfloat16),
                             v.astype(jnp.bfloat16),
                             preferred_element_type=jnp.float32)      # (B, L, hd)
            attn = attn + jnp.dot(ctx.reshape(rows, hd).astype(jnp.bfloat16),
                                  wo[0, hh],
                                  preferred_element_type=jnp.float32)  # (rows, E)
        attn = attn + bo[0]

        # NOTE: residual from ln_1 *output* — matches the reference code quirk.
        x2 = h1 + attn

        h2 = _layernorm(x2, ln2w[0], ln2b[0])                          # ln_2
        hid = jnp.dot(h2.astype(jnp.bfloat16), w1[0],
                      preferred_element_type=jnp.float32) + b1[0]      # (rows, 4E)
        hid = _gelu_exact(hid)
        m = jnp.dot(hid.astype(jnp.bfloat16), w2[0],
                    preferred_element_type=jnp.float32) + b2[0]        # (rows, E)
        h_ref[...] = x2 + m

    return kernel


def _run_blocks(h2d, mask, sp, L, N, H, E):
    num_layers = sp["wqkv"].shape[0]
    F = 4 * E
    hd = E // H
    B_tile = _pick_batch_tile(N, L, E)
    rows = B_tile * L
    kernel = _make_block_kernel(B_tile, L, H, E)

    row_map = lambda b, l: (b, 0)          # activation tile follows the batch axis
    mask_map = lambda b, l: (0, 0)         # causal mask: constant block => resident
    w3 = lambda b, l: (l, 0, 0)            # stacked weights follow the layer axis
    w4 = lambda b, l: (l, 0, 0, 0)

    in_specs = [
        pl.BlockSpec((rows, E), row_map),           # x (initial activations)
        pl.BlockSpec((L, L), mask_map),             # causal mask (hoisted)
        pl.BlockSpec((1, 1, E), w3),                # ln1_w
        pl.BlockSpec((1, 1, E), w3),                # ln1_b
        pl.BlockSpec((1, E, 3 * E), w3),            # wqkv (fused, unpadded)
        pl.BlockSpec((1, 1, 3 * E), w3),            # bqkv
        pl.BlockSpec((1, H, hd, E), w4),            # wo (head-split, unpadded)
        pl.BlockSpec((1, 1, E), w3),                # bo
        pl.BlockSpec((1, 1, E), w3),                # ln2_w
        pl.BlockSpec((1, 1, E), w3),                # ln2_b
        pl.BlockSpec((1, E, F), w3),                # w1
        pl.BlockSpec((1, 1, F), w3),                # b1
        pl.BlockSpec((1, F, E), w3),                # w2
        pl.BlockSpec((1, 1, E), w3),                # b2
    ]

    return pl.pallas_call(
        kernel,
        out_shape=jax.ShapeDtypeStruct((N * L, E), jnp.float32),
        grid_spec=pltpu.PrefetchScalarGridSpec(
            num_scalar_prefetch=0,
            grid=(N // B_tile, num_layers),
            in_specs=in_specs,
            out_specs=pl.BlockSpec((rows, E), row_map),
        ),
        compiler_params=pltpu.CompilerParams(
            dimension_semantics=("parallel", "arbitrary"),
            vmem_limit_bytes=_vmem_limit_bytes(),
        ),
    )(h2d, mask, sp["ln1_w"], sp["ln1_b"], sp["wqkv"], sp["bqkv"], sp["wo"],
      sp["bo"], sp["ln2_w"], sp["ln2_b"], sp["w1"], sp["b1"], sp["w2"], sp["b2"])


# ----------------------------- final ln + lm head kernel ----------------------

def _final_kernel(x_ref, lnw, lnb, wh, hn_ref, logits_ref):
    # hn is resident across the vocab grid axis: compute it once per row tile.
    @pl.when(pl.program_id(1) == 0)
    def _():
        hn_ref[...] = _layernorm(x_ref[...], lnw[...], lnb[...])
    logits_ref[...] = jnp.dot(hn_ref[...].astype(jnp.bfloat16), wh[...],
                              preferred_element_type=jnp.float32)


def _run_final(h2d, lnf_w, lnf_b, head_w_p):
    M, E = h2d.shape
    Vp = head_w_p.shape[1]
    TM = _pick_row_tile(M)          # up to 256 rows => near-full MXU, few head re-streams
    TV = min(Vp, 1024)              # lane-dense vocab tile (Vp padded to 1024 multiple)
    grid = (M // TM, Vp // TV)
    return pl.pallas_call(
        _final_kernel,
        out_shape=(jax.ShapeDtypeStruct((M, E), jnp.float32),
                   jax.ShapeDtypeStruct((M, Vp), jnp.float32)),
        grid_spec=pltpu.PrefetchScalarGridSpec(
            num_scalar_prefetch=0,
            grid=grid,
            in_specs=[
                pl.BlockSpec((TM, E), lambda m, v: (m, 0)),
                pl.BlockSpec((1, E), lambda m, v: (0, 0)),
                pl.BlockSpec((1, E), lambda m, v: (0, 0)),
                pl.BlockSpec((E, TV), lambda m, v: (0, v)),
            ],
            out_specs=(pl.BlockSpec((TM, E), lambda m, v: (m, 0)),
                       pl.BlockSpec((TM, TV), lambda m, v: (m, v))),
        ),
        compiler_params=pltpu.CompilerParams(
            dimension_semantics=("parallel", "arbitrary"),
            vmem_limit_bytes=_vmem_limit_bytes(),
        ),
    )(h2d, lnf_w, lnf_b, head_w_p)


# ----------------------------- weight preparation (done ONCE, outside jit) ----

def _prepare_block_params(layers, E, H):
    """Fuse QKV into one (E, 3E) bf16 matrix, head-split Wo (unpadded), bf16-cast
    the matmul operands, and stack everything with a leading layer axis so the
    layer index becomes a grid dimension (layer l+1 weight DMA prefetched
    behind layer l compute)."""
    hd = E // H

    def f32(x):
        return x.astype(jnp.float32)

    def bf16(x):
        return x.astype(jnp.bfloat16)

    def fused_qkv_w(p):     # 3 x (E, E) -> (E, 3E) bf16
        return jnp.concatenate([p["wq"], p["wk"], p["wv"]], axis=1).astype(jnp.bfloat16)

    def fused_qkv_b(p):     # 3 x (1, E) -> (1, 3E) f32
        return jnp.concatenate([p["bq"], p["bk"], p["bv"]], axis=1).astype(jnp.float32)

    def out_w(p):           # (E = H*hd, E) -> (H, hd, E) bf16 (no padding)
        return p["wo"].reshape(H, hd, E).astype(jnp.bfloat16)

    def stack(fn):
        return jnp.stack([fn(p) for p in layers])

    return {
        "ln1_w": stack(lambda p: f32(p["ln1_w"])), "ln1_b": stack(lambda p: f32(p["ln1_b"])),
        "ln2_w": stack(lambda p: f32(p["ln2_w"])), "ln2_b": stack(lambda p: f32(p["ln2_b"])),
        "wqkv": stack(fused_qkv_w), "bqkv": stack(fused_qkv_b),
        "wo": stack(out_w), "bo": stack(lambda p: f32(p["bo"])),
        "w1": stack(lambda p: bf16(p["w1"])), "b1": stack(lambda p: f32(p["b1"])),
        "w2": stack(lambda p: bf16(p["w2"])), "b2": stack(lambda p: f32(p["b2"])),
    }


def _prepare_head(head_w, multiple=1024):
    E, V = head_w.shape
    Vp = ((V + multiple - 1) // multiple) * multiple   # lane-dense, zero pad => exact
    if Vp != V:
        head_w = jnp.pad(head_w, ((0, 0), (0, Vp - V)))
    return head_w.astype(jnp.bfloat16)


def prepare_params(params, E, H):
    """One-time weight preparation, hoisted out of the jitted forward."""
    return {
        "wte": params["wte"].astype(jnp.float32),
        "wpe": params["wpe"].astype(jnp.float32),
        "sos": params["sos"].astype(jnp.float32),
        "lnf_w": params["lnf_w"].astype(jnp.float32),
        "lnf_b": params["lnf_b"].astype(jnp.float32),
        "head_w_p": _prepare_head(params["head_w"]),
        "clf_w": params["clf_w"].astype(jnp.float32),
        "clf_b": params["clf_b"].astype(jnp.float32),
        "blocks": _prepare_block_params(params["layers"], E, H),
    }


# ----------------------------- full model (Pallas) ---------------------------

def gpt2_pallas(x_tokens, pp, E, H, V, classify=False):
    L, N = x_tokens.shape

    # Embedding gather / sos shift / position add: cheap JAX glue.
    tok = jnp.take(pp["wte"], x_tokens, axis=0)                      # (L, N, E)
    sos = jnp.ones((1, N, E), jnp.float32) * pp["sos"]
    h = jnp.concatenate([sos, tok[:-1]], axis=0)
    h = h + pp["wpe"][:L][:, None, :]
    h2d = jnp.transpose(h, (1, 0, 2)).reshape(N * L, E)              # batch-major rows

    # Additive causal mask: built once, passed to the kernel as a resident input.
    ri = jnp.arange(L)
    mask = jnp.where(ri[None, :] > ri[:, None], NEG_INF, 0.0).astype(jnp.float32)

    h2d = _run_blocks(h2d, mask, pp["blocks"], L, N, H, E)
    hn2d, logits2d = _run_final(h2d, pp["lnf_w"], pp["lnf_b"], pp["head_w_p"])

    logits = jnp.transpose(logits2d[:, :V].reshape(N, L, V), (1, 0, 2))   # (L, N, V)
    if not classify:
        return logits
    h_mean = jnp.mean(hn2d.reshape(N, L, E), axis=1)                 # mean over sequence
    clf = h_mean @ pp["clf_w"] + pp["clf_b"]                         # tiny glue matmul
    return clf, logits


# ----------------------------- pure-JAX reference ----------------------------

def _ref_block(x, p, H):
    L, N, E = x.shape
    hd = E // H
    scale = 1.0 / math.sqrt(hd)
    h1 = _layernorm(x, p["ln1_w"], p["ln1_b"])
    q = h1 @ p["wq"] + p["bq"]
    k = h1 @ p["wk"] + p["bk"]
    v = h1 @ p["wv"] + p["bv"]
    i = jnp.arange(L)
    causal = jnp.where(i[None, :] > i[:, None], -jnp.inf, 0.0).astype(jnp.float32)
    ctx_heads = []
    for hh in range(H):
        sl = slice(hh * hd, (hh + 1) * hd)
        s = jnp.einsum("lnd,mnd->nlm", q[..., sl] * scale, k[..., sl]) + causal
        pa = jax.nn.softmax(s, axis=-1)
        ctx_heads.append(jnp.einsum("nlm,mnd->lnd", pa, v[..., sl]))
    ctx = jnp.concatenate(ctx_heads, axis=-1)
    attn = ctx @ p["wo"] + p["bo"]
    x2 = h1 + attn
    h2 = _layernorm(x2, p["ln2_w"], p["ln2_b"])
    m = jax.nn.gelu(h2 @ p["w1"] + p["b1"], approximate=False) @ p["w2"] + p["b2"]
    return x2 + m


def gpt2_reference(x_tokens, params, E, H, classify=False):
    L, N = x_tokens.shape
    tok = params["wte"][x_tokens]
    h = jnp.concatenate([jnp.ones((1, N, E), jnp.float32) * params["sos"], tok[:-1]], axis=0)
    h = h + params["wpe"][:L][:, None, :]
    for p in params["layers"]:
        h = _ref_block(h, p, H)
    hn = _layernorm(h, params["lnf_w"], params["lnf_b"])
    logits = hn @ params["head_w"]
    if not classify:
        return logits
    h_mean = jnp.mean(hn, axis=0)
    clf = h_mean @ params["clf_w"] + params["clf_b"]
    return clf, logits


# ----------------------------- deterministic init ----------------------------

def init_params(key, E, H, num_layers, num_positions, num_vocab, num_classes):
    keys = [key]

    def nxt():
        keys[0], sub = jax.random.split(keys[0])
        return sub

    std = 0.02
    params = {
        "sos": jax.random.normal(nxt(), (E,), jnp.float32),
        "wte": jax.random.normal(nxt(), (num_vocab, E), jnp.float32),
        "wpe": jax.random.normal(nxt(), (num_positions, E), jnp.float32),
        "lnf_w": jnp.ones((1, E), jnp.float32),
        "lnf_b": jnp.zeros((1, E), jnp.float32),
        "head_w": (jax.random.normal(nxt(), (num_vocab, E), jnp.float32) * std).T,
        "clf_w": (jax.random.normal(nxt(), (num_classes, E), jnp.float32) * std).T,
        "clf_b": jax.random.normal(nxt(), (num_classes,), jnp.float32) * std,
        "layers": [],
    }
    for _ in range(num_layers):
        in_proj_w = jax.random.normal(nxt(), (3 * E, E), jnp.float32) * std
        in_proj_b = jax.random.normal(nxt(), (3 * E,), jnp.float32) * std
        out_w = jax.random.normal(nxt(), (E, E), jnp.float32) * std
        out_b = jax.random.normal(nxt(), (E,), jnp.float32) * std
        fc1_w = jax.random.normal(nxt(), (4 * E, E), jnp.float32) * std
        fc1_b = jax.random.normal(nxt(), (4 * E,), jnp.float32) * std
        fc2_w = jax.random.normal(nxt(), (E, 4 * E), jnp.float32) * std
        fc2_b = jax.random.normal(nxt(), (E,), jnp.float32) * std
        params["layers"].append({
            "ln1_w": jnp.ones((1, E), jnp.float32), "ln1_b": jnp.zeros((1, E), jnp.float32),
            "ln2_w": jnp.ones((1, E), jnp.float32), "ln2_b": jnp.zeros((1, E), jnp.float32),
            "wq": in_proj_w[:E].T, "bq": in_proj_b[:E].reshape(1, E),
            "wk": in_proj_w[E:2 * E].T, "bk": in_proj_b[E:2 * E].reshape(1, E),
            "wv": in_proj_w[2 * E:].T, "bv": in_proj_b[2 * E:].reshape(1, E),
            "wo": out_w.T, "bo": out_b.reshape(1, E),
            "w1": fc1_w.T, "b1": fc1_b.reshape(1, 4 * E),
            "w2": fc2_w.T, "b2": fc2_b.reshape(1, E),
        })
    return params


# ----------------------------- main -------------------------------------------

if __name__ == "__main__":
    E, H, NUM_LAYERS = 32, 4, 2
    NUM_POSITIONS, NUM_VOCAB, NUM_CLASSES = 16, 16, 8
    L, N = 8, 2   # sequence length, batch (PyTorch input shape [L, N])

    key = jax.random.PRNGKey(0)
    pkey, xkey = jax.random.split(key)
    params = init_params(pkey, E, H, NUM_LAYERS, NUM_POSITIONS, NUM_VOCAB, NUM_CLASSES)
    x = jax.random.randint(xkey, (L, N), 0, NUM_VOCAB, dtype=jnp.int32)

    # Weight prep hoisted out of the jitted forward: done once, reused per call.
    prepped = prepare_params(params, E, H)

    fwd = jax.jit(functools.partial(gpt2_pallas, E=E, H=H, V=NUM_VOCAB, classify=True))
    clf_logits, logits = fwd(x, prepped)
    logits = jax.block_until_ready(logits)
    clf_logits = jax.block_until_ready(clf_logits)
    assert logits.shape == (L, N, NUM_VOCAB)
    assert clf_logits.shape == (N, NUM_CLASSES)

    with jax.default_matmul_precision("highest"):
        ref_clf, ref_logits = gpt2_reference(x, params, E, H, classify=True)
    # bf16 matmul operands + approx softmax reciprocal => slightly looser tolerance.
    np.testing.assert_allclose(np.asarray(logits), np.asarray(ref_logits),
                               rtol=5e-2, atol=5e-3)
    np.testing.assert_allclose(np.asarray(clf_logits), np.asarray(ref_clf),
                               rtol=5e-2, atol=5e-3)

    print("KERNEL_OK")
</pallas_src>

<mosaic_0001>
module attributes {stable_mosaic.version = 11 : i64} {
  func.func @_final_kernel(%arg0: i32, %arg1: i32, %arg2: memref<16x32xf32, #tpu.memory_space<vmem>>, %arg3: memref<1x32xf32, #tpu.memory_space<vmem>>, %arg4: memref<1x32xf32, #tpu.memory_space<vmem>>, %arg5: memref<32x1024xbf16, #tpu.memory_space<vmem>>, %arg6: memref<16x32xf32, #tpu.memory_space<vmem>>, %arg7: memref<16x1024xf32, #tpu.memory_space<vmem>>) attributes {dimension_semantics = [#tpu.dimension_semantics<parallel>, #tpu.dimension_semantics<arbitrary>], iteration_bounds = array<i64: 1, 1>, scalar_prefetch = 0 : i64, scratch_operands = 0 : i64, tpu.core_type = #tpu.core_type<tc>, window_params = [{transform_indices = @transform_0, window_bounds = array<i64: 16, 32>}, {pipeline_mode = #tpu.pipeline_mode<synchronous>, transform_indices = @transform_1, window_bounds = array<i64: 1, 32>}, {pipeline_mode = #tpu.pipeline_mode<synchronous>, transform_indices = @transform_2, window_bounds = array<i64: 1, 32>}, {transform_indices = @transform_3, window_bounds = array<i64: 32, 1024>}, {transform_indices = @transform_4, window_bounds = array<i64: 16, 32>}, {transform_indices = @transform_5, window_bounds = array<i64: 16, 1024>}]} {
    %c0_i32 = arith.constant 0 : i32
    %0 = arith.cmpi eq, %arg1, %c0_i32 : i32
    %1 = arith.extui %0 : i1 to i32
    %c0_i32_0 = arith.constant 0 : i32
    %2 = arith.cmpi ne, %1, %c0_i32_0 : i32
    scf.if %2 {
      %c0_6 = arith.constant 0 : index
      %c0_7 = arith.constant 0 : index
      %8 = vector.load %arg2[%c0_6, %c0_7] : memref<16x32xf32, #tpu.memory_space<vmem>>, vector<16x32xf32>
      %c0_8 = arith.constant 0 : index
      %c0_9 = arith.constant 0 : index
      %9 = vector.load %arg3[%c0_8, %c0_9] : memref<1x32xf32, #tpu.memory_space<vmem>>, vector<1x32xf32>
      %c0_10 = arith.constant 0 : index
      %c0_11 = arith.constant 0 : index
      %10 = vector.load %arg4[%c0_10, %c0_11] : memref<1x32xf32, #tpu.memory_space<vmem>>, vector<1x32xf32>
      %cst_12 = arith.constant dense<0.000000e+00> : vector<16xf32>
      %11 = vector.multi_reduction <add>, %8, %cst_12 [1] : vector<16x32xf32> to vector<16xf32>
      %12 = vector.shape_cast %11 : vector<16xf32> to vector<16x1xf32>
      %cst_13 = arith.constant 3.200000e+01 : f32
      %13 = vector.broadcast %cst_13 : f32 to vector<16x1xf32>
      %14 = arith.divf %12, %13 : vector<16x1xf32>
      %15 = vector.broadcast %14 : vector<16x1xf32> to vector<16x32xf32>
      %16 = arith.subf %8, %15 : vector<16x32xf32>
      %17 = arith.mulf %16, %16 : vector<16x32xf32>
      %cst_14 = arith.constant dense<0.000000e+00> : vector<16xf32>
      %18 = vector.multi_reduction <add>, %17, %cst_14 [1] : vector<16x32xf32> to vector<16xf32>
      %19 = vector.shape_cast %18 : vector<16xf32> to vector<16x1xf32>
      %cst_15 = arith.constant 3.200000e+01 : f32
      %20 = vector.broadcast %cst_15 : f32 to vector<16x1xf32>
      %21 = arith.divf %19, %20 : vector<16x1xf32>
      %cst_16 = arith.constant 9.99999974E-6 : f32
      %22 = vector.broadcast %cst_16 : f32 to vector<16x1xf32>
      %23 = arith.addf %21, %22 : vector<16x1xf32>
      %24 = math.rsqrt %23 : vector<16x1xf32>
      %25 = vector.broadcast %24 : vector<16x1xf32> to vector<16x32xf32>
      %26 = arith.mulf %16, %25 : vector<16x32xf32>
      %27 = vector.broadcast %9 : vector<1x32xf32> to vector<16x32xf32>
      %28 = arith.mulf %26, %27 : vector<16x32xf32>
      %29 = vector.broadcast %10 : vector<1x32xf32> to vector<16x32xf32>
      %30 = arith.addf %28, %29 : vector<16x32xf32>
      %c0_17 = arith.constant 0 : index
      %c0_18 = arith.constant 0 : index
      %31 = vector.load %arg6[%c0_17, %c0_18] : memref<16x32xf32, #tpu.memory_space<vmem>>, vector<16x32xf32>
      tpu.vector_store %arg6[%c0_17, %c0_18], %30 {strides = array<i32>} : memref<16x32xf32, #tpu.memory_space<vmem>>, vector<16x32xf32>,
    } else {
    }
    %c0 = arith.constant 0 : index
    %c0_1 = arith.constant 0 : index
    %3 = vector.load %arg6[%c0, %c0_1] : memref<16x32xf32, #tpu.memory_space<vmem>>, vector<16x32xf32>
    %4 = arith.truncf %3 : vector<16x32xf32> to vector<16x32xbf16>
    %c0_2 = arith.constant 0 : index
    %c0_3 = arith.constant 0 : index
    %5 = vector.load %arg5[%c0_2, %c0_3] : memref<32x1024xbf16, #tpu.memory_space<vmem>>, vector<32x1024xbf16>
    %cst = arith.constant dense<0.000000e+00> : vector<16x1024xf32>
    %6 = tpu.matmul %4, %5, %cst {dimension_numbers = #tpu.dot_dimension_numbers<[1], [0], [0], [1], [0, 0, 1, 1], [], []>} : vector<16x32xbf16>, vector<32x1024xbf16>, vector<16x1024xf32> -> vector<16x1024xf32>
    %c0_4 = arith.constant 0 : index
    %c0_5 = arith.constant 0 : index
    %7 = vector.load %arg7[%c0_4, %c0_5] : memref<16x1024xf32, #tpu.memory_space<vmem>>, vector<16x1024xf32>
    tpu.vector_store %arg7[%c0_4, %c0_5], %6 {strides = array<i32>} : memref<16x1024xf32, #tpu.memory_space<vmem>>, vector<16x1024xf32>,
    return
  }
  func.func @transform_0(%arg0: i32, %arg1: i32) -> (i32, i32) {
    %c0_i32 = arith.constant 0 : i32
    %c0_i32_0 = arith.constant 0 : i32
    return %arg0, %c0_i32 : i32, i32
  }
  func.func @transform_1(%arg0: i32, %arg1: i32) -> (i32, i32) {
    %c0_i32 = arith.constant 0 : i32
    %c0_i32_0 = arith.constant 0 : i32
    %c0_i32_1 = arith.constant 0 : i32
    return %c0_i32, %c0_i32_0 : i32, i32
  }
  func.func @transform_2(%arg0: i32, %arg1: i32) -> (i32, i32) {
    %c0_i32 = arith.constant 0 : i32
    %c0_i32_0 = arith.constant 0 : i32
    %c0_i32_1 = arith.constant 0 : i32
    return %c0_i32, %c0_i32_0 : i32, i32
  }
  func.func @transform_3(%arg0: i32, %arg1: i32) -> (i32, i32) {
    %c0_i32 = arith.constant 0 : i32
    %c0_i32_0 = arith.constant 0 : i32
    return %c0_i32, %arg1 : i32, i32
  }
  func.func @transform_4(%arg0: i32, %arg1: i32) -> (i32, i32) {
    %c0_i32 = arith.constant 0 : i32
    %c0_i32_0 = arith.constant 0 : i32
    return %arg0, %c0_i32 : i32, i32
  }
  func.func @transform_5(%arg0: i32, %arg1: i32) -> (i32, i32) {
    %c0_i32 = arith.constant 0 : i32
    return %arg0, %arg1 : i32, i32
  }
}

module attributes {stable_mosaic.version = 11 : i64} {
  func.func @kernel(%arg0: i32, %arg1: i32, %arg2: memref<16x32xf32, #tpu.memory_space<vmem>>, %arg3: memref<8x8xf32, #tpu.memory_space<vmem>>, %arg4: memref<1x1x32xf32, #tpu.memory_space<vmem>>, %arg5: memref<1x1x32xf32, #tpu.memory_space<vmem>>, %arg6: memref<1x32x96xbf16, #tpu.memory_space<vmem>>, %arg7: memref<1x1x96xf32, #tpu.memory_space<vmem>>, %arg8: memref<1x4x8x32xbf16, #tpu.memory_space<vmem>>, %arg9: memref<1x1x32xf32, #tpu.memory_space<vmem>>, %arg10: memref<1x1x32xf32, #tpu.memory_space<vmem>>, %arg11: memref<1x1x32xf32, #tpu.memory_space<vmem>>, %arg12: memref<1x32x128xbf16, #tpu.memory_space<vmem>>, %arg13: memref<1x1x128xf32, #tpu.memory_space<vmem>>, %arg14: memref<1x128x32xbf16, #tpu.memory_space<vmem>>, %arg15: memref<1x1x32xf32, #tpu.memory_space<vmem>>, %arg16: memref<16x32xf32, #tpu.memory_space<vmem>>) attributes {dimension_semantics = [#tpu.dimension_semantics<parallel>, #tpu.dimension_semantics<arbitrary>], iteration_bounds = array<i64: 1, 2>, scalar_prefetch = 0 : i64, scratch_operands = 0 : i64, tpu.core_type = #tpu.core_type<tc>, window_params = [{transform_indices = @transform_0, window_bounds = array<i64: 16, 32>}, {pipeline_mode = #tpu.pipeline_mode<synchronous>, transform_indices = @transform_1, window_bounds = array<i64: 8, 8>}, {transform_indices = @transform_2, window_bounds = array<i64: 1, 1, 32>}, {transform_indices = @transform_3, window_bounds = array<i64: 1, 1, 32>}, {transform_indices = @transform_4, window_bounds = array<i64: 1, 32, 96>}, {transform_indices = @transform_5, window_bounds = array<i64: 1, 1, 96>}, {transform_indices = @transform_6, window_bounds = array<i64: 1, 4, 8, 32>}, {transform_indices = @transform_7, window_bounds = array<i64: 1, 1, 32>}, {transform_indices = @transform_8, window_bounds = array<i64: 1, 1, 32>}, {transform_indices = @transform_9, window_bounds = array<i64: 1, 1, 32>}, {transform_indices = @transform_10, window_bounds = array<i64: 1, 32, 128>}, {transform_indices = @transform_11, window_bounds = array<i64: 1, 1, 128>}, {transform_indices = @transform_12, window_bounds = array<i64: 1, 128, 32>}, {transform_indices = @transform_13, window_bounds = array<i64: 1, 1, 32>}, {transform_indices = @transform_14, window_bounds = array<i64: 16, 32>}]} {
    %c0_i32 = arith.constant 0 : i32
    %0 = arith.cmpi eq, %arg1, %c0_i32 : i32
    %1 = arith.extui %0 : i1 to i32
    %c0_i32_0 = arith.constant 0 : i32
    %2 = arith.cmpi ne, %1, %c0_i32_0 : i32
    scf.if %2 {
      %c0_104 = arith.constant 0 : index
      %c0_105 = arith.constant 0 : index
      %257 = vector.load %arg2[%c0_104, %c0_105] : memref<16x32xf32, #tpu.memory_space<vmem>>, vector<16x32xf32>
      %c0_106 = arith.constant 0 : index
      %c0_107 = arith.constant 0 : index
      %258 = vector.load %arg16[%c0_106, %c0_107] : memref<16x32xf32, #tpu.memory_space<vmem>>, vector<16x32xf32>
      tpu.vector_store %arg16[%c0_106, %c0_107], %257 {strides = array<i32>} : memref<16x32xf32, #tpu.memory_space<vmem>>, vector<16x32xf32>,
    } else {
    }
    %c0 = arith.constant 0 : index
    %c0_1 = arith.constant 0 : index
    %3 = vector.load %arg16[%c0, %c0_1] : memref<16x32xf32, #tpu.memory_space<vmem>>, vector<16x32xf32>
    %c0_2 = arith.constant 0 : index
    %c0_3 = arith.constant 0 : index
    %c0_4 = arith.constant 0 : index
    %4 = vector.load %arg4[%c0_2, %c0_3, %c0_4] : memref<1x1x32xf32, #tpu.memory_space<vmem>>, vector<1x1x32xf32>
    %5 = vector.shape_cast %4 : vector<1x1x32xf32> to vector<1x32xf32>
    %c0_5 = arith.constant 0 : index
    %c0_6 = arith.constant 0 : index
    %c0_7 = arith.constant 0 : index
    %6 = vector.load %arg5[%c0_5, %c0_6, %c0_7] : memref<1x1x32xf32, #tpu.memory_space<vmem>>, vector<1x1x32xf32>
    %7 = vector.shape_cast %6 : vector<1x1x32xf32> to vector<1x32xf32>
    %cst = arith.constant dense<0.000000e+00> : vector<16xf32>
    %8 = vector.multi_reduction <add>, %3, %cst [1] : vector<16x32xf32> to vector<16xf32>
    %9 = vector.shape_cast %8 : vector<16xf32> to vector<16x1xf32>
    %cst_8 = arith.constant 3.200000e+01 : f32
    %10 = vector.broadcast %cst_8 : f32 to vector<16x1xf32>
    %11 = arith.divf %9, %10 : vector<16x1xf32>
    %12 = vector.broadcast %11 : vector<16x1xf32> to vector<16x32xf32>
    %13 = arith.subf %3, %12 : vector<16x32xf32>
    %14 = arith.mulf %13, %13 : vector<16x32xf32>
    %cst_9 = arith.constant dense<0.000000e+00> : vector<16xf32>
    %15 = vector.multi_reduction <add>, %14, %cst_9 [1] : vector<16x32xf32> to vector<16xf32>
    %16 = vector.shape_cast %15 : vector<16xf32> to vector<16x1xf32>
    %cst_10 = arith.constant 3.200000e+01 : f32
    %17 = vector.broadcast %cst_10 : f32 to vector<16x1xf32>
    %18 = arith.divf %16, %17 : vector<16x1xf32>
    %cst_11 = arith.constant 9.99999974E-6 : f32
    %19 = vector.broadcast %cst_11 : f32 to vector<16x1xf32>
    %20 = arith.addf %18, %19 : vector<16x1xf32>
    %21 = math.rsqrt %20 : vector<16x1xf32>
    %22 = vector.broadcast %21 : vector<16x1xf32> to vector<16x32xf32>
    %23 = arith.mulf %13, %22 : vector<16x32xf32>
    %24 = vector.broadcast %5 : vector<1x32xf32> to vector<16x32xf32>
    %25 = arith.mulf %23, %24 : vector<16x32xf32>
    %26 = vector.broadcast %7 : vector<1x32xf32> to vector<16x32xf32>
    %27 = arith.addf %25, %26 : vector<16x32xf32>
    %28 = arith.truncf %27 : vector<16x32xf32> to vector<16x32xbf16>
    %c0_12 = arith.constant 0 : index
    %c0_13 = arith.constant 0 : index
    %c0_14 = arith.constant 0 : index
    %29 = vector.load %arg6[%c0_12, %c0_13, %c0_14] : memref<1x32x96xbf16, #tpu.memory_space<vmem>>, vector<1x32x96xbf16>
    %30 = vector.shape_cast %29 : vector<1x32x96xbf16> to vector<32x96xbf16>
    %cst_15 = arith.constant dense<0.000000e+00> : vector<16x96xf32>
    %31 = tpu.matmul %28, %30, %cst_15 {dimension_numbers = #tpu.dot_dimension_numbers<[1], [0], [0], [1], [0, 0, 1, 1], [], []>} : vector<16x32xbf16>, vector<32x96xbf16>, vector<16x96xf32> -> vector<16x96xf32>
    %c0_16 = arith.constant 0 : index
    %c0_17 = arith.constant 0 : index
    %c0_18 = arith.constant 0 : index
    %32 = vector.load %arg7[%c0_16, %c0_17, %c0_18] : memref<1x1x96xf32, #tpu.memory_space<vmem>>, vector<1x1x96xf32>
    %33 = vector.shape_cast %32 : vector<1x1x96xf32> to vector<1x96xf32>
    %34 = vector.broadcast %33 : vector<1x96xf32> to vector<16x96xf32>
    %35 = arith.addf %31, %34 : vector<16x96xf32>
    %c0_19 = arith.constant 0 : index
    %c0_20 = arith.constant 0 : index
    %36 = vector.load %arg3[%c0_19, %c0_20] : memref<8x8xf32, #tpu.memory_space<vmem>>, vector<8x8xf32>
    %cst_21 = arith.constant 0.000000e+00 : f32
    %37 = vector.broadcast %cst_21 : f32 to vector<16x32xf32>
    %38 = vector.extract_strided_slice %35 {offsets = [0, 0], sizes = [16, 8], strides = [1, 1]} : vector<16x96xf32> to vector<16x8xf32>
    %39 = vector.shape_cast %38 : vector<16x8xf32> to vector<2x8x8xf32>
    %40 = vector.extract_strided_slice %35 {offsets = [0, 32], sizes = [16, 8], strides = [1, 1]} : vector<16x96xf32> to vector<16x8xf32>
    %41 = vector.shape_cast %40 : vector<16x8xf32> to vector<2x8x8xf32>
    %42 = vector.extract_strided_slice %35 {offsets = [0, 64], sizes = [16, 8], strides = [1, 1]} : vector<16x96xf32> to vector<16x8xf32>
    %43 = vector.shape_cast %42 : vector<16x8xf32> to vector<2x8x8xf32>
    %cst_22 = arith.constant 0.353553385 : f32
    %44 = vector.broadcast %cst_22 : f32 to vector<2x8x8xf32>
    %45 = arith.mulf %39, %44 : vector<2x8x8xf32>
    %46 = arith.truncf %45 : vector<2x8x8xf32> to vector<2x8x8xbf16>
    %47 = arith.truncf %41 : vector<2x8x8xf32> to vector<2x8x8xbf16>
    "tpu.trace_start"() <{level = 10 : i32, message = "bqd,bkd->bqk"}> : () -> ()
    %cst_23 = arith.constant dense<0.000000e+00> : vector<2x8x8xf32>
    %48 = tpu.matmul %46, %47, %cst_23 {dimension_numbers = #tpu.dot_dimension_numbers<[2], [2], [1], [1], [0, 0, 0, 1, 1, 1], [0], [0]>} : vector<2x8x8xbf16>, vector<2x8x8xbf16>, vector<2x8x8xf32> -> vector<2x8x8xf32>
    "tpu.trace_stop"() : () -> ()
    %49 = vector.shape_cast %36 : vector<8x8xf32> to vector<1x8x8xf32>
    %50 = vector.broadcast %49 : vector<1x8x8xf32> to vector<2x8x8xf32>
    %51 = arith.addf %48, %50 : vector<2x8x8xf32>
    %cst_24 = arith.constant dense<0xFF800000> : vector<2x8xf32>
    %52 = vector.multi_reduction <maximumf>, %51, %cst_24 [2] : vector<2x8x8xf32> to vector<2x8xf32>
    %53 = vector.shape_cast %52 : vector<2x8xf32> to vector<2x8x1xf32>
    %54 = vector.broadcast %53 : vector<2x8x1xf32> to vector<2x8x8xf32>
    %55 = arith.subf %51, %54 : vector<2x8x8xf32>
    %56 = math.exp %55 : vector<2x8x8xf32>
    %cst_25 = arith.constant dense<0.000000e+00> : vector<2x8xf32>
    %57 = vector.multi_reduction <add>, %56, %cst_25 [2] : vector<2x8x8xf32> to vector<2x8xf32>
    %58 = vector.shape_cast %57 : vector<2x8xf32> to vector<2x8x1xf32>
    %59 = tpu.reciprocal %58 {approx = true} : vector<2x8x1xf32> -> vector<2x8x1xf32>
    %60 = vector.broadcast %59 : vector<2x8x1xf32> to vector<2x8x8xf32>
    %61 = arith.mulf %56, %60 : vector<2x8x8xf32>
    %62 = arith.truncf %61 : vector<2x8x8xf32> to vector<2x8x8xbf16>
    %63 = arith.truncf %43 : vector<2x8x8xf32> to vector<2x8x8xbf16>
    "tpu.trace_start"() <{level = 10 : i32, message = "bqk,bkd->bqd"}> : () -> ()
    %cst_26 = arith.constant dense<0.000000e+00> : vector<2x8x8xf32>
    %64 = tpu.matmul %62, %63, %cst_26 {dimension_numbers = #tpu.dot_dimension_numbers<[2], [1], [1], [2], [0, 0, 0, 1, 1, 2], [0], [0]>} : vector<2x8x8xbf16>, vector<2x8x8xbf16>, vector<2x8x8xf32> -> vector<2x8x8xf32>
    "tpu.trace_stop"() : () -> ()
    %65 = vector.shape_cast %64 : vector<2x8x8xf32> to vector<16x8xf32>
    %66 = arith.truncf %65 : vector<16x8xf32> to vector<16x8xbf16>
    %c0_27 = arith.constant 0 : index
    %c0_28 = arith.constant 0 : index
    %c0_29 = arith.constant 0 : index
    %c0_30 = arith.constant 0 : index
    %67 = vector.load %arg8[%c0_27, %c0_28, %c0_29, %c0_30] : memref<1x4x8x32xbf16, #tpu.memory_space<vmem>>, vector<1x1x8x32xbf16>
    %68 = vector.shape_cast %67 : vector<1x1x8x32xbf16> to vector<8x32xbf16>
    %cst_31 = arith.constant dense<0.000000e+00> : vector<16x32xf32>
    %69 = tpu.matmul %66, %68, %cst_31 {dimension_numbers = #tpu.dot_dimension_numbers<[1], [0], [0], [1], [0, 0, 1, 1], [], []>} : vector<16x8xbf16>, vector<8x32xbf16>, vector<16x32xf32> -> vector<16x32xf32>
    %70 = arith.addf %37, %69 : vector<16x32xf32>
    %71 = vector.extract_strided_slice %35 {offsets = [0, 8], sizes = [16, 8], strides = [1, 1]} : vector<16x96xf32> to vector<16x8xf32>
    %72 = vector.shape_cast %71 : vector<16x8xf32> to vector<2x8x8xf32>
    %73 = vector.extract_strided_slice %35 {offsets = [0, 40], sizes = [16, 8], strides = [1, 1]} : vector<16x96xf32> to vector<16x8xf32>
    %74 = vector.shape_cast %73 : vector<16x8xf32> to vector<2x8x8xf32>
    %75 = vector.extract_strided_slice %35 {offsets = [0, 72], sizes = [16, 8], strides = [1, 1]} : vector<16x96xf32> to vector<16x8xf32>
    %76 = vector.shape_cast %75 : vector<16x8xf32> to vector<2x8x8xf32>
    %cst_32 = arith.constant 0.353553385 : f32
    %77 = vector.broadcast %cst_32 : f32 to vector<2x8x8xf32>
    %78 = arith.mulf %72, %77 : vector<2x8x8xf32>
    %79 = arith.truncf %78 : vector<2x8x8xf32> to vector<2x8x8xbf16>
    %80 = arith.truncf %74 : vector<2x8x8xf32> to vector<2x8x8xbf16>
    "tpu.trace_start"() <{level = 10 : i32, message = "bqd,bkd->bqk"}> : () -> ()
    %cst_33 = arith.constant dense<0.000000e+00> : vector<2x8x8xf32>
    %81 = tpu.matmul %79, %80, %cst_33 {dimension_numbers = #tpu.dot_dimension_numbers<[2], [2], [1], [1], [0, 0, 0, 1, 1, 1], [0], [0]>} : vector<2x8x8xbf16>, vector<2x8x8xbf16>, vector<2x8x8xf32> -> vector<2x8x8xf32>
    "tpu.trace_stop"() : () -> ()
    %82 = vector.shape_cast %36 : vector<8x8xf32> to vector<1x8x8xf32>
    %83 = vector.broadcast %82 : vector<1x8x8xf32> to vector<2x8x8xf32>
    %84 = arith.addf %81, %83 : vector<2x8x8xf32>
    %cst_34 = arith.constant dense<0xFF800000> : vector<2x8xf32>
    %85 = vector.multi_reduction <maximumf>, %84, %cst_34 [2] : vector<2x8x8xf32> to vector<2x8xf32>
    %86 = vector.shape_cast %85 : vector<2x8xf32> to vector<2x8x1xf32>
    %87 = vector.broadcast %86 : vector<2x8x1xf32> to vector<2x8x8xf32>
    %88 = arith.subf %84, %87 : vector<2x8x8xf32>
    %89 = math.exp %88 : vector<2x8x8xf32>
    %cst_35 = arith.constant dense<0.000000e+00> : vector<2x8xf32>
    %90 = vector.multi_reduction <add>, %89, %cst_35 [2] : vector<2x8x8xf32> to vector<2x8xf32>
    %91 = vector.shape_cast %90 : vector<2x8xf32> to vector<2x8x1xf32>
    %92 = tpu.reciprocal %91 {approx = true} : vector<2x8x1xf32> -> vector<2x8x1xf32>
    %93 = vector.broadcast %92 : vector<2x8x1xf32> to vector<2x8x8xf32>
    %94 = arith.mulf %89, %93 : vector<2x8x8xf32>
    %95 = arith.truncf %94 : vector<2x8x8xf32> to vector<2x8x8xbf16>
    %96 = arith.truncf %76 : vector<2x8x8xf32> to vector<2x8x8xbf16>
    "tpu.trace_start"() <{level = 10 : i32, message = "bqk,bkd->bqd"}> : () -> ()
    %cst_36 = arith.constant dense<0.000000e+00> : vector<2x8x8xf32>
    %97 = tpu.matmul %95, %96, %cst_36 {dimension_numbers = #tpu.dot_dimension_numbers<[2], [1], [1], [2], [0, 0, 0, 1, 1, 2], [0], [0]>} : vector<2x8x8xbf16>, vector<2x8x8xbf16>, vector<2x8x8xf32> -> vector<2x8x8xf32>
    "tpu.trace_stop"() : () -> ()
    %98 = vector.shape_cast %97 : vector<2x8x8xf32> to vector<16x8xf32>
    %99 = arith.truncf %98 : vector<16x8xf32> to vector<16x8xbf16>
    %c0_37 = arith.constant 0 : index
    %c1 = arith.constant 1 : index
    %c0_38 = arith.constant 0 : index
    %c0_39 = arith.constant 0 : index
    %100 = vector.load %arg8[%c0_37, %c1, %c0_38, %c0_39] : memref<1x4x8x32xbf16, #tpu.memory_space<vmem>>, vector<1x1x8x32xbf16>
    %101 = vector.shape_cast %100 : vector<1x1x8x32xbf16> to vector<8x32xbf16>
    %cst_40 = arith.constant dense<0.000000e+00> : vector<16x32xf32>
    %102 = tpu.matmul %99, %101, %cst_40 {dimension_numbers = #tpu.dot_dimension_numbers<[1], [0], [0], [1], [0, 0, 1, 1], [], []>} : vector<16x8xbf16>, vector<8x32xbf16>, vector<16x32xf32> -> vector<16x32xf32>
    %103 = arith.addf %70, %102 : vector<16x32xf32>
    %104 = vector.extract_strided_slice %35 {offsets = [0, 16], sizes = [16, 8], strides = [1, 1]} : vector<16x96xf32> to vector<16x8xf32>
    %105 = vector.shape_cast %104 : vector<16x8xf32> to vector<2x8x8xf32>
    %106 = vector.extract_strided_slice %35 {offsets = [0, 48], sizes = [16, 8], strides = [1, 1]} : vector<16x96xf32> to vector<16x8xf32>
    %107 = vector.shape_cast %106 : vector<16x8xf32> to vector<2x8x8xf32>
    %108 = vector.extract_strided_slice %35 {offsets = [0, 80], sizes = [16, 8], strides = [1, 1]} : vector<16x96xf32> to vector<16x8xf32>
    %109 = vector.shape_cast %108 : vector<16x8xf32> to vector<2x8x8xf32>
    %cst_41 = arith.constant 0.353553385 : f32
    %110 = vector.broadcast %cst_41 : f32 to vector<2x8x8xf32>
    %111 = arith.mulf %105, %110 : vector<2x8x8xf32>
    %112 = arith.truncf %111 : vector<2x8x8xf32> to vector<2x8x8xbf16>
    %113 = arith.truncf %107 : vector<2x8x8xf32> to vector<2x8x8xbf16>
    "tpu.trace_start"() <{level = 10 : i32, message = "bqd,bkd->bqk"}> : () -> ()
    %cst_42 = arith.constant dense<0.000000e+00> : vector<2x8x8xf32>
    %114 = tpu.matmul %112, %113, %cst_42 {dimension_numbers = #tpu.dot_dimension_numbers<[2], [2], [1], [1], [0, 0, 0, 1, 1, 1], [0], [0]>} : vector<2x8x8xbf16>, vector<2x8x8xbf16>, vector<2x8x8xf32> -> vector<2x8x8xf32>
    "tpu.trace_stop"() : () -> ()
    %115 = vector.shape_cast %36 : vector<8x8xf32> to vector<1x8x8xf32>
    %116 = vector.broadcast %115 : vector<1x8x8xf32> to vector<2x8x8xf32>
    %117 = arith.addf %114, %116 : vector<2x8x8xf32>
    %cst_43 = arith.constant dense<0xFF800000> : vector<2x8xf32>
    %118 = vector.multi_reduction <maximumf>, %117, %cst_43 [2] : vector<2x8x8xf32> to vector<2x8xf32>
    %119 = vector.shape_cast %118 : vector<2x8xf32> to vector<2x8x1xf32>
    %120 = vector.broadcast %119 : vector<2x8x1xf32> to vector<2x8x8xf32>
    %121 = arith.subf %117, %120 : vector<2x8x8xf32>
    %122 = math.exp %121 : vector<2x8x8xf32>
    %cst_44 = arith.constant dense<0.000000e+00> : vector<2x8xf32>
    %123 = vector.multi_reduction <add>, %122, %cst_44 [2] : vector<2x8x8xf32> to vector<2x8xf32>
    %124 = vector.shape_cast %123 : vector<2x8xf32> to vector<2x8x1xf32>
    %125 = tpu.reciprocal %124 {approx = true} : vector<2x8x1xf32> -> vector<2x8x1xf32>
    %126 = vector.broadcast %125 : vector<2x8x1xf32> to vector<2x8x8xf32>
    %127 = arith.mulf %122, %126 : vector<2x8x8xf32>
    %128 = arith.truncf %127 : vector<2x8x8xf32> to vector<2x8x8xbf16>
    %129 = arith.truncf %109 : vector<2x8x8xf32> to vector<2x8x8xbf16>
    "tpu.trace_start"() <{level = 10 : i32, message = "bqk,bkd->bqd"}> : () -> ()
    %cst_45 = arith.constant dense<0.000000e+00> : vector<2x8x8xf32>
    %130 = tpu.matmul %128, %129, %cst_45 {dimension_numbers = #tpu.dot_dimension_numbers<[2], [1], [1], [2], [0, 0, 0, 1, 1, 2], [0], [0]>} : vector<2x8x8xbf16>, vector<2x8x8xbf16>, vector<2x8x8xf32> -> vector<2x8x8xf32>
    "tpu.trace_stop"() : () -> ()
    %131 = vector.shape_cast %130 : vector<2x8x8xf32> to vector<16x8xf32>
    %132 = arith.truncf %131 : vector<16x8xf32> to vector<16x8xbf16>
    %c0_46 = arith.constant 0 : index
    %c2 = arith.constant 2 : index
    %c0_47 = arith.constant 0 : index
    %c0_48 = arith.constant 0 : index
    %133 = vector.load %arg8[%c0_46, %c2, %c0_47, %c0_48] : memref<1x4x8x32xbf16, #tpu.memory_space<vmem>>, vector<1x1x8x32xbf16>
    %134 = vector.shape_cast %133 : vector<1x1x8x32xbf16> to vector<8x32xbf16>
    %cst_49 = arith.constant dense<0.000000e+00> : vector<16x32xf32>
    %135 = tpu.matmul %132, %134, %cst_49 {dimension_numbers = #tpu.dot_dimension_numbers<[1], [0], [0], [1], [0, 0, 1, 1], [], []>} : vector<16x8xbf16>, vector<8x32xbf16>, vector<16x32xf32> -> vector<16x32xf32>
    %136 = arith.addf %103, %135 : vector<16x32xf32>
    %137 = vector.extract_strided_slice %35 {offsets = [0, 24], sizes = [16, 8], strides = [1, 1]} : vector<16x96xf32> to vector<16x8xf32>
    %138 = vector.shape_cast %137 : vector<16x8xf32> to vector<2x8x8xf32>
    %139 = vector.extract_strided_slice %35 {offsets = [0, 56], sizes = [16, 8], strides = [1, 1]} : vector<16x96xf32> to vector<16x8xf32>
    %140 = vector.shape_cast %139 : vector<16x8xf32> to vector<2x8x8xf32>
    %141 = vector.extract_strided_slice %35 {offsets = [0, 88], sizes = [16, 8], strides = [1, 1]} : vector<16x96xf32> to vector<16x8xf32>
    %142 = vector.shape_cast %141 : vector<16x8xf32> to vector<2x8x8xf32>
    %cst_50 = arith.constant 0.353553385 : f32
    %143 = vector.broadcast %cst_50 : f32 to vector<2x8x8xf32>
    %144 = arith.mulf %138, %143 : vector<2x8x8xf32>
    %145 = arith.truncf %144 : vector<2x8x8xf32> to vector<2x8x8xbf16>
    %146 = arith.truncf %140 : vector<2x8x8xf32> to vector<2x8x8xbf16>
    "tpu.trace_start"() <{level = 10 : i32, message = "bqd,bkd->bqk"}> : () -> ()
    %cst_51 = arith.constant dense<0.000000e+00> : vector<2x8x8xf32>
    %147 = tpu.matmul %145, %146, %cst_51 {dimension_numbers = #tpu.dot_dimension_numbers<[2], [2], [1], [1], [0, 0, 0, 1, 1, 1], [0], [0]>} : vector<2x8x8xbf16>, vector<2x8x8xbf16>, vector<2x8x8xf32> -> vector<2x8x8xf32>
    "tpu.trace_stop"() : () -> ()
    %148 = vector.shape_cast %36 : vector<8x8xf32> to vector<1x8x8xf32>
    %149 = vector.broadcast %148 : vector<1x8x8xf32> to vector<2x8x8xf32>
    %150 = arith.addf %147, %149 : vector<2x8x8xf32>
    %cst_52 = arith.constant dense<0xFF800000> : vector<2x8xf32>
    %151 = vector.multi_reduction <maximumf>, %150, %cst_52 [2] : vector<2x8x8xf32> to vector<2x8xf32>
    %152 = vector.shape_cast %151 : vector<2x8xf32> to vector<2x8x1xf32>
    %153 = vector.broadcast %152 : vector<2x8x1xf32> to vector<2x8x8xf32>
    %154 = arith.subf %150, %153 : vector<2x8x8xf32>
    %155 = math.exp %154 : vector<2x8x8xf32>
    %cst_53 = arith.constant dense<0.000000e+00> : vector<2x8xf32>
    %156 = vector.multi_reduction <add>, %155, %cst_53 [2] : vector<2x8x8xf32> to vector<2x8xf32>
    %157 = vector.shape_cast %156 : vector<2x8xf32> to vector<2x8x1xf32>
    %158 = tpu.reciprocal %157 {approx = true} : vector<2x8x1xf32> -> vector<2x8x1xf32>
    %159 = vector.broadcast %158 : vector<2x8x1xf32> to vector<2x8x8xf32>
    %160 = arith.mulf %155, %159 : vector<2x8x8xf32>
    %161 = arith.truncf %160 : vector<2x8x8xf32> to vector<2x8x8xbf16>
    %162 = arith.truncf %142 : vector<2x8x8xf32> to vector<2x8x8xbf16>
    "tpu.trace_start"() <{level = 10 : i32, message = "bqk,bkd->bqd"}> : () -> ()
    %cst_54 = arith.constant dense<0.000000e+00> : vector<2x8x8xf32>
    %163 = tpu.matmul %161, %162, %cst_54 {dimension_numbers = #tpu.dot_dimension_numbers<[2], [1], [1], [2], [0, 0, 0, 1, 1, 2], [0], [0]>} : vector<2x8x8xbf16>, vector<2x8x8xbf16>, vector<2x8x8xf32> -> vector<2x8x8xf32>
    "tpu.trace_stop"() : () -> ()
    %164 = vector.shape_cast %163 : vector<2x8x8xf32> to vector<16x8xf32>
    %165 = arith.truncf %164 : vector<16x8xf32> to vector<16x8xbf16>
    %c0_55 = arith.constant 0 : index
    %c3 = arith.constant 3 : index
    %c0_56 = arith.constant 0 : index
    %c0_57 = arith.constant 0 : index
    %166 = vector.load %arg8[%c0_55, %c3, %c0_56, %c0_57] : memref<1x4x8x32xbf16, #tpu.memory_space<vmem>>, vector<1x1x8x32xbf16>
    %167 = vector.shape_cast %166 : vector<1x1x8x32xbf16> to vector<8x32xbf16>
    %cst_58 = arith.constant dense<0.000000e+00> : vector<16x32xf32>
    %168 = tpu.matmul %165, %167, %cst_58 {dimension_numbers = #tpu.dot_dimension_numbers<[1], [0], [0], [1], [0, 0, 1, 1], [], []>} : vector<16x8xbf16>, vector<8x32xbf16>, vector<16x32xf32> -> vector<16x32xf32>
    %169 = arith.addf %136, %168 : vector<16x32xf32>
    %c0_59 = arith.constant 0 : index
    %c0_60 = arith.constant 0 : index
    %c0_61 = arith.constant 0 : index
    %170 = vector.load %arg9[%c0_59, %c0_60, %c0_61] : memref<1x1x32xf32, #tpu.memory_space<vmem>>, vector<1x1x32xf32>
    %171 = vector.shape_cast %170 : vector<1x1x32xf32> to vector<1x32xf32>
    %172 = vector.broadcast %171 : vector<1x32xf32> to vector<16x32xf32>
    %173 = arith.addf %169, %172 : vector<16x32xf32>
    %174 = arith.addf %27, %173 : vector<16x32xf32>
    %c0_62 = arith.constant 0 : index
    %c0_63 = arith.constant 0 : index
    %c0_64 = arith.constant 0 : index
    %175 = vector.load %arg10[%c0_62, %c0_63, %c0_64] : memref<1x1x32xf32, #tpu.memory_space<vmem>>, vector<1x1x32xf32>
    %176 = vector.shape_cast %175 : vector<1x1x32xf32> to vector<1x32xf32>
    %c0_65 = arith.constant 0 : index
    %c0_66 = arith.constant 0 : index
    %c0_67 = arith.constant 0 : index
    %177 = vector.load %arg11[%c0_65, %c0_66, %c0_67] : memref<1x1x32xf32, #tpu.memory_space<vmem>>, vector<1x1x32xf32>
    %178 = vector.shape_cast %177 : vector<1x1x32xf32> to vector<1x32xf32>
    %cst_68 = arith.constant dense<0.000000e+00> : vector<16xf32>
    %179 = vector.multi_reduction <add>, %174, %cst_68 [1] : vector<16x32xf32> to vector<16xf32>
    %180 = vector.shape_cast %179 : vector<16xf32> to vector<16x1xf32>
    %cst_69 = arith.constant 3.200000e+01 : f32
    %181 = vector.broadcast %cst_69 : f32 to vector<16x1xf32>
    %182 = arith.divf %180, %181 : vector<16x1xf32>
    %183 = vector.broadcast %182 : vector<16x1xf32> to vector<16x32xf32>
    %184 = arith.subf %174, %183 : vector<16x32xf32>
    %185 = arith.mulf %184, %184 : vector<16x32xf32>
    %cst_70 = arith.constant dense<0.000000e+00> : vector<16xf32>
    %186 = vector.multi_reduction <add>, %185, %cst_70 [1] : vector<16x32xf32> to vector<16xf32>
    %187 = vector.shape_cast %186 : vector<16xf32> to vector<16x1xf32>
    %cst_71 = arith.constant 3.200000e+01 : f32
    %188 = vector.broadcast %cst_71 : f32 to vector<16x1xf32>
    %189 = arith.divf %187, %188 : vector<16x1xf32>
    %cst_72 = arith.constant 9.99999974E-6 : f32
    %190 = vector.broadcast %cst_72 : f32 to vector<16x1xf32>
    %191 = arith.addf %189, %190 : vector<16x1xf32>
    %192 = math.rsqrt %191 : vector<16x1xf32>
    %193 = vector.broadcast %192 : vector<16x1xf32> to vector<16x32xf32>
    %194 = arith.mulf %184, %193 : vector<16x32xf32>
    %195 = vector.broadcast %176 : vector<1x32xf32> to vector<16x32xf32>
    %196 = arith.mulf %194, %195 : vector<16x32xf32>
    %197 = vector.broadcast %178 : vector<1x32xf32> to vector<16x32xf32>
    %198 = arith.addf %196, %197 : vector<16x32xf32>
    %199 = arith.truncf %198 : vector<16x32xf32> to vector<16x32xbf16>
    %c0_73 = arith.constant 0 : index
    %c0_74 = arith.constant 0 : index
    %c0_75 = arith.constant 0 : index
    %200 = vector.load %arg12[%c0_73, %c0_74, %c0_75] : memref<1x32x128xbf16, #tpu.memory_space<vmem>>, vector<1x32x128xbf16>
    %201 = vector.shape_cast %200 : vector<1x32x128xbf16> to vector<32x128xbf16>
    %cst_76 = arith.constant dense<0.000000e+00> : vector<16x128xf32>
    %202 = tpu.matmul %199, %201, %cst_76 {dimension_numbers = #tpu.dot_dimension_numbers<[1], [0], [0], [1], [0, 0, 1, 1], [], []>} : vector<16x32xbf16>, vector<32x128xbf16>, vector<16x128xf32> -> vector<16x128xf32>
    %c0_77 = arith.constant 0 : index
    %c0_78 = arith.constant 0 : index
    %c0_79 = arith.constant 0 : index
    %203 = vector.load %arg13[%c0_77, %c0_78, %c0_79] : memref<1x1x128xf32, #tpu.memory_space<vmem>>, vector<1x1x128xf32>
    %204 = vector.shape_cast %203 : vector<1x1x128xf32> to vector<1x128xf32>
    %205 = vector.broadcast %204 : vector<1x128xf32> to vector<16x128xf32>
    %206 = arith.addf %202, %205 : vector<16x128xf32>
    %cst_80 = arith.constant 5.000000e-01 : f32
    %207 = vector.broadcast %cst_80 : f32 to vector<16x128xf32>
    %208 = arith.mulf %207, %206 : vector<16x128xf32>
    %cst_81 = arith.constant 0.707106769 : f32
    %209 = vector.broadcast %cst_81 : f32 to vector<16x128xf32>
    %210 = arith.mulf %206, %209 : vector<16x128xf32>
    %211 = math.absf %210 : vector<16x128xf32>
    %cst_82 = arith.constant 0.327591091 : f32
    %212 = vector.broadcast %cst_82 : f32 to vector<16x128xf32>
    %213 = arith.mulf %212, %211 : vector<16x128xf32>
    %cst_83 = arith.constant 1.000000e+00 : f32
    %214 = vector.broadcast %cst_83 : f32 to vector<16x128xf32>
    %215 = arith.addf %214, %213 : vector<16x128xf32>
    %cst_84 = arith.constant 1.000000e+00 : f32
    %216 = vector.broadcast %cst_84 : f32 to vector<16x128xf32>
    %217 = arith.divf %216, %215 : vector<16x128xf32>
    %cst_85 = arith.constant 1.06140542 : f32
    %218 = vector.broadcast %cst_85 : f32 to vector<16x128xf32>
    %219 = arith.mulf %218, %217 : vector<16x128xf32>
    %cst_86 = arith.constant -1.45315206 : f32
    %220 = vector.broadcast %cst_86 : f32 to vector<16x128xf32>
    %221 = arith.addf %219, %220 : vector<16x128xf32>
    %222 = arith.mulf %221, %217 : vector<16x128xf32>
    %cst_87 = arith.constant 1.42141378 : f32
    %223 = vector.broadcast %cst_87 : f32 to vector<16x128xf32>
    %224 = arith.addf %222, %223 : vector<16x128xf32>
    %225 = arith.mulf %224, %217 : vector<16x128xf32>
    %cst_88 = arith.constant -0.284496725 : f32
    %226 = vector.broadcast %cst_88 : f32 to vector<16x128xf32>
    %227 = arith.addf %225, %226 : vector<16x128xf32>
    %228 = arith.mulf %227, %217 : vector<16x128xf32>
    %cst_89 = arith.constant 0.254829586 : f32
    %229 = vector.broadcast %cst_89 : f32 to vector<16x128xf32>
    %230 = arith.addf %228, %229 : vector<16x128xf32>
    %231 = arith.mulf %230, %217 : vector<16x128xf32>
    %cst_90 = arith.constant 0.000000e+00 : f32
    %232 = vector.broadcast %cst_90 : f32 to vector<16x128xf32>
    %233 = arith.subf %232, %211 : vector<16x128xf32>
    %234 = arith.mulf %233, %211 : vector<16x128xf32>
    %235 = math.exp %234 : vector<16x128xf32>
    %236 = arith.mulf %231, %235 : vector<16x128xf32>
    %cst_91 = arith.constant 1.000000e+00 : f32
    %237 = vector.broadcast %cst_91 : f32 to vector<16x128xf32>
    %238 = arith.subf %237, %236 : vector<16x128xf32>
    %cst_92 = arith.constant 0.000000e+00 : f32
    %239 = vector.broadcast %cst_92 : f32 to vector<16x128xf32>
    %240 = arith.cmpf olt, %210, %239 : vector<16x128xf32>
    %cst_93 = arith.constant 0.000000e+00 : f32
    %241 = vector.broadcast %cst_93 : f32 to vector<16x128xf32>
    %242 = arith.subf %241, %238 : vector<16x128xf32>
    %243 = arith.select %240, %242, %238 : vector<16x128xi1>, vector<16x128xf32>
    %cst_94 = arith.constant 1.000000e+00 : f32
    %244 = vector.broadcast %cst_94 : f32 to vector<16x128xf32>
    %245 = arith.addf %244, %243 : vector<16x128xf32>
    %246 = arith.mulf %208, %245 : vector<16x128xf32>
    %247 = arith.truncf %246 : vector<16x128xf32> to vector<16x128xbf16>
    %c0_95 = arith.constant 0 : index
    %c0_96 = arith.constant 0 : index
    %c0_97 = arith.constant 0 : index
    %248 = vector.load %arg14[%c0_95, %c0_96, %c0_97] : memref<1x128x32xbf16, #tpu.memory_space<vmem>>, vector<1x128x32xbf16>
    %249 = vector.shape_cast %248 : vector<1x128x32xbf16> to vector<128x32xbf16>
    %cst_98 = arith.constant dense<0.000000e+00> : vector<16x32xf32>
    %250 = tpu.matmul %247, %249, %cst_98 {dimension_numbers = #tpu.dot_dimension_numbers<[1], [0], [0], [1], [0, 0, 1, 1], [], []>} : vector<16x128xbf16>, vector<128x32xbf16>, vector<16x32xf32> -> vector<16x32xf32>
    %c0_99 = arith.constant 0 : index
    %c0_100 = arith.constant 0 : index
    %c0_101 = arith.constant 0 : index
    %251 = vector.load %arg15[%c0_99, %c0_100, %c0_101] : memref<1x1x32xf32, #tpu.memory_space<vmem>>, vector<1x1x32xf32>
    %252 = vector.shape_cast %251 : vector<1x1x32xf32> to vector<1x32xf32>
    %253 = vector.broadcast %252 : vector<1x32xf32> to vector<16x32xf32>
    %254 = arith.addf %250, %253 : vector<16x32xf32>
    %255 = arith.addf %174, %254 : vector<16x32xf32>
    %c0_102 = arith.constant 0 : index
    %c0_103 = arith.constant 0 : index
    %256 = vector.load %arg16[%c0_102, %c0_103] : memref<16x32xf32, #tpu.memory_space<vmem>>, vector<16x32xf32>
    tpu.vector_store %arg16[%c0_102, %c0_103], %255 {strides = array<i32>} : memref<16x32xf32, #tpu.memory_space<vmem>>, vector<16x32xf32>,
    return
  }
  func.func @transform_0(%arg0: i32, %arg1: i32) -> (i32, i32) {
    %c0_i32 = arith.constant 0 : i32
    %c0_i32_0 = arith.constant 0 : i32
    return %arg0, %c0_i32 : i32, i32
  }
  func.func @transform_1(%arg0: i32, %arg1: i32) -> (i32, i32) {
    %c0_i32 = arith.constant 0 : i32
    %c0_i32_0 = arith.constant 0 : i32
    %c0_i32_1 = arith.constant 0 : i32
    return %c0_i32, %c0_i32_0 : i32, i32
  }
  func.func @transform_2(%arg0: i32, %arg1: i32) -> (i32, i32, i32) {
    %c0_i32 = arith.constant 0 : i32
    %c0_i32_0 = arith.constant 0 : i32
    %c0_i32_1 = arith.constant 0 : i32
    return %arg1, %c0_i32, %c0_i32_0 : i32, i32, i32
  }
  func.func @transform_3(%arg0: i32, %arg1: i32) -> (i32, i32, i32) {
    %c0_i32 = arith.constant 0 : i32
    %c0_i32_0 = arith.constant 0 : i32
    %c0_i32_1 = arith.constant 0 : i32
    return %arg1, %c0_i32, %c0_i32_0 : i32, i32, i32
  }
  func.func @transform_4(%arg0: i32, %arg1: i32) -> (i32, i32, i32) {
    %c0_i32 = arith.constant 0 : i32
    %c0_i32_0 = arith.constant 0 : i32
    %c0_i32_1 = arith.constant 0 : i32
    return %arg1, %c0_i32, %c0_i32_0 : i32, i32, i32
  }
  func.func @transform_5(%arg0: i32, %arg1: i32) -> (i32, i32, i32) {
    %c0_i32 = arith.constant 0 : i32
    %c0_i32_0 = arith.constant 0 : i32
    %c0_i32_1 = arith.constant 0 : i32
    return %arg1, %c0_i32, %c0_i32_0 : i32, i32, i32
  }
  func.func @transform_6(%arg0: i32, %arg1: i32) -> (i32, i32, i32, i32) {
    %c0_i32 = arith.constant 0 : i32
    %c0_i32_0 = arith.constant 0 : i32
    %c0_i32_1 = arith.constant 0 : i32
    %c0_i32_2 = arith.constant 0 : i32
    return %arg1, %c0_i32, %c0_i32_0, %c0_i32_1 : i32, i32, i32, i32
  }
  func.func @transform_7(%arg0: i32, %arg1: i32) -> (i32, i32, i32) {
    %c0_i32 = arith.constant 0 : i32
    %c0_i32_0 = arith.constant 0 : i32
    %c0_i32_1 = arith.constant 0 : i32
    return %arg1, %c0_i32, %c0_i32_0 : i32, i32, i32
  }
  func.func @transform_8(%arg0: i32, %arg1: i32) -> (i32, i32, i32) {
    %c0_i32 = arith.constant 0 : i32
    %c0_i32_0 = arith.constant 0 : i32
    %c0_i32_1 = arith.constant 0 : i32
    return %arg1, %c0_i32, %c0_i32_0 : i32, i32, i32
  }
  func.func @transform_9(%arg0: i32, %arg1: i32) -> (i32, i32, i32) {
    %c0_i32 = arith.constant 0 : i32
    %c0_i32_0 = arith.constant 0 : i32
    %c0_i32_1 = arith.constant 0 : i32
    return %arg1, %c0_i32, %c0_i32_0 : i32, i32, i32
  }
  func.func @transform_10(%arg0: i32, %arg1: i32) -> (i32, i32, i32) {
    %c0_i32 = arith.constant 0 : i32
    %c0_i32_0 = arith.constant 0 : i32
    %c0_i32_1 = arith.constant 0 : i32
    return %arg1, %c0_i32, %c0_i32_0 : i32, i32, i32
  }
  func.func @transform_11(%arg0: i32, %arg1: i32) -> (i32, i32, i32) {
    %c0_i32 = arith.constant 0 : i32
    %c0_i32_0 = arith.constant 0 : i32
    %c0_i32_1 = arith.constant 0 : i32
    return %arg1, %c0_i32, %c0_i32_0 : i32, i32, i32
  }
  func.func @transform_12(%arg0: i32, %arg1: i32) -> (i32, i32, i32) {
    %c0_i32 = arith.constant 0 : i32
    %c0_i32_0 = arith.constant 0 : i32
    %c0_i32_1 = arith.constant 0 : i32
    return %arg1, %c0_i32, %c0_i32_0 : i32, i32, i32
  }
  func.func @transform_13(%arg0: i32, %arg1: i32) -> (i32, i32, i32) {
    %c0_i32 = arith.constant 0 : i32
    %c0_i32_0 = arith.constant 0 : i32
    %c0_i32_1 = arith.constant 0 : i32
    return %arg1, %c0_i32, %c0_i32_0 : i32, i32, i32
  }
  func.func @transform_14(%arg0: i32, %arg1: i32) -> (i32, i32) {
    %c0_i32 = arith.constant 0 : i32
    %c0_i32_0 = arith.constant 0 : i32
    return %arg0, %c0_i32 : i32, i32
  }
}

</mosaic_0001>

<llo_original>
// kernel: mul.5
$region0: #{mul.5}
  #allocation0 [shape = 's32[1]{0}', space=sflag, size = 0x4, scoped, tag = 'scoped memory for mul.5']
  %s0 = inlined_call_operand.vmem [shape: f32[32], index: 0, kind: input, shape index: {}]
  %s1 = inlined_call_operand.vmem [shape: f32[1,2,32], index: 1, kind: output, shape index: {}]
  // Predicated region
  $region2: #{mul.5} parent=0 // pred_check
    _
  $region3: #{mul.5} parent=0 // pred_check_branch
    %3 = sbr.rel (0) target = $region5
  $region4: #{mul.5} parent=0 // pred_region
    _
  $region5: #{mul.5} parent=0 // pred_fallthru
    _
  %v4 = vld [vmem:[%s0] ss:$0 sm:$0xff]
  %5 = vst [vmem:[%s1] sm:$0x1] %v4
  %s6 = scalar_lea.vmem %s1, 1
  %7 = vst [vmem:[%s6] sm:$0x1] %v4

// kernel: gpt2_pallas.3
$region0: #{gpt2_pallas.3}
  #allocation0 [shape = 'u32[]', space=smem, size = 0x4, offset = 0x4, fixed_abs, tag = 'smem constant byte address 0x4 - core index']
  #allocation1 [shape = 'u32[144,128]{1,0:T(1,128)}', space=vmem, size = 0x12000, scoped, tag = 'internal scratch']
  %s0 = inlined_call_operand.vmem [shape: f32[16,32], index: 0, kind: input, shape index: {}]
  %s1 = inlined_call_operand.vmem [shape: f32[1,32], index: 1, kind: input, shape index: {}]
  %s2 = inlined_call_operand.vmem [shape: f32[1,32], index: 2, kind: input, shape index: {}]
  %s3 = inlined_call_operand.vmem [shape: bf16[32,1024], index: 3, kind: input, shape index: {}]
  %s4 = inlined_call_operand.vmem [shape: f32[16,32], index: 4, kind: output, shape index: {0}]
  %s5 = inlined_call_operand.vmem [shape: f32[16,1024], index: 5, kind: output, shape index: {1}]
  %6 = xla_tuple %s4, %s5
  %s7 = sld [smem:[#allocation0]]
  $region38: #{gpt2_pallas.3} parent=0
    _
  %s9 = ssub.s32 1, %s7
  %s10 = scalar_select 0, %s9, %s7
  // Predicated region
  $region2: #{gpt2_pallas.3} parent=0 // pred_check
    _
  $region3: #{gpt2_pallas.3} parent=0 // pred_check_branch
    %12 = sbr.rel (0) target = $region5
  $region4: #{gpt2_pallas.3} parent=0 // pred_region
    _
  $region5: #{gpt2_pallas.3} parent=0 // pred_fallthru
    _
  // Predicated region
  $region6: #{gpt2_pallas.3} parent=0 // pred_check
    _
  $region7: #{gpt2_pallas.3} parent=0 // pred_check_branch
    %14 = sbr.rel (0) target = $region9
  $region8: #{gpt2_pallas.3} parent=0 // pred_region
    _
  $region9: #{gpt2_pallas.3} parent=0 // pred_fallthru
    _
  // Predicated region
  $region10: #{gpt2_pallas.3} parent=0 // pred_check
    _
  $region11: #{gpt2_pallas.3} parent=0 // pred_check_branch
    %16 = sbr.rel (0) target = $region13
  $region12: #{gpt2_pallas.3} parent=0 // pred_region
    _
  $region13: #{gpt2_pallas.3} parent=0 // pred_fallthru
    _
  // Predicated region
  $region14: #{gpt2_pallas.3} parent=0 // pred_check
    _
  $region15: #{gpt2_pallas.3} parent=0 // pred_check_branch
    %18 = sbr.rel (0) target = $region17
  $region16: #{gpt2_pallas.3} parent=0 // pred_region
    _
  $region17: #{gpt2_pallas.3} parent=0 // pred_fallthru
    _
  %p20 = scmp.eq.s32.totalorder 0, 0
  // Predicated region
  $region18: #{gpt2_pallas.3} parent=0 // pred_check
    %p21 = pneg %p20
  $region19: #{gpt2_pallas.3} parent=0 // pred_check_branch
    %23 = sbr.rel (%p21) target = $region21
  $region20: #{gpt2_pallas.3} parent=0 // pred_region
    %v24 = vld [vmem:[%s0] sm:$0xff]
    %v25 = vld [vmem:[%s0 + $0x8] sm:$0xff]
    %v26 = vld [vmem:[%s1] sm:$0x1]
    %v27 = vld [vmem:[%s2] sm:$0x1]
    %vm28 = vcmask 261120
    %v29 = vsel %vm28, %v24, 0.0
    %30 = vadd.xlane.f32.xlu0 %v29
    %v31 = vpop.xlane.xlu0 %30
    %v32 = vsel %vm28, %v25, 0.0
    %33 = vadd.xlane.f32.xlu0 %v32
    %v34 = vpop.xlane.xlu0 %33
    %v35 = vrcp.pop 32.0
    %v36 = vmul.f32 %v31, %v35
    %v37 = vmul.f32 %v34, %v35
    %v38 = vsub.f32 %v24, %v36
    %v39 = vsub.f32 %v25, %v37
    %v40 = vmul.f32 %v38, %v38
    %v41 = vmul.f32 %v39, %v39
    %v42 = vsel %vm28, %v40, 0.0
    %43 = vadd.xlane.f32.xlu0 %v42
    %v44 = vpop.xlane.xlu0 %43
    %v45 = vsel %vm28, %v41, 0.0
    %46 = vadd.xlane.f32.xlu0 %v45
    %v47 = vpop.xlane.xlu0 %46
    %v48 = vmul.f32 %v44, %v35
    %v49 = vmul.f32 %v47, %v35
    %v50 = vadd.f32 %v48, 1e-05
    %v51 = vadd.f32 %v49, 1e-05
    %v52 = vrsqrt.pop %v50
    %v53 = vrsqrt.pop %v51
    %v54 = vmul.f32 %v38, %v52
    %v55 = vmul.f32 %v39, %v53
    %v57 = vlaneseq
    %v58 = vshrl.u32 %v57, 7
    %v59 = vsub.s32 0, %v58
    %v60 = vrot.slane %v26, %v59
    %v62 = vmul.f32 %v54, %v60
    %v63 = vmul.f32 %v55, %v60
    %v65 = vlaneseq
    %v66 = vshrl.u32 %v65, 7
    %v67 = vsub.s32 0, %v66
    %v68 = vrot.slane %v27, %v67
    %v70 = vadd.f32 %v62, %v68
    %v71 = vadd.f32 %v63, %v68
    %72 = vst.msk [vmem:[%s4] sm:$0xff] %vm28, %v70
    %73 = vst.msk [vmem:[%s4 + $0x8] sm:$0xff] %vm28, %v71
  $region21: #{gpt2_pallas.3} parent=0 // pred_fallthru
    _
  %v74 = vld [vmem:[%s4] sm:$0xff]
  %v75 = vld [vmem:[%s4 + $0x8] sm:$0xff]
  %v76 = vpack.c.bf16 %v75, %v74
  %v77 = vld [vmem:[%s3] sm:$0xff]
  %v78 = vld [vmem:[%s3 + $0x8] sm:$0xff]
  %v79 = vld [vmem:[%s3 + $0x10] sm:$0xff]
  %v80 = vld [vmem:[%s3 + $0x18] sm:$0xff]
  %v81 = vld [vmem:[%s3 + $0x20] sm:$0xff]
  %v82 = vld [vmem:[%s3 + $0x28] sm:$0xff]
  %v83 = vld [vmem:[%s3 + $0x30] sm:$0xff]
  %v84 = vld [vmem:[%s3 + $0x38] sm:$0xff]
  %v85 = vld [vmem:[%s3 + $0x40] sm:$0xff]
  %v86 = vld [vmem:[%s3 + $0x48] sm:$0xff]
  %v87 = vld [vmem:[%s3 + $0x50] sm:$0xff]
  %v88 = vld [vmem:[%s3 + $0x58] sm:$0xff]
  %v89 = vld [vmem:[%s3 + $0x60] sm:$0xff]
  %v90 = vld [vmem:[%s3 + $0x68] sm:$0xff]
  %v91 = vld [vmem:[%s3 + $0x70] sm:$0xff]
  %v92 = vld [vmem:[%s3 + $0x78] sm:$0xff]
  %v109 = vunpack.c.l.b16 %v77
  %v110 = vunpack.c.h.b16 %v77
  %v111 = vunpack.c.l.b16 %v78
  %v112 = vunpack.c.h.b16 %v78
  %v113 = vunpack.c.l.b16 %v79
  %v114 = vunpack.c.h.b16 %v79
  %v115 = vunpack.c.l.b16 %v80
  %v116 = vunpack.c.h.b16 %v80
  %v117 = vunpack.c.l.b16 %v81
  %v118 = vunpack.c.h.b16 %v81
  %v119 = vunpack.c.l.b16 %v82
  %v120 = vunpack.c.h.b16 %v82
  %v121 = vunpack.c.l.b16 %v83
  %v122 = vunpack.c.h.b16 %v83
  %v123 = vunpack.c.l.b16 %v84
  %v124 = vunpack.c.h.b16 %v84
  %v125 = vunpack.c.l.b16 %v85
  %v126 = vunpack.c.h.b16 %v85
  %v127 = vunpack.c.l.b16 %v86
  %v128 = vunpack.c.h.b16 %v86
  %v129 = vunpack.c.l.b16 %v87
  %v130 = vunpack.c.h.b16 %v87
  %v131 = vunpack.c.l.b16 %v88
  %v132 = vunpack.c.h.b16 %v88
  %v133 = vunpack.c.l.b16 %v89
  %v134 = vunpack.c.h.b16 %v89
  %v135 = vunpack.c.l.b16 %v90
  %v136 = vunpack.c.h.b16 %v90
  %v137 = vunpack.c.l.b16 %v91
  %v138 = vunpack.c.h.b16 %v91
  %v139 = vunpack.c.l.b16 %v92
  %v140 = vunpack.c.h.b16 %v92
  %v141 = vpack.c.b16 %v117, %v109
  %v142 = vpack.c.b16 %v118, %v110
  %v143 = vpack.c.b16 %v119, %v111
  %v144 = vpack.c.b16 %v120, %v112
  %v145 = vpack.c.b16 %v121, %v113
  %v146 = vpack.c.b16 %v122, %v114
  %v147 = vpack.c.b16 %v123, %v115
  %v148 = vpack.c.b16 %v124, %v116
  %v149 = vpack.c.b16 %v133, %v125
  %v150 = vpack.c.b16 %v134, %v126
  %v151 = vpack.c.b16 %v135, %v127
  %v152 = vpack.c.b16 %v136, %v128
  %v153 = vpack.c.b16 %v137, %v129
  %v154 = vpack.c.b16 %v138, %v130
  %v155 = vpack.c.b16 %v139, %v131
  %v156 = vpack.c.b16 %v140, %v132
  %vm173 = vcmask 261120
  %v175 = vsel %vm173, %v76, 0
  %177 = vmatprep.subr.bf16.mxu0 %v142
  %178 = vmatpush1.bf16.msra.mxu0 %v141
  %179 = vmatprep.subr.bf16.mxu0 %v150
  %180 = vmatpush1.bf16.msra.mxu0 %v149
  %181 = vmatprep.subr.bf16.mxu0 0
  %182 = vmatpush1.bf16.msra.mxu0 0
  %183 = vmatprep.subr.bf16.mxu0 0
  %184 = vmatpush1.bf16.msra.mxu0 0
  %185 = vmatprep.subr.bf16.mxu0 0
  %186 = vmatpush1.bf16.msra.mxu0 0
  %187 = vmatprep.subr.bf16.mxu0 0
  %188 = vmatpush1.bf16.msra.mxu0 0
  %189 = vmatprep.subr.bf16.mxu0 0
  %190 = vmatpush1.bf16.msra.mxu0 0
  %191 = vmatprep.subr.bf16.mxu0 0
  %192 = vmatpush1.bf16.msra.mxu0 0
  %193 = vmatprep.subr.bf16.mxu0 0
  %194 = vmatpush1.bf16.msra.mxu0 0
  %195 = vmatprep.subr.bf16.mxu0 0
  %196 = vmatpush1.bf16.msra.mxu0 0
  %197 = vmatprep.subr.bf16.mxu0 0
  %198 = vmatpush1.bf16.msra.mxu0 0
  %199 = vmatprep.subr.bf16.mxu0 0
  %200 = vmatpush1.bf16.msra.mxu0 0
  %201 = vmatprep.subr.bf16.mxu0 0
  %202 = vmatpush1.bf16.msra.mxu0 0
  %203 = vmatprep.subr.bf16.mxu0 0
  %204 = vmatpush1.bf16.msra.mxu0 0
  %205 = vmatprep.subr.bf16.mxu0 0
  %206 = vmatpush1.bf16.msra.mxu0 0
  %207 = vmatprep.subr.bf16.mxu0 0
  %208 = vmatpush1.bf16.msra.mxu0 0
  %209 = vmatprep.mubr.bf16.mxu0 0
  %210 = vmatmul.mubr.bf16.gmra.mrb[0].mxu0 %v175
  %v211 = vpop.f32.mrb[0].mxu0
  %v212 = vadd.f32 0.0, %v211
  %v213 = vpop.f32.mrb[0].mxu0
  %v214 = vadd.f32 0.0, %v213
  %v215 = vpop.f32.mrb[0].mxu0
  %v216 = vadd.f32 0.0, %v215
  %v217 = vpop.f32.mrb[0].mxu0
  %v218 = vadd.f32 0.0, %v217
  %219 = vdwg.mxu0
  %220 = vmatprep.subr.bf16.mxu0 %v144
  %221 = vmatpush1.bf16.msra.mxu0 %v143
  %222 = vmatprep.subr.bf16.mxu0 %v152
  %223 = vmatpush1.bf16.msra.mxu0 %v151
  %224 = vmatprep.subr.bf16.mxu0 0
  %225 = vmatpush1.bf16.msra.mxu0 0
  %226 = vmatprep.subr.bf16.mxu0 0
  %227 = vmatpush1.bf16.msra.mxu0 0
  %228 = vmatprep.subr.bf16.mxu0 0
  %229 = vmatpush1.bf16.msra.mxu0 0
  %230 = vmatprep.subr.bf16.mxu0 0
  %231 = vmatpush1.bf16.msra.mxu0 0
  %232 = vmatprep.subr.bf16.mxu0 0
  %233 = vmatpush1.bf16.msra.mxu0 0
  %234 = vmatprep.subr.bf16.mxu0 0
  %235 = vmatpush1.bf16.msra.mxu0 0
  %236 = vmatprep.subr.bf16.mxu0 0
  %237 = vmatpush1.bf16.msra.mxu0 0
  %238 = vmatprep.subr.bf16.mxu0 0
  %239 = vmatpush1.bf16.msra.mxu0 0
  %240 = vmatprep.subr.bf16.mxu0 0
  %241 = vmatpush1.bf16.msra.mxu0 0
  %242 = vmatprep.subr.bf16.mxu0 0
  %243 = vmatpush1.bf16.msra.mxu0 0
  %244 = vmatprep.subr.bf16.mxu0 0
  %245 = vmatpush1.bf16.msra.mxu0 0
  %246 = vmatprep.subr.bf16.mxu0 0
  %247 = vmatpush1.bf16.msra.mxu0 0
  %248 = vmatprep.subr.bf16.mxu0 0
  %249 = vmatpush1.bf16.msra.mxu0 0
  %250 = vmatprep.subr.bf16.mxu0 0
  %251 = vmatpush1.bf16.msra.mxu0 0
  %252 = vmatprep.mubr.bf16.mxu0 0
  %253 = vmatmul.mubr.bf16.gmra.mrb[0].mxu0 %v175
  %v254 = vpop.f32.mrb[0].mxu0
  %v255 = vadd.f32 0.0, %v254
  %v256 = vpop.f32.mrb[0].mxu0
  %v257 = vadd.f32 0.0, %v256
  %v258 = vpop.f32.mrb[0].mxu0
  %v259 = vadd.f32 0.0, %v258
  %v260 = vpop.f32.mrb[0].mxu0
  %v261 = vadd.f32 0.0, %v260
  %262 = vdwg.mxu0
  %263 = vmatprep.subr.bf16.mxu0 %v146
  %264 = vmatpush1.bf16.msra.mxu0 %v145
  %265 = vmatprep.subr.bf16.mxu0 %v154
  %266 = vmatpush1.bf16.msra.mxu0 %v153
  %267 = vmatprep.subr.bf16.mxu0 0
  %268 = vmatpush1.bf16.msra.mxu0 0
  %269 = vmatprep.subr.bf16.mxu0 0
  %270 = vmatpush1.bf16.msra.mxu0 0
  %271 = vmatprep.subr.bf16.mxu0 0
  %272 = vmatpush1.bf16.msra.mxu0 0
  %273 = vmatprep.subr.bf16.mxu0 0
  %274 = vmatpush1.bf16.msra.mxu0 0
  %275 = vmatprep.subr.bf16.mxu0 0
  %276 = vmatpush1.bf16.msra.mxu0 0
  %277 = vmatprep.subr.bf16.mxu0 0
  %278 = vmatpush1.bf16.msra.mxu0 0
  %279 = vmatprep.subr.bf16.mxu0 0
  %280 = vmatpush1.bf16.msra.mxu0 0
  %281 = vmatprep.subr.bf16.mxu0 0
  %282 = vmatpush1.bf16.msra.mxu0 0
  %283 = vmatprep.subr.bf16.mxu0 0
  %284 = vmatpush1.bf16.msra.mxu0 0
  %285 = vmatprep.subr.bf16.mxu0 0
  %286 = vmatpush1.bf16.msra.mxu0 0
  %287 = vmatprep.subr.bf16.mxu0 0
  %288 = vmatpush1.bf16.msra.mxu0 0
  %289 = vmatprep.subr.bf16.mxu0 0
  %290 = vmatpush1.bf16.msra.mxu0 0
  %291 = vmatprep.subr.bf16.mxu0 0
  %292 = vmatpush1.bf16.msra.mxu0 0
  %293 = vmatprep.subr.bf16.mxu0 0
  %294 = vmatpush1.bf16.msra.mxu0 0
  %295 = vmatprep.mubr.bf16.mxu0 0
  %296 = vmatmul.mubr.bf16.gmra.mrb[0].mxu0 %v175
  %v297 = vpop.f32.mrb[0].mxu0
  %v298 = vadd.f32 0.0, %v297
  %v299 = vpop.f32.mrb[0].mxu0
  %v300 = vadd.f32 0.0, %v299
  %v301 = vpop.f32.mrb[0].mxu0
  %v302 = vadd.f32 0.0, %v301
  %v303 = vpop.f32.mrb[0].mxu0
  %v304 = vadd.f32 0.0, %v303
  %305 = vdwg.mxu0
  %306 = vmatprep.subr.bf16.mxu0 %v148
  %307 = vmatpush1.bf16.msra.mxu0 %v147
  %308 = vmatprep.subr.bf16.mxu0 %v156
  %309 = vmatpush1.bf16.msra.mxu0 %v155
  %310 = vmatprep.subr.bf16.mxu0 0
  %311 = vmatpush1.bf16.msra.mxu0 0
  %312 = vmatprep.subr.bf16.mxu0 0
  %313 = vmatpush1.bf16.msra.mxu0 0
  %314 = vmatprep.subr.bf16.mxu0 0
  %315 = vmatpush1.bf16.msra.mxu0 0
  %316 = vmatprep.subr.bf16.mxu0 0
  %317 = vmatpush1.bf16.msra.mxu0 0
  %318 = vmatprep.subr.bf16.mxu0 0
  %319 = vmatpush1.bf16.msra.mxu0 0
  %320 = vmatprep.subr.bf16.mxu0 0
  %321 = vmatpush1.bf16.msra.mxu0 0
  %322 = vmatprep.subr.bf16.mxu0 0
  %323 = vmatpush1.bf16.msra.mxu0 0
  %324 = vmatprep.subr.bf16.mxu0 0
  %325 = vmatpush1.bf16.msra.mxu0 0
  %326 = vmatprep.subr.bf16.mxu0 0
  %327 = vmatpush1.bf16.msra.mxu0 0
  %328 = vmatprep.subr.bf16.mxu0 0
  %329 = vmatpush1.bf16.msra.mxu0 0
  %330 = vmatprep.subr.bf16.mxu0 0
  %331 = vmatpush1.bf16.msra.mxu0 0
  %332 = vmatprep.subr.bf16.mxu0 0
  %333 = vmatpush1.bf16.msra.mxu0 0
  %334 = vmatprep.subr.bf16.mxu0 0
  %335 = vmatpush1.bf16.msra.mxu0 0
  %336 = vmatprep.subr.bf16.mxu0 0
  %337 = vmatpush1.bf16.msra.mxu0 0
  %338 = vmatprep.mubr.bf16.mxu0 0
  %339 = vmatmul.mubr.bf16.gmra.mrb[0].mxu0 %v175
  %v340 = vpop.f32.mrb[0].mxu0
  %v341 = vadd.f32 0.0, %v340
  %v342 = vpop.f32.mrb[0].mxu0
  %v343 = vadd.f32 0.0, %v342
  %v344 = vpop.f32.mrb[0].mxu0
  %v345 = vadd.f32 0.0, %v344
  %v346 = vpop.f32.mrb[0].mxu0
  %v347 = vadd.f32 0.0, %v346
  %348 = vdwg.mxu0
  %349 = vst [vmem:[%s5] sm:$0xff] %v212
  %350 = vst [vmem:[%s5 + $0x8] sm:$0xff] %v214
  %351 = vst [vmem:[%s5 + $0x10] sm:$0xff] %v255
  %352 = vst [vmem:[%s5 + $0x18] sm:$0xff] %v257
  %353 = vst [vmem:[%s5 + $0x20] sm:$0xff] %v298
  %354 = vst [vmem:[%s5 + $0x28] sm:$0xff] %v300
  %355 = vst [vmem:[%s5 + $0x30] sm:$0xff] %v341
  %356 = vst [vmem:[%s5 + $0x38] sm:$0xff] %v343
  %357 = vst [vmem:[%s5 + $0x40] sm:$0xff] %v216
  %358 = vst [vmem:[%s5 + $0x48] sm:$0xff] %v218
  %359 = vst [vmem:[%s5 + $0x50] sm:$0xff] %v259
  %360 = vst [vmem:[%s5 + $0x58] sm:$0xff] %v261
  %361 = vst [vmem:[%s5 + $0x60] sm:$0xff] %v302
  %362 = vst [vmem:[%s5 + $0x68] sm:$0xff] %v304
  %363 = vst [vmem:[%s5 + $0x70] sm:$0xff] %v345
  %364 = vst [vmem:[%s5 + $0x78] sm:$0xff] %v347
  // Predicated region
  $region22: #{gpt2_pallas.3} parent=0 // pred_check
    _
  $region23: #{gpt2_pallas.3} parent=0 // pred_check_branch
    %366 = sbr.rel (0) target = $region25
  $region24: #{gpt2_pallas.3} parent=0 // pred_region
    _
  $region25: #{gpt2_pallas.3} parent=0 // pred_fallthru
    _
  // Predicated region
  $region26: #{gpt2_pallas.3} parent=0 // pred_check
    _
  $region27: #{gpt2_pallas.3} parent=0 // pred_check_branch
    %368 = sbr.rel (0) target = $region29
  $region28: #{gpt2_pallas.3} parent=0 // pred_region
    _
  $region29: #{gpt2_pallas.3} parent=0 // pred_fallthru
    _
  // Predicated region
  $region30: #{gpt2_pallas.3} parent=0 // pred_check
    _
  $region31: #{gpt2_pallas.3} parent=0 // pred_check_branch
    %370 = sbr.rel (0) target = $region33
  $region32: #{gpt2_pallas.3} parent=0 // pred_region
    _
  $region33: #{gpt2_pallas.3} parent=0 // pred_fallthru
    _
  // Predicated region
  $region34: #{gpt2_pallas.3} parent=0 // pred_check
    _
  $region35: #{gpt2_pallas.3} parent=0 // pred_check_branch
    %372 = sbr.rel (0) target = $region37
  $region36: #{gpt2_pallas.3} parent=0 // pred_region
    _
  $region37: #{gpt2_pallas.3} parent=0 // pred_fallthru
    _

// kernel: gpt2_pallas.2
$region0: #{gpt2_pallas.2}
  #allocation0 [shape = 'u32[]', space=smem, size = 0x4, offset = 0x4, fixed_abs, tag = 'smem constant byte address 0x4 - core index']
  #allocation1 [shape = 'u32[144,128]{1,0:T(1,128)}', space=vmem, size = 0x12000, scoped, tag = 'internal scratch']
  %s0 = inlined_call_operand.vmem [shape: f32[16,32], index: 0, kind: input, shape index: {}]
  %s1 = inlined_call_operand.vmem [shape: f32[8,8], index: 1, kind: input, shape index: {}]
  %s2 = inlined_call_operand.vmem [shape: f32[2,1,32], index: 2, kind: input, shape index: {}]
  %s3 = inlined_call_operand.vmem [shape: f32[2,1,32], index: 3, kind: input, shape index: {}]
  %s4 = inlined_call_operand.vmem [shape: bf16[2,32,96], index: 4, kind: input, shape index: {}]
  %s5 = inlined_call_operand.vmem [shape: f32[2,1,96], index: 5, kind: input, shape index: {}]
  %s6 = inlined_call_operand.vmem [shape: bf16[2,4,8,32], index: 6, kind: input, shape index: {}]
  %s7 = inlined_call_operand.vmem [shape: f32[2,1,32], index: 7, kind: input, shape index: {}]
  %s8 = inlined_call_operand.vmem [shape: f32[2,1,32], index: 8, kind: input, shape index: {}]
  %s9 = inlined_call_operand.vmem [shape: f32[2,1,32], index: 9, kind: input, shape index: {}]
  %s10 = inlined_call_operand.vmem [shape: bf16[2,32,128], index: 10, kind: input, shape index: {}]
  %s11 = inlined_call_operand.vmem [shape: f32[2,1,128], index: 11, kind: input, shape index: {}]
  %s12 = inlined_call_operand.vmem [shape: bf16[2,128,32], index: 12, kind: input, shape index: {}]
  %s13 = inlined_call_operand.vmem [shape: f32[2,1,32], index: 13, kind: input, shape index: {}]
  %s14 = inlined_call_operand.vmem [shape: f32[16,32], index: 14, kind: output, shape index: {}]
  %s15 = sld [smem:[#allocation0]]
  $region93: #{gpt2_pallas.2} parent=0
    _
  %s17 = ssub.s32 1, %s15
  %s18 = scalar_select 0, %s17, %s15
  loop: start=0, step=1, limit=4
  $region2: #{gpt2_pallas.2} parent=0 // loop_pre_header
    _
  $region3: #{gpt2_pallas.2} parent=0 // loop_header
    %s20 = sphi 0, %s24
    %p21 = scmp.ge.s32.totalorder %s20, 4
    %s27 = sphi 0, %s39
    %s28 = sphi 0, %s35
    %s29 = sphi 0, %s27
    %s30 = sphi 0, %s28
    %s31 = sphi 0, %s29
    %s32 = sphi 0, %s30
    %s42 = sphi 0, %s44
    %s45 = sphi 0, %s42
    %s46 = sphi 0, %s45
    %s62 = sphi 0, %s46
    %s66 = sphi 0, %s66
    %s68 = sphi 0, %s66
    %s69 = sphi 0, %s68
    %s83 = sphi 0, %s69
    %s89 = sphi 0, %s91
    %s92 = sphi 0, %s89
    %s93 = sphi 0, %s92
    %s109 = sphi 0, %s93
    %s115 = sphi 0, %s117
    %s118 = sphi 0, %s115
    %s119 = sphi 0, %s118
    %s135 = sphi 0, %s119
    %s141 = sphi 0, %s143
    %s144 = sphi 0, %s141
    %s145 = sphi 0, %s144
    %s161 = sphi 0, %s145
    %s167 = sphi 0, %s169
    %s170 = sphi 0, %s167
    %s171 = sphi 0, %s170
    %s187 = sphi 0, %s171
    %s193 = sphi 0, %s195
    %s196 = sphi 0, %s193
    %s197 = sphi 0, %s196
    %s213 = sphi 0, %s197
    %s219 = sphi 0, %s221
    %s222 = sphi 0, %s219
    %s223 = sphi 0, %s222
    %s239 = sphi 0, %s223
    %s245 = sphi 0, %s247
    %s248 = sphi 0, %s245
    %s249 = sphi 0, %s248
    %s265 = sphi 0, %s249
    %s271 = sphi 0, %s273
    %s274 = sphi 0, %s271
    %s275 = sphi 0, %s274
    %s291 = sphi 0, %s275
    %s297 = sphi 0, %s299
    %s300 = sphi 0, %s297
    %s301 = sphi 0, %s300
    %s317 = sphi 0, %s301
    %s323 = sphi 0, %s325
    %s326 = sphi 0, %s323
    %s327 = sphi 0, %s326
    %s343 = sphi 0, %s327
    %s349 = sphi 0, %s351
    %s352 = sphi 0, %s349
    %s353 = sphi 0, %s352
    %s369 = sphi 0, %s353
    %s375 = sphi 0, %s377
    %s378 = sphi 0, %s375
    %s379 = sphi 0, %s378
    %s395 = sphi 0, %s379
    %s401 = sphi 0, %s403
    %s404 = sphi 0, %s401
    %s405 = sphi 0, %s404
    %s421 = sphi 0, %s405
  $region4: #{gpt2_pallas.2} parent=0 // loop_header_branch
    %23 = sbr.rel (%p21) target = $region8
  $region5: #{gpt2_pallas.2} parent=0 // loop_body
    %s25 = ssub.s32 %s20, 1
    %s26 = ssub.s32 %s20, 2
    %s33 = sadd.s32 1, %s28
    %p34 = scmp.ge.s32.totalorder %s33, 2
    %s35 = scalar_select %p34, 0, %s33
    %s36 = sadd.s32 1, %s27
    %s37 = scalar_select %p34, %s36, %s27
    %p38 = scmp.ge.s32.totalorder %s37, 1
    %s39 = scalar_select %p38, 0, %s37
    %s40 = ssub.s32 %s27, %s39
    %p41 = scmp.eq.s32.totalorder %s40, 0
    %s43 = sadd.s32 %s42, 1
    %s44 = scalar_select %p41, %s42, %s43
    %p47 = pneg %p41
    %p48 = scmp.eq.s32.totalorder %s20, 1
    %p49 = por %p47, %p48
    %p50 = scmp.ne.s32.totalorder %s42, %s45
    %p51 = scmp.eq.s32.totalorder %s20, 0
    %p52 = por %p50, %p51
    %p53 = scmp.ne.s32.totalorder %s42, %s45
    %p54 = scmp.eq.s32.totalorder %s25, 1
    %p55 = por %p53, %p54
    %p56 = scmp.ne.s32.totalorder %s45, %s46
    %p57 = scmp.eq.s32.totalorder %s25, 0
    %p58 = por %p56, %p57
    %p59 = scmp.ne.s32.totalorder %s45, %s46
    %p60 = scmp.eq.s32.totalorder %s26, 1
    %p61 = por %p59, %p60
    %p63 = scmp.ne.s32.totalorder %s46, %s62
    %p64 = scmp.eq.s32.totalorder %s26, 0
    %p65 = por %p63, %p64
    %s67 = sadd.s32 %s66, 1
    %p70 = scmp.eq.s32.totalorder %s20, 1
    %p71 = scmp.ne.s32.totalorder %s66, %s68
    %p72 = scmp.eq.s32.totalorder %s20, 0
    %p73 = por %p71, %p72
    %p74 = scmp.ne.s32.totalorder %s66, %s68
    %p75 = scmp.eq.s32.totalorder %s25, 1
    %p76 = por %p74, %p75
    %p77 = scmp.ne.s32.totalorder %s68, %s69
    %p78 = scmp.eq.s32.totalorder %s25, 0
    %p79 = por %p77, %p78
    %p80 = scmp.ne.s32.totalorder %s68, %s69
    %p81 = scmp.eq.s32.totalorder %s26, 1
    %p82 = por %p80, %p81
    %p84 = scmp.ne.s32.totalorder %s69, %s83
    %p85 = scmp.eq.s32.totalorder %s26, 0
    %p86 = por %p84, %p85
    %s87 = ssub.s32 %s28, %s35
    %p88 = scmp.eq.s32.totalorder %s87, 0
    %s90 = sadd.s32 %s89, 1
    %s91 = scalar_select %p88, %s89, %s90
    %p94 = pneg %p88
    %p95 = scmp.eq.s32.totalorder %s20, 1
    %p96 = por %p94, %p95
    %p97 = scmp.ne.s32.totalorder %s89, %s92
    %p98 = scmp.eq.s32.totalorder %s20, 0
    %p99 = por %p97, %p98
    %p100 = scmp.ne.s32.totalorder %s89, %s92
    %p101 = scmp.eq.s32.totalorder %s25, 1
    %p102 = por %p100, %p101
    %p103 = scmp.ne.s32.totalorder %s92, %s93
    %p104 = scmp.eq.s32.totalorder %s25, 0
    %p105 = por %p103, %p104
    %p106 = scmp.ne.s32.totalorder %s92, %s93
    %p107 = scmp.eq.s32.totalorder %s26, 1
    %p108 = por %p106, %p107
    %p110 = scmp.ne.s32.totalorder %s93, %s109
    %p111 = scmp.eq.s32.totalorder %s26, 0
    %p112 = por %p110, %p111
    %s113 = ssub.s32 %s28, %s35
    %p114 = scmp.eq.s32.totalorder %s113, 0
    %s116 = sadd.s32 %s115, 1
    %s117 = scalar_select %p114, %s115, %s116
    %p120 = pneg %p114
    %p121 = scmp.eq.s32.totalorder %s20, 1
    %p122 = por %p120, %p121
    %p123 = scmp.ne.s32.totalorder %s115, %s118
    %p124 = scmp.eq.s32.totalorder %s20, 0
    %p125 = por %p123, %p124
    %p126 = scmp.ne.s32.totalorder %s115, %s118
    %p127 = scmp.eq.s32.totalorder %s25, 1
    %p128 = por %p126, %p127
    %p129 = scmp.ne.s32.totalorder %s118, %s119
    %p130 = scmp.eq.s32.totalorder %s25, 0
    %p131 = por %p129, %p130
    %p132 = scmp.ne.s32.totalorder %s118, %s119
    %p133 = scmp.eq.s32.totalorder %s26, 1
    %p134 = por %p132, %p133
    %p136 = scmp.ne.s32.totalorder %s119, %s135
    %p137 = scmp.eq.s32.totalorder %s26, 0
    %p138 = por %p136, %p137
    %s139 = ssub.s32 %s28, %s35
    %p140 = scmp.eq.s32.totalorder %s139, 0
    %s142 = sadd.s32 %s141, 1
    %s143 = scalar_select %p140, %s141, %s142
    %p146 = pneg %p140
    %p147 = scmp.eq.s32.totalorder %s20, 1
    %p148 = por %p146, %p147
    %p149 = scmp.ne.s32.totalorder %s141, %s144
    %p150 = scmp.eq.s32.totalorder %s20, 0
    %p151 = por %p149, %p150
    %p152 = scmp.ne.s32.totalorder %s141, %s144
    %p153 = scmp.eq.s32.totalorder %s25, 1
    %p154 = por %p152, %p153
    %p155 = scmp.ne.s32.totalorder %s144, %s145
    %p156 = scmp.eq.s32.totalorder %s25, 0
    %p157 = por %p155, %p156
    %p158 = scmp.ne.s32.totalorder %s144, %s145
    %p159 = scmp.eq.s32.totalorder %s26, 1
    %p160 = por %p158, %p159
    %p162 = scmp.ne.s32.totalorder %s145, %s161
    %p163 = scmp.eq.s32.totalorder %s26, 0
    %p164 = por %p162, %p163
    %s165 = ssub.s32 %s28, %s35
    %p166 = scmp.eq.s32.totalorder %s165, 0
    %s168 = sadd.s32 %s167, 1
    %s169 = scalar_select %p166, %s167, %s168
    %p172 = pneg %p166
    %p173 = scmp.eq.s32.totalorder %s20, 1
    %p174 = por %p172, %p173
    %p175 = scmp.ne.s32.totalorder %s167, %s170
    %p176 = scmp.eq.s32.totalorder %s20, 0
    %p177 = por %p175, %p176
    %p178 = scmp.ne.s32.totalorder %s167, %s170
    %p179 = scmp.eq.s32.totalorder %s25, 1
    %p180 = por %p178, %p179
    %p181 = scmp.ne.s32.totalorder %s170, %s171
    %p182 = scmp.eq.s32.totalorder %s25, 0
    %p183 = por %p181, %p182
    %p184 = scmp.ne.s32.totalorder %s170, %s171
    %p185 = scmp.eq.s32.totalorder %s26, 1
    %p186 = por %p184, %p185
    %p188 = scmp.ne.s32.totalorder %s171, %s187
    %p189 = scmp.eq.s32.totalorder %s26, 0
    %p190 = por %p188, %p189
    %s191 = ssub.s32 %s28, %s35
    %p192 = scmp.eq.s32.totalorder %s191, 0
    %s194 = sadd.s32 %s193, 1
    %s195 = scalar_select %p192, %s193, %s194
    %p198 = pneg %p192
    %p199 = scmp.eq.s32.totalorder %s20, 1
    %p200 = por %p198, %p199
    %p201 = scmp.ne.s32.totalorder %s193, %s196
    %p202 = scmp.eq.s32.totalorder %s20, 0
    %p203 = por %p201, %p202
    %p204 = scmp.ne.s32.totalorder %s193, %s196
    %p205 = scmp.eq.s32.totalorder %s25, 1
    %p206 = por %p204, %p205
    %p207 = scmp.ne.s32.totalorder %s196, %s197
    %p208 = scmp.eq.s32.totalorder %s25, 0
    %p209 = por %p207, %p208
    %p210 = scmp.ne.s32.totalorder %s196, %s197
    %p211 = scmp.eq.s32.totalorder %s26, 1
    %p212 = por %p210, %p211
    %p214 = scmp.ne.s32.totalorder %s197, %s213
    %p215 = scmp.eq.s32.totalorder %s26, 0
    %p216 = por %p214, %p215
    %s217 = ssub.s32 %s28, %s35
    %p218 = scmp.eq.s32.totalorder %s217, 0
    %s220 = sadd.s32 %s219, 1
    %s221 = scalar_select %p218, %s219, %s220
    %p224 = pneg %p218
    %p225 = scmp.eq.s32.totalorder %s20, 1
    %p226 = por %p224, %p225
    %p227 = scmp.ne.s32.totalorder %s219, %s222
    %p228 = scmp.eq.s32.totalorder %s20, 0
    %p229 = por %p227, %p228
    %p230 = scmp.ne.s32.totalorder %s219, %s222
    %p231 = scmp.eq.s32.totalorder %s25, 1
    %p232 = por %p230, %p231
    %p233 = scmp.ne.s32.totalorder %s222, %s223
    %p234 = scmp.eq.s32.totalorder %s25, 0
    %p235 = por %p233, %p234
    %p236 = scmp.ne.s32.totalorder %s222, %s223
    %p237 = scmp.eq.s32.totalorder %s26, 1
    %p238 = por %p236, %p237
    %p240 = scmp.ne.s32.totalorder %s223, %s239
    %p241 = scmp.eq.s32.totalorder %s26, 0
    %p242 = por %p240, %p241
    %s243 = ssub.s32 %s28, %s35
    %p244 = scmp.eq.s32.totalorder %s243, 0
    %s246 = sadd.s32 %s245, 1
    %s247 = scalar_select %p244, %s245, %s246
    %p250 = pneg %p244
    %p251 = scmp.eq.s32.totalorder %s20, 1
    %p252 = por %p250, %p251
    %p253 = scmp.ne.s32.totalorder %s245, %s248
    %p254 = scmp.eq.s32.totalorder %s20, 0
    %p255 = por %p253, %p254
    %p256 = scmp.ne.s32.totalorder %s245, %s248
    %p257 = scmp.eq.s32.totalorder %s25, 1
    %p258 = por %p256, %p257
    %p259 = scmp.ne.s32.totalorder %s248, %s249
    %p260 = scmp.eq.s32.totalorder %s25, 0
    %p261 = por %p259, %p260
    %p262 = scmp.ne.s32.totalorder %s248, %s249
    %p263 = scmp.eq.s32.totalorder %s26, 1
    %p264 = por %p262, %p263
    %p266 = scmp.ne.s32.totalorder %s249, %s265
    %p267 = scmp.eq.s32.totalorder %s26, 0
    %p268 = por %p266, %p267
    %s269 = ssub.s32 %s28, %s35
    %p270 = scmp.eq.s32.totalorder %s269, 0
    %s272 = sadd.s32 %s271, 1
    %s273 = scalar_select %p270, %s271, %s272
    %p276 = pneg %p270
    %p277 = scmp.eq.s32.totalorder %s20, 1
    %p278 = por %p276, %p277
    %p279 = scmp.ne.s32.totalorder %s271, %s274
    %p280 = scmp.eq.s32.totalorder %s20, 0
    %p281 = por %p279, %p280
    %p282 = scmp.ne.s32.totalorder %s271, %s274
    %p283 = scmp.eq.s32.totalorder %s25, 1
    %p284 = por %p282, %p283
    %p285 = scmp.ne.s32.totalorder %s274, %s275
    %p286 = scmp.eq.s32.totalorder %s25, 0
    %p287 = por %p285, %p286
    %p288 = scmp.ne.s32.totalorder %s274, %s275
    %p289 = scmp.eq.s32.totalorder %s26, 1
    %p290 = por %p288, %p289
    %p292 = scmp.ne.s32.totalorder %s275, %s291
    %p293 = scmp.eq.s32.totalorder %s26, 0
    %p294 = por %p292, %p293
    %s295 = ssub.s32 %s28, %s35
    %p296 = scmp.eq.s32.totalorder %s295, 0
    %s298 = sadd.s32 %s297, 1
    %s299 = scalar_select %p296, %s297, %s298
    %p302 = pneg %p296
    %p303 = scmp.eq.s32.totalorder %s20, 1
    %p304 = por %p302, %p303
    %p305 = scmp.ne.s32.totalorder %s297, %s300
    %p306 = scmp.eq.s32.totalorder %s20, 0
    %p307 = por %p305, %p306
    %p308 = scmp.ne.s32.totalorder %s297, %s300
    %p309 = scmp.eq.s32.totalorder %s25, 1
    %p310 = por %p308, %p309
    %p311 = scmp.ne.s32.totalorder %s300, %s301
    %p312 = scmp.eq.s32.totalorder %s25, 0
    %p313 = por %p311, %p312
    %p314 = scmp.ne.s32.totalorder %s300, %s301
    %p315 = scmp.eq.s32.totalorder %s26, 1
    %p316 = por %p314, %p315
    %p318 = scmp.ne.s32.totalorder %s301, %s317
    %p319 = scmp.eq.s32.totalorder %s26, 0
    %p320 = por %p318, %p319
    %s321 = ssub.s32 %s28, %s35
    %p322 = scmp.eq.s32.totalorder %s321, 0
    %s324 = sadd.s32 %s323, 1
    %s325 = scalar_select %p322, %s323, %s324
    %p328 = pneg %p322
    %p329 = scmp.eq.s32.totalorder %s20, 1
    %p330 = por %p328, %p329
    %p331 = scmp.ne.s32.totalorder %s323, %s326
    %p332 = scmp.eq.s32.totalorder %s20, 0
    %p333 = por %p331, %p332
    %p334 = scmp.ne.s32.totalorder %s323, %s326
    %p335 = scmp.eq.s32.totalorder %s25, 1
    %p336 = por %p334, %p335
    %p337 = scmp.ne.s32.totalorder %s326, %s327
    %p338 = scmp.eq.s32.totalorder %s25, 0
    %p339 = por %p337, %p338
    %p340 = scmp.ne.s32.totalorder %s326, %s327
    %p341 = scmp.eq.s32.totalorder %s26, 1
    %p342 = por %p340, %p341
    %p344 = scmp.ne.s32.totalorder %s327, %s343
    %p345 = scmp.eq.s32.totalorder %s26, 0
    %p346 = por %p344, %p345
    %s347 = ssub.s32 %s28, %s35
    %p348 = scmp.eq.s32.totalorder %s347, 0
    %s350 = sadd.s32 %s349, 1
    %s351 = scalar_select %p348, %s349, %s350
    %p354 = pneg %p348
    %p355 = scmp.eq.s32.totalorder %s20, 1
    %p356 = por %p354, %p355
    %p357 = scmp.ne.s32.totalorder %s349, %s352
    %p358 = scmp.eq.s32.totalorder %s20, 0
    %p359 = por %p357, %p358
    %p360 = scmp.ne.s32.totalorder %s349, %s352
    %p361 = scmp.eq.s32.totalorder %s25, 1
    %p362 = por %p360, %p361
    %p363 = scmp.ne.s32.totalorder %s352, %s353
    %p364 = scmp.eq.s32.totalorder %s25, 0
    %p365 = por %p363, %p364
    %p366 = scmp.ne.s32.totalorder %s352, %s353
    %p367 = scmp.eq.s32.totalorder %s26, 1
    %p368 = por %p366, %p367
    %p370 = scmp.ne.s32.totalorder %s353, %s369
    %p371 = scmp.eq.s32.totalorder %s26, 0
    %p372 = por %p370, %p371
    %s373 = ssub.s32 %s28, %s35
    %p374 = scmp.eq.s32.totalorder %s373, 0
    %s376 = sadd.s32 %s375, 1
    %s377 = scalar_select %p374, %s375, %s376
    %p380 = pneg %p374
    %p381 = scmp.eq.s32.totalorder %s20, 1
    %p382 = por %p380, %p381
    %p383 = scmp.ne.s32.totalorder %s375, %s378
    %p384 = scmp.eq.s32.totalorder %s20, 0
    %p385 = por %p383, %p384
    %p386 = scmp.ne.s32.totalorder %s375, %s378
    %p387 = scmp.eq.s32.totalorder %s25, 1
    %p388 = por %p386, %p387
    %p389 = scmp.ne.s32.totalorder %s378, %s379
    %p390 = scmp.eq.s32.totalorder %s25, 0
    %p391 = por %p389, %p390
    %p392 = scmp.ne.s32.totalorder %s378, %s379
    %p393 = scmp.eq.s32.totalorder %s26, 1
    %p394 = por %p392, %p393
    %p396 = scmp.ne.s32.totalorder %s379, %s395
    %p397 = scmp.eq.s32.totalorder %s26, 0
    %p398 = por %p396, %p397
    %s399 = ssub.s32 %s27, %s39
    %p400 = scmp.eq.s32.totalorder %s399, 0
    %s402 = sadd.s32 %s401, 1
    %s403 = scalar_select %p400, %s401, %s402
    %p406 = pneg %p400
    %p407 = scmp.eq.s32.totalorder %s20, 1
    %p408 = por %p406, %p407
    %p409 = scmp.ne.s32.totalorder %s401, %s404
    %p410 = scmp.eq.s32.totalorder %s20, 0
    %p411 = por %p409, %p410
    %p412 = scmp.ne.s32.totalorder %s401, %s404
    %p413 = scmp.eq.s32.totalorder %s25, 1
    %p414 = por %p412, %p413
    %p415 = scmp.ne.s32.totalorder %s404, %s405
    %p416 = scmp.eq.s32.totalorder %s25, 0
    %p417 = por %p415, %p416
    %p418 = scmp.ne.s32.totalorder %s404, %s405
    %p419 = scmp.eq.s32.totalorder %s26, 1
    %p420 = por %p418, %p419
    %p422 = scmp.ne.s32.totalorder %s405, %s421
    %p423 = scmp.eq.s32.totalorder %s26, 0
    %p424 = por %p422, %p423
    %p425 = scmp.le.s32.totalorder 1, %s20
    %p426 = scmp.lt.s32.totalorder %s20, 3
    %p427 = pnand %p425, %p426
    %p428 = pneg %p427
    // Predicated region
    $region9: #{gpt2_pallas.2} parent=5 // pred_check
      _
    $region10: #{gpt2_pallas.2} parent=5 // pred_check_branch
      %430 = sbr.rel (%p427) target = $region12
    $region11: #{gpt2_pallas.2} parent=5 // pred_region
      %s431 = ssub.s32 %s20, 1
      // Predicated region
      $region13: #{gpt2_pallas.2} parent=11 // pred_check
        %p432 = pneg %p58
      $region14: #{gpt2_pallas.2} parent=11 // pred_check_branch
        %434 = sbr.rel (%p432) target = $region16
      $region15: #{gpt2_pallas.2} parent=11 // pred_region
        %s435 = smul.u32 2, %s29
        %p436 = scmp.lt.s32.totalorder %s435, 1
        %s437 = scalar_select %p436, %s435, 1
        %s438 = smul.addr %s437, 8
        %s439 = scalar_lea.vmem %s0, %s438
        %s440 = smul.u32 2, %s29
      $region16: #{gpt2_pallas.2} parent=11 // pred_fallthru
        _
      // Predicated region
      $region17: #{gpt2_pallas.2} parent=11 // pred_check
        %p441 = pneg %p79
      $region18: #{gpt2_pallas.2} parent=11 // pred_check_branch
        %443 = sbr.rel (%p441) target = $region20
      $region19: #{gpt2_pallas.2} parent=11 // pred_region
        _
      $region20: #{gpt2_pallas.2} parent=11 // pred_fallthru
        _
    $region12: #{gpt2_pallas.2} parent=5 // pred_fallthru
      _
    %p444 = scmp.lt.s32.totalorder %s20, 2
    // Predicated region
    $region21: #{gpt2_pallas.2} parent=5 // pred_check
      %p445 = pneg %p444
    $region22: #{gpt2_pallas.2} parent=5 // pred_check_branch
      %447 = sbr.rel (%p445) target = $region24
    $region23: #{gpt2_pallas.2} parent=5 // pred_region
      // Predicated region
      $region25: #{gpt2_pallas.2} parent=23 // pred_check
        %p448 = pneg %p99
      $region26: #{gpt2_pallas.2} parent=23 // pred_check_branch
        %450 = sbr.rel (%p448) target = $region28
      $region27: #{gpt2_pallas.2} parent=23 // pred_region
        %p451 = scmp.lt.s32.totalorder %s28, 1
        %s452 = scalar_select %p451, %s28, 1
        %s453 = scalar_lea.vmem %s2, %s452
      $region28: #{gpt2_pallas.2} parent=23 // pred_fallthru
        _
      // Predicated region
      $region29: #{gpt2_pallas.2} parent=23 // pred_check
        %p454 = pneg %p125
      $region30: #{gpt2_pallas.2} parent=23 // pred_check_branch
        %456 = sbr.rel (%p454) target = $region32
      $region31: #{gpt2_pallas.2} parent=23 // pred_region
        %p457 = scmp.lt.s32.totalorder %s28, 1
        %s458 = scalar_select %p457, %s28, 1
        %s459 = scalar_lea.vmem %s3, %s458
      $region32: #{gpt2_pallas.2} parent=23 // pred_fallthru
        _
      // Predicated region
      $region33: #{gpt2_pallas.2} parent=23 // pred_check
        %p460 = pneg %p151
      $region34: #{gpt2_pallas.2} parent=23 // pred_check_branch
        %462 = sbr.rel (%p460) target = $region36
      $region35: #{gpt2_pallas.2} parent=23 // pred_region
        %p463 = scmp.lt.s32.totalorder %s28, 1
        %s464 = scalar_select %p463, %s28, 1
        %s465 = smul.addr %s464, 4
        %s466 = smul.addr %s465, 4
        %s467 = scalar_lea.vmem %s4, %s466
      $region36: #{gpt2_pallas.2} parent=23 // pred_fallthru
        _
      // Predicated region
      $region37: #{gpt2_pallas.2} parent=23 // pred_check
        %p468 = pneg %p177
      $region38: #{gpt2_pallas.2} parent=23 // pred_check_branch
        %470 = sbr.rel (%p468) target = $region40
      $region39: #{gpt2_pallas.2} parent=23 // pred_region
        %p471 = scmp.lt.s32.totalorder %s28, 1
        %s472 = scalar_select %p471, %s28, 1
        %s473 = scalar_lea.vmem %s5, %s472
      $region40: #{gpt2_pallas.2} parent=23 // pred_fallthru
        _
      // Predicated region
      $region41: #{gpt2_pallas.2} parent=23 // pred_check
        %p474 = pneg %p203
      $region42: #{gpt2_pallas.2} parent=23 // pred_check_branch
        %476 = sbr.rel (%p474) target = $region44
      $region43: #{gpt2_pallas.2} parent=23 // pred_region
        %p477 = scmp.lt.s32.totalorder %s28, 1
        %s478 = scalar_select %p477, %s28, 1
        %s479 = smul.addr %s478, 4
        %s480 = smul.addr %s479, 4
        %s481 = scalar_lea.vmem %s6, %s480
      $region44: #{gpt2_pallas.2} parent=23 // pred_fallthru
        _
      // Predicated region
      $region45: #{gpt2_pallas.2} parent=23 // pred_check
        %p482 = pneg %p229
      $region46: #{gpt2_pallas.2} parent=23 // pred_check_branch
        %484 = sbr.rel (%p482) target = $region48
      $region47: #{gpt2_pallas.2} parent=23 // pred_region
        %p485 = scmp.lt.s32.totalorder %s28, 1
        %s486 = scalar_select %p485, %s28, 1
        %s487 = scalar_lea.vmem %s7, %s486
      $region48: #{gpt2_pallas.2} parent=23 // pred_fallthru
        _
      // Predicated region
      $region49: #{gpt2_pallas.2} parent=23 // pred_check
        %p488 = pneg %p255
      $region50: #{gpt2_pallas.2} parent=23 // pred_check_branch
        %490 = sbr.rel (%p488) target = $region52
      $region51: #{gpt2_pallas.2} parent=23 // pred_region
        %p491 = scmp.lt.s32.totalorder %s28, 1
        %s492 = scalar_select %p491, %s28, 1
        %s493 = scalar_lea.vmem %s8, %s492
      $region52: #{gpt2_pallas.2} parent=23 // pred_fallthru
        _
      // Predicated region
      $region53: #{gpt2_pallas.2} parent=23 // pred_check
        %p494 = pneg %p281
      $region54: #{gpt2_pallas.2} parent=23 // pred_check_branch
        %496 = sbr.rel (%p494) target = $region56
      $region55: #{gpt2_pallas.2} parent=23 // pred_region
        %p497 = scmp.lt.s32.totalorder %s28, 1
        %s498 = scalar_select %p497, %s28, 1
        %s499 = scalar_lea.vmem %s9, %s498
      $region56: #{gpt2_pallas.2} parent=23 // pred_fallthru
        _
      // Predicated region
      $region57: #{gpt2_pallas.2} parent=23 // pred_check
        %p500 = pneg %p307
      $region58: #{gpt2_pallas.2} parent=23 // pred_check_branch
        %502 = sbr.rel (%p500) target = $region60
      $region59: #{gpt2_pallas.2} parent=23 // pred_region
        %p503 = scmp.lt.s32.totalorder %s28, 1
        %s504 = scalar_select %p503, %s28, 1
        %s505 = smul.addr %s504, 4
        %s506 = smul.addr %s505, 4
        %s507 = scalar_lea.vmem %s10, %s506
      $region60: #{gpt2_pallas.2} parent=23 // pred_fallthru
        _
      // Predicated region
      $region61: #{gpt2_pallas.2} parent=23 // pred_check
        %p508 = pneg %p333
      $region62: #{gpt2_pallas.2} parent=23 // pred_check_branch
        %510 = sbr.rel (%p508) target = $region64
      $region63: #{gpt2_pallas.2} parent=23 // pred_region
        %p511 = scmp.lt.s32.totalorder %s28, 1
        %s512 = scalar_select %p511, %s28, 1
        %s513 = scalar_lea.vmem %s11, %s512
      $region64: #{gpt2_pallas.2} parent=23 // pred_fallthru
        _
      // Predicated region
      $region65: #{gpt2_pallas.2} parent=23 // pred_check
        %p514 = pneg %p359
      $region66: #{gpt2_pallas.2} parent=23 // pred_check_branch
        %516 = sbr.rel (%p514) target = $region68
      $region67: #{gpt2_pallas.2} parent=23 // pred_region
        %p517 = scmp.lt.s32.totalorder %s28, 1
        %s518 = scalar_select %p517, %s28, 1
        %s519 = smul.addr %s518, 16
        %s520 = smul.addr %s519, 4
        %s521 = scalar_lea.vmem %s12, %s520
      $region68: #{gpt2_pallas.2} parent=23 // pred_fallthru
        _
      // Predicated region
      $region69: #{gpt2_pallas.2} parent=23 // pred_check
        %p522 = pneg %p385
      $region70: #{gpt2_pallas.2} parent=23 // pred_check_branch
        %524 = sbr.rel (%p522) target = $region72
      $region71: #{gpt2_pallas.2} parent=23 // pred_region
        %p525 = scmp.lt.s32.totalorder %s28, 1
        %s526 = scalar_select %p525, %s28, 1
        %s527 = scalar_lea.vmem %s13, %s526
      $region72: #{gpt2_pallas.2} parent=23 // pred_fallthru
        _
    $region24: #{gpt2_pallas.2} parent=5 // pred_fallthru
      _
    %p528 = scmp.le.s32.totalorder 1, %s20
    %p529 = scmp.lt.s32.totalorder %s20, 3
    %p530 = pnand %p528, %p529
    %p531 = pneg %p530
    // Predicated region
    $region73: #{gpt2_pallas.2} parent=5 // pred_check
      _
    $region74: #{gpt2_pallas.2} parent=5 // pred_check_branch
      %533 = sbr.rel (%p530) target = $region76
    $region75: #{gpt2_pallas.2} parent=5 // pred_region
      %s534 = ssub.s32 %s20, 1
      %s535 = smul.u32 2, %s29
      %p536 = scmp.lt.s32.totalorder %s535, 1
      %s537 = scalar_select %p536, %s535, 1
      %s538 = smul.addr %s537, 8
      %s539 = scalar_lea.vmem %s0, %s538
      %p540 = pneg %p58
      %p541 = pneg %p55
      %p542 = pneg %p79
      %p543 = pneg %p76
      %p544 = scmp.lt.s32.totalorder %s30, 1
      %s545 = scalar_select %p544, %s30, 1
      %s546 = scalar_lea.vmem %s2, %s545
      %p547 = pneg %p105
      %p548 = pneg %p102
      %p549 = scmp.lt.s32.totalorder %s30, 1
      %s550 = scalar_select %p549, %s30, 1
      %s551 = scalar_lea.vmem %s3, %s550
      %p552 = pneg %p131
      %p553 = pneg %p128
      %p554 = scmp.lt.s32.totalorder %s30, 1
      %s555 = scalar_select %p554, %s30, 1
      %s556 = smul.addr %s555, 4
      %s557 = smul.addr %s556, 4
      %s558 = scalar_lea.vmem %s4, %s557
      %p559 = pneg %p157
      %p560 = pneg %p154
      %p561 = scmp.lt.s32.totalorder %s30, 1
      %s562 = scalar_select %p561, %s30, 1
      %s563 = scalar_lea.vmem %s5, %s562
      %p564 = pneg %p183
      %p565 = pneg %p180
      %p566 = scmp.lt.s32.totalorder %s30, 1
      %s567 = scalar_select %p566, %s30, 1
      %s568 = smul.addr %s567, 4
      %s569 = smul.addr %s568, 4
      %s570 = scalar_lea.vmem %s6, %s569
      %p571 = pneg %p209
      %p572 = pneg %p206
      %p573 = scmp.lt.s32.totalorder %s30, 1
      %s574 = scalar_select %p573, %s30, 1
      %s575 = scalar_lea.vmem %s7, %s574
      %p576 = pneg %p235
      %p577 = pneg %p232
      %p578 = scmp.lt.s32.totalorder %s30, 1
      %s579 = scalar_select %p578, %s30, 1
      %s580 = scalar_lea.vmem %s8, %s579
      %p581 = pneg %p261
      %p582 = pneg %p258
      %p583 = scmp.lt.s32.totalorder %s30, 1
      %s584 = scalar_select %p583, %s30, 1
      %s585 = scalar_lea.vmem %s9, %s584
      %p586 = pneg %p287
      %p587 = pneg %p284
      %p588 = scmp.lt.s32.totalorder %s30, 1
      %s589 = scalar_select %p588, %s30, 1
      %s590 = smul.addr %s589, 4
      %s591 = smul.addr %s590, 4
      %s592 = scalar_lea.vmem %s10, %s591
      %p593 = pneg %p313
      %p594 = pneg %p310
      %p595 = scmp.lt.s32.totalorder %s30, 1
      %s596 = scalar_select %p595, %s30, 1
      %s597 = scalar_lea.vmem %s11, %s596
      %p598 = pneg %p339
      %p599 = pneg %p336
      %p600 = scmp.lt.s32.totalorder %s30, 1
      %s601 = scalar_select %p600, %s30, 1
      %s602 = smul.addr %s601, 16
      %s603 = smul.addr %s602, 4
      %s604 = scalar_lea.vmem %s12, %s603
      %p605 = pneg %p365
      %p606 = pneg %p362
      %p607 = scmp.lt.s32.totalorder %s30, 1
      %s608 = scalar_select %p607, %s30, 1
      %s609 = scalar_lea.vmem %s13, %s608
      %p610 = pneg %p391
      %p611 = pneg %p388
      %p612 = pneg %p417
      %p613 = pneg %p414
      %s614 = smul.u32 2, %s29
      %p615 = scmp.lt.s32.totalorder %s614, 1
      %s616 = scalar_select %p615, %s614, 1
      %s617 = smul.addr %s616, 8
      %s618 = scalar_lea.vmem %s14, %s617
      %s619 = smul.u32 2, %s29
      %p620 = scmp.lt.s32.totalorder %s619, 1
      %s621 = scalar_select %p620, %s619, 1
      %s622 = smul.addr %s621, 8
      %s623 = scalar_lea.vmem %s0, %s622
      %s624 = smul.u32 2, %s29
      %p625 = scmp.lt.s32.totalorder %s30, 1
      %s626 = scalar_select %p625, %s30, 1
      %s627 = scalar_lea.vmem %s2, %s626
      %p628 = scmp.lt.s32.totalorder %s30, 1
      %s629 = scalar_select %p628, %s30, 1
      %s630 = scalar_lea.vmem %s3, %s629
      %p631 = scmp.lt.s32.totalorder %s30, 1
      %s632 = scalar_select %p631, %s30, 1
      %s633 = smul.addr %s632, 4
      %s634 = smul.addr %s633, 4
      %s635 = scalar_lea.vmem %s4, %s634
      %p636 = scmp.lt.s32.totalorder %s30, 1
      %s637 = scalar_select %p636, %s30, 1
      %s638 = scalar_lea.vmem %s5, %s637
      %p639 = scmp.lt.s32.totalorder %s30, 1
      %s640 = scalar_select %p639, %s30, 1
      %s641 = smul.addr %s640, 4
      %s642 = smul.addr %s641, 4
      %s643 = scalar_lea.vmem %s6, %s642
      %p644 = scmp.lt.s32.totalorder %s30, 1
      %s645 = scalar_select %p644, %s30, 1
      %s646 = scalar_lea.vmem %s7, %s645
      %p647 = scmp.lt.s32.totalorder %s30, 1
      %s648 = scalar_select %p647, %s30, 1
      %s649 = scalar_lea.vmem %s8, %s648
      %p650 = scmp.lt.s32.totalorder %s30, 1
      %s651 = scalar_select %p650, %s30, 1
      %s652 = scalar_lea.vmem %s9, %s651
      %p653 = scmp.lt.s32.totalorder %s30, 1
      %s654 = scalar_select %p653, %s30, 1
      %s655 = smul.addr %s654, 4
      %s656 = smul.addr %s655, 4
      %s657 = scalar_lea.vmem %s10, %s656
      %p658 = scmp.lt.s32.totalorder %s30, 1
      %s659 = scalar_select %p658, %s30, 1
      %s660 = scalar_lea.vmem %s11, %s659
      %p661 = scmp.lt.s32.totalorder %s30, 1
      %s662 = scalar_select %p661, %s30, 1
      %s663 = smul.addr %s662, 16
      %s664 = smul.addr %s663, 4
      %s665 = scalar_lea.vmem %s12, %s664
      %p666 = scmp.lt.s32.totalorder %s30, 1
      %s667 = scalar_select %p666, %s30, 1
      %s668 = scalar_lea.vmem %s13, %s667
      %s669 = smul.u32 2, %s29
      %p670 = scmp.lt.s32.totalorder %s669, 1
      %s671 = scalar_select %p670, %s669, 1
      %s672 = smul.addr %s671, 8
      %s673 = scalar_lea.vmem %s14, %s672
      %s674 = smul.u32 2, %s29
      %p676 = scmp.eq.s32.totalorder %s30, 0
      // Predicated region
      $region77: #{gpt2_pallas.2} parent=75 // pred_check
        %p677 = pneg %p676
      $region78: #{gpt2_pallas.2} parent=75 // pred_check_branch
        %679 = sbr.rel (%p677) target = $region80
      $region79: #{gpt2_pallas.2} parent=75 // pred_region
        %v680 = vld [vmem:[%s623] sm:$0xff]
        %v681 = vld [vmem:[%s623 + $0x8] sm:$0xff]
        %vm682 = vcmask 261120
        %683 = vst.msk [vmem:[%s673] sm:$0xff] %vm682, %v680
        %684 = vst.msk [vmem:[%s673 + $0x8] sm:$0xff] %vm682, %v681
      $region80: #{gpt2_pallas.2} parent=75 // pred_fallthru
        _
      %v685 = vld [vmem:[%s673] sm:$0xff]
      %v686 = vld [vmem:[%s673 + $0x8] sm:$0xff]
      %v687 = vld [vmem:[%s627] sm:$0x1]
      %v688 = vld [vmem:[%s630] sm:$0x1]
      %vm689 = vcmask 261120
      %v690 = vsel %vm689, %v685, 0.0
      %691 = vadd.xlane.f32.xlu0 %v690
      %v692 = vpop.xlane.xlu0 %691
      %v693 = vsel %vm689, %v686, 0.0
      %694 = vadd.xlane.f32.xlu0 %v693
      %v695 = vpop.xlane.xlu0 %694
      %v696 = vrcp.pop 32.0
      %v697 = vmul.f32 %v692, %v696
      %v698 = vmul.f32 %v695, %v696
      %v699 = vsub.f32 %v685, %v697
      %v700 = vsub.f32 %v686, %v698
      %v701 = vmul.f32 %v699, %v699
      %v702 = vmul.f32 %v700, %v700
      %v703 = vsel %vm689, %v701, 0.0
      %704 = vadd.xlane.f32.xlu0 %v703
      %v705 = vpop.xlane.xlu0 %704
      %v706 = vsel %vm689, %v702, 0.0
      %707 = vadd.xlane.f32.xlu0 %v706
      %v708 = vpop.xlane.xlu0 %707
      %v709 = vmul.f32 %v705, %v696
      %v710 = vmul.f32 %v708, %v696
      %v711 = vadd.f32 %v709, 1e-05
      %v712 = vadd.f32 %v710, 1e-05
      %v713 = vrsqrt.pop %v711
      %v714 = vrsqrt.pop %v712
      %v715 = vmul.f32 %v699, %v713
      %v716 = vmul.f32 %v700, %v714
      %v718 = vlaneseq
      %v719 = vshrl.u32 %v718, 7
      %v720 = vsub.s32 0, %v719
      %v721 = vrot.slane %v687, %v720
      %v723 = vmul.f32 %v715, %v721
      %v724 = vmul.f32 %v716, %v721
      %v726 = vlaneseq
      %v727 = vshrl.u32 %v726, 7
      %v728 = vsub.s32 0, %v727
      %v729 = vrot.slane %v688, %v728
      %v731 = vadd.f32 %v723, %v729
      %v732 = vadd.f32 %v724, %v729
      %v733 = vpack.c.bf16 %v732, %v731
      %v734 = vld [vmem:[%s635] sm:$0xf]
      %v735 = vld [vmem:[%s635 + $0x4] sm:$0xf]
      %v736 = vld [vmem:[%s635 + $0x8] sm:$0xf]
      %v737 = vld [vmem:[%s635 + $0xc] sm:$0xf]
      %v738 = vld [vmem:[%s638] sm:$0x1]
      %v740 = vlaneseq
      %v741 = vshrl.u32 %v740, 7
      %v742 = vsub.s32 0, %v741
      %v743 = vrot.slane %v738, %v742
      %v749 = vunpack.c.l.b16 %v734
      %v750 = vunpack.c.l.b16 %v735
      %v751 = vunpack.c.l.b16 %v736
      %v752 = vunpack.c.l.b16 %v737
      %v753 = vpack.c.b16 %v750, %v749
      %v754 = vpack.c.b16 %v752, %v751
      %v758 = vsel %vm689, %v733, 0
      %760 = vmatprep.subr.bf16.mxu0 0
      %761 = vmatpush1.bf16.msra.mxu0 %v753
      %762 = vmatprep.subr.bf16.mxu0 0
      %763 = vmatpush1.bf16.msra.mxu0 %v754
      %764 = vmatprep.subr.bf16.mxu0 0
      %765 = vmatpush1.bf16.msra.mxu0 0
      %766 = vmatprep.subr.bf16.mxu0 0
      %767 = vmatpush1.bf16.msra.mxu0 0
      %768 = vmatprep.subr.bf16.mxu0 0
      %769 = vmatpush1.bf16.msra.mxu0 0
      %770 = vmatprep.subr.bf16.mxu0 0
      %771 = vmatpush1.bf16.msra.mxu0 0
      %772 = vmatprep.subr.bf16.mxu0 0
      %773 = vmatpush1.bf16.msra.mxu0 0
      %774 = vmatprep.subr.bf16.mxu0 0
      %775 = vmatpush1.bf16.msra.mxu0 0
      %776 = vmatprep.subr.bf16.mxu0 0
      %777 = vmatpush1.bf16.msra.mxu0 0
      %778 = vmatprep.subr.bf16.mxu0 0
      %779 = vmatpush1.bf16.msra.mxu0 0
      %780 = vmatprep.subr.bf16.mxu0 0
      %781 = vmatpush1.bf16.msra.mxu0 0
      %782 = vmatprep.subr.bf16.mxu0 0
      %783 = vmatpush1.bf16.msra.mxu0 0
      %784 = vmatprep.subr.bf16.mxu0 0
      %785 = vmatpush1.bf16.msra.mxu0 0
      %786 = vmatprep.subr.bf16.mxu0 0
      %787 = vmatpush1.bf16.msra.mxu0 0
      %788 = vmatprep.subr.bf16.mxu0 0
      %789 = vmatpush1.bf16.msra.mxu0 0
      %790 = vmatprep.subr.bf16.mxu0 0
      %791 = vmatpush1.bf16.msra.mxu0 0
      %792 = vmatprep.mubr.bf16.mxu0 0
      %793 = vmatmul.mubr.bf16.gmra.mrb[0].mxu0 %v758
      %v794 = vpop.f32.mrb[0].mxu0
      %v795 = vadd.f32 %v743, %v794
      %v796 = vpop.f32.mrb[0].mxu0
      %v797 = vpop.f32.mrb[0].mxu0
      %v798 = vadd.f32 %v743, %v797
      %v799 = vpop.f32.mrb[0].mxu0
      %800 = vdwg.mxu0
      %v801 = vld [vmem:[%s1] sm:$0xff]
      %v802 = vmul.f32 %v795, 0.35355338
      %v803 = vmul.f32 %v798, 0.35355338
      %v804 = vpack.c.bf16 %v802, %v802
      %v805 = vpack.c.bf16 %v803, %v803
      %v806 = vpack.c.bf16 %v795, %v795
      %v807 = vpack.c.bf16 %v798, %v798
      %809 = vrot.lane.b32.xlu0 %v806, 96
      %v810 = vpop.permute.xlu0 %809
      %vm811 = vcmask 64512
      %v813 = vsel %vm811, %v804, 0
      %v816 = vsel %vm811, %v810, 0
      %818 = vmatprep.subr.bf16.mxu0 0
      %819 = vmatpush1.bf16.xpose.msra.mxu0 %v816
      %820 = vmatprep.subr.bf16.mxu0 0
      %821 = vmatpush1.bf16.xpose.msra.mxu0 0
      %822 = vmatprep.subr.bf16.mxu0 0
      %823 = vmatpush1.bf16.xpose.msra.mxu0 0
      %824 = vmatprep.subr.bf16.mxu0 0
      %825 = vmatpush1.bf16.xpose.msra.mxu0 0
      %826 = vmatprep.subr.bf16.mxu0 0
      %827 = vmatpush1.bf16.xpose.msra.mxu0 0
      %828 = vmatprep.subr.bf16.mxu0 0
      %829 = vmatpush1.bf16.xpose.msra.mxu0 0
      %830 = vmatprep.subr.bf16.mxu0 0
      %831 = vmatpush1.bf16.xpose.msra.mxu0 0
      %832 = vmatprep.subr.bf16.mxu0 0
      %833 = vmatpush1.bf16.xpose.msra.mxu0 0
      %834 = vmatprep.subr.bf16.mxu0 0
      %835 = vmatpush1.bf16.xpose.msra.mxu0 0
      %836 = vmatprep.subr.bf16.mxu0 0
      %837 = vmatpush1.bf16.xpose.msra.mxu0 0
      %838 = vmatprep.subr.bf16.mxu0 0
      %839 = vmatpush1.bf16.xpose.msra.mxu0 0
      %840 = vmatprep.subr.bf16.mxu0 0
      %841 = vmatpush1.bf16.xpose.msra.mxu0 0
      %842 = vmatprep.subr.bf16.mxu0 0
      %843 = vmatpush1.bf16.xpose.msra.mxu0 0
      %844 = vmatprep.subr.bf16.mxu0 0
      %845 = vmatpush1.bf16.xpose.msra.mxu0 0
      %846 = vmatprep.subr.bf16.mxu0 0
      %847 = vmatpush1.bf16.xpose.msra.mxu0 0
      %848 = vmatprep.subr.bf16.mxu0 0
      %849 = vmatpush1.bf16.xpose.msra.mxu0 0
      %850 = vmatprep.mubr.bf16.mxu0 0
      %851 = vmatmul.mubr.bf16.gmra.mrb[0].mxu0 %v813
      %v852 = vpop.f32.mrb[0].mxu0
      %v853 = vadd.f32 %v801, %v852
      %v854 = vpop.f32.mrb[0].mxu0
      %v855 = vpop.f32.mrb[0].mxu0
      %v856 = vpop.f32.mrb[0].mxu0
      %857 = vdwg.mxu0
      %859 = vrot.lane.b32.xlu0 %v807, 96
      %v860 = vpop.permute.xlu0 %859
      %v862 = vsel %vm811, %v805, 0
      %v865 = vsel %vm811, %v860, 0
      %867 = vmatprep.subr.bf16.mxu0 0
      %868 = vmatpush1.bf16.xpose.msra.mxu0 %v865
      %869 = vmatprep.subr.bf16.mxu0 0
      %870 = vmatpush1.bf16.xpose.msra.mxu0 0
      %871 = vmatprep.subr.bf16.mxu0 0
      %872 = vmatpush1.bf16.xpose.msra.mxu0 0
      %873 = vmatprep.subr.bf16.mxu0 0
      %874 = vmatpush1.bf16.xpose.msra.mxu0 0
      %875 = vmatprep.subr.bf16.mxu0 0
      %876 = vmatpush1.bf16.xpose.msra.mxu0 0
      %877 = vmatprep.subr.bf16.mxu0 0
      %878 = vmatpush1.bf16.xpose.msra.mxu0 0
      %879 = vmatprep.subr.bf16.mxu0 0
      %880 = vmatpush1.bf16.xpose.msra.mxu0 0
      %881 = vmatprep.subr.bf16.mxu0 0
      %882 = vmatpush1.bf16.xpose.msra.mxu0 0
      %883 = vmatprep.subr.bf16.mxu0 0
      %884 = vmatpush1.bf16.xpose.msra.mxu0 0
      %885 = vmatprep.subr.bf16.mxu0 0
      %886 = vmatpush1.bf16.xpose.msra.mxu0 0
      %887 = vmatprep.subr.bf16.mxu0 0
      %888 = vmatpush1.bf16.xpose.msra.mxu0 0
      %889 = vmatprep.subr.bf16.mxu0 0
      %890 = vmatpush1.bf16.xpose.msra.mxu0 0
      %891 = vmatprep.subr.bf16.mxu0 0
      %892 = vmatpush1.bf16.xpose.msra.mxu0 0
      %893 = vmatprep.subr.bf16.mxu0 0
      %894 = vmatpush1.bf16.xpose.msra.mxu0 0
      %895 = vmatprep.subr.bf16.mxu0 0
      %896 = vmatpush1.bf16.xpose.msra.mxu0 0
      %897 = vmatprep.subr.bf16.mxu0 0
      %898 = vmatpush1.bf16.xpose.msra.mxu0 0
      %899 = vmatprep.mubr.bf16.mxu0 0
      %900 = vmatmul.mubr.bf16.gmra.mrb[0].mxu0 %v862
      %v901 = vpop.f32.mrb[0].mxu0
      %v902 = vadd.f32 %v801, %v901
      %v903 = vpop.f32.mrb[0].mxu0
      %v904 = vpop.f32.mrb[0].mxu0
      %v905 = vpop.f32.mrb[0].mxu0
      %906 = vdwg.mxu0
      %v907 = vsel %vm811, %v853, -inf
      %908 = vmax.xlane.f32.xlu0 %v907
      %v909 = vpop.xlane.xlu0 %908
      %v910 = vsel %vm811, %v902, -inf
      %911 = vmax.xlane.f32.xlu0 %v910
      %v912 = vpop.xlane.xlu0 %911
      %v913 = vsub.f32 %v853, %v909
      %v914 = vsub.f32 %v902, %v912
      %v915 = vmul.f32 %v913, 1.442695
      %v916 = vpow.pop %v915
      %v917 = vmul.f32 %v914, 1.442695
      %v918 = vpow.pop %v917
      %v919 = vsel %vm811, %v916, 0.0
      %920 = vadd.xlane.f32.xlu0 %v919
      %v921 = vpop.xlane.xlu0 %920
      %v922 = vsel %vm811, %v918, 0.0
      %923 = vadd.xlane.f32.xlu0 %v922
      %v924 = vpop.xlane.xlu0 %923
      %v925 = vrcp.pop %v921
      %v926 = vrcp.pop %v924
      %v927 = vmul.f32 %v916, %v925
      %v928 = vmul.f32 %v918, %v926
      %v929 = vpack.c.bf16 %v927, %v927
      %v930 = vpack.c.bf16 %v928, %v928
      %931 = vrot.lane.b32.xlu0 %v806, 64
      %v932 = vpop.permute.xlu0 %931
      %v934 = vsel %vm811, %v929, 0
      %vm936 = vcmask 1043456
      %v938 = vsel %vm936, %v932, 0
      %940 = vmatprep.subr.bf16.mxu0 0
      %941 = vmatpush1.bf16.msra.mxu0 %v938
      %942 = vmatprep.subr.bf16.mxu0 0
      %943 = vmatpush1.bf16.msra.mxu0 0
      %944 = vmatprep.subr.bf16.mxu0 0
      %945 = vmatpush1.bf16.msra.mxu0 0
      %946 = vmatprep.subr.bf16.mxu0 0
      %947 = vmatpush1.bf16.msra.mxu0 0
      %948 = vmatprep.subr.bf16.mxu0 0
      %949 = vmatpush1.bf16.msra.mxu0 0
      %950 = vmatprep.subr.bf16.mxu0 0
      %951 = vmatpush1.bf16.msra.mxu0 0
      %952 = vmatprep.subr.bf16.mxu0 0
      %953 = vmatpush1.bf16.msra.mxu0 0
      %954 = vmatprep.subr.bf16.mxu0 0
      %955 = vmatpush1.bf16.msra.mxu0 0
      %956 = vmatprep.subr.bf16.mxu0 0
      %957 = vmatpush1.bf16.msra.mxu0 0
      %958 = vmatprep.subr.bf16.mxu0 0
      %959 = vmatpush1.bf16.msra.mxu0 0
      %960 = vmatprep.subr.bf16.mxu0 0
      %961 = vmatpush1.bf16.msra.mxu0 0
      %962 = vmatprep.subr.bf16.mxu0 0
      %963 = vmatpush1.bf16.msra.mxu0 0
      %964 = vmatprep.subr.bf16.mxu0 0
      %965 = vmatpush1.bf16.msra.mxu0 0
      %966 = vmatprep.subr.bf16.mxu0 0
      %967 = vmatpush1.bf16.msra.mxu0 0
      %968 = vmatprep.subr.bf16.mxu0 0
      %969 = vmatpush1.bf16.msra.mxu0 0
      %970 = vmatprep.subr.bf16.mxu0 0
      %971 = vmatpush1.bf16.msra.mxu0 0
      %972 = vmatprep.mubr.bf16.mxu0 0
      %973 = vmatmul.mubr.bf16.gmra.mrb[0].mxu0 %v934
      %v974 = vpop.f32.mrb[0].mxu0
      %v975 = vadd.f32 0.0, %v974
      %v976 = vpop.f32.mrb[0].mxu0
      %v977 = vpop.f32.mrb[0].mxu0
      %v978 = vpop.f32.mrb[0].mxu0
      %979 = vdwg.mxu0
      %980 = vrot.lane.b32.xlu0 %v807, 64
      %v981 = vpop.permute.xlu0 %980
      %v983 = vsel %vm811, %v930, 0
      %v986 = vsel %vm936, %v981, 0
      %988 = vmatprep.subr.bf16.mxu0 0
      %989 = vmatpush1.bf16.msra.mxu0 %v986
      %990 = vmatprep.subr.bf16.mxu0 0
      %991 = vmatpush1.bf16.msra.mxu0 0
      %992 = vmatprep.subr.bf16.mxu0 0
      %993 = vmatpush1.bf16.msra.mxu0 0
      %994 = vmatprep.subr.bf16.mxu0 0
      %995 = vmatpush1.bf16.msra.mxu0 0
      %996 = vmatprep.subr.bf16.mxu0 0
      %997 = vmatpush1.bf16.msra.mxu0 0
      %998 = vmatprep.subr.bf16.mxu0 0
      %999 = vmatpush1.bf16.msra.mxu0 0
      %1000 = vmatprep.subr.bf16.mxu0 0
      %1001 = vmatpush1.bf16.msra.mxu0 0
      %1002 = vmatprep.subr.bf16.mxu0 0
      %1003 = vmatpush1.bf16.msra.mxu0 0
      %1004 = vmatprep.subr.bf16.mxu0 0
      %1005 = vmatpush1.bf16.msra.mxu0 0
      %1006 = vmatprep.subr.bf16.mxu0 0
      %1007 = vmatpush1.bf16.msra.mxu0 0
      %1008 = vmatprep.subr.bf16.mxu0 0
      %1009 = vmatpush1.bf16.msra.mxu0 0
      %1010 = vmatprep.subr.bf16.mxu0 0
      %1011 = vmatpush1.bf16.msra.mxu0 0
      %1012 = vmatprep.subr.bf16.mxu0 0
      %1013 = vmatpush1.bf16.msra.mxu0 0
      %1014 = vmatprep.subr.bf16.mxu0 0
      %1015 = vmatpush1.bf16.msra.mxu0 0
      %1016 = vmatprep.subr.bf16.mxu0 0
      %1017 = vmatpush1.bf16.msra.mxu0 0
      %1018 = vmatprep.subr.bf16.mxu0 0
      %1019 = vmatpush1.bf16.msra.mxu0 0
      %1020 = vmatprep.mubr.bf16.mxu0 0
      %1021 = vmatmul.mubr.bf16.gmra.mrb[0].mxu0 %v983
      %v1022 = vpop.f32.mrb[0].mxu0
      %v1023 = vadd.f32 0.0, %v1022
      %v1024 = vpop.f32.mrb[0].mxu0
      %v1025 = vpop.f32.mrb[0].mxu0
      %v1026 = vpop.f32.mrb[0].mxu0
      %1027 = vdwg.mxu0
      %v1028 = vpack.c.bf16 %v1023, %v975
      %v1029 = vld [vmem:[%s643] sm:$0xf]
      %1031 = vrot.lane.b32.xlu0 %v804, 120
      %v1032 = vpop.permute.xlu0 %1031
      %1033 = vrot.lane.b32.xlu0 %v806, 88
      %v1034 = vpop.permute.xlu0 %1033
      %v1036 = vsel %vm811, %v1032, 0
      %v1039 = vsel %vm811, %v1034, 0
      %1041 = vmatprep.subr.bf16.mxu0 0
      %1042 = vmatpush1.bf16.xpose.msra.mxu0 %v1039
      %1043 = vmatprep.subr.bf16.mxu0 0
      %1044 = vmatpush1.bf16.xpose.msra.mxu0 0
      %1045 = vmatprep.subr.bf16.mxu0 0
      %1046 = vmatpush1.bf16.xpose.msra.mxu0 0
      %1047 = vmatprep.subr.bf16.mxu0 0
      %1048 = vmatpush1.bf16.xpose.msra.mxu0 0
      %1049 = vmatprep.subr.bf16.mxu0 0
      %1050 = vmatpush1.bf16.xpose.msra.mxu0 0
      %1051 = vmatprep.subr.bf16.mxu0 0
      %1052 = vmatpush1.bf16.xpose.msra.mxu0 0
      %1053 = vmatprep.subr.bf16.mxu0 0
      %1054 = vmatpush1.bf16.xpose.msra.mxu0 0
      %1055 = vmatprep.subr.bf16.mxu0 0
      %1056 = vmatpush1.bf16.xpose.msra.mxu0 0
      %1057 = vmatprep.subr.bf16.mxu0 0
      %1058 = vmatpush1.bf16.xpose.msra.mxu0 0
      %1059 = vmatprep.subr.bf16.mxu0 0
      %1060 = vmatpush1.bf16.xpose.msra.mxu0 0
      %1061 = vmatprep.subr.bf16.mxu0 0
      %1062 = vmatpush1.bf16.xpose.msra.mxu0 0
      %1063 = vmatprep.subr.bf16.mxu0 0
      %1064 = vmatpush1.bf16.xpose.msra.mxu0 0
      %1065 = vmatprep.subr.bf16.mxu0 0
      %1066 = vmatpush1.bf16.xpose.msra.mxu0 0
      %1067 = vmatprep.subr.bf16.mxu0 0
      %1068 = vmatpush1.bf16.xpose.msra.mxu0 0
      %1069 = vmatprep.subr.bf16.mxu0 0
      %1070 = vmatpush1.bf16.xpose.msra.mxu0 0
      %1071 = vmatprep.subr.bf16.mxu0 0
      %1072 = vmatpush1.bf16.xpose.msra.mxu0 0
      %1073 = vmatprep.mubr.bf16.mxu0 0
      %1074 = vmatmul.mubr.bf16.gmra.mrb[0].mxu0 %v1036
      %v1075 = vpop.f32.mrb[0].mxu0
      %v1076 = vadd.f32 %v801, %v1075
      %v1077 = vpop.f32.mrb[0].mxu0
      %v1078 = vpop.f32.mrb[0].mxu0
      %v1079 = vpop.f32.mrb[0].mxu0
      %1080 = vdwg.mxu0
      %1082 = vrot.lane.b32.xlu0 %v805, 120
      %v1083 = vpop.permute.xlu0 %1082
      %1084 = vrot.lane.b32.xlu0 %v807, 88
      %v1085 = vpop.permute.xlu0 %1084
      %v1087 = vsel %vm811, %v1083, 0
      %v1090 = vsel %vm811, %v1085, 0
      %1092 = vmatprep.subr.bf16.mxu0 0
      %1093 = vmatpush1.bf16.xpose.msra.mxu0 %v1090
      %1094 = vmatprep.subr.bf16.mxu0 0
      %1095 = vmatpush1.bf16.xpose.msra.mxu0 0
      %1096 = vmatprep.subr.bf16.mxu0 0
      %1097 = vmatpush1.bf16.xpose.msra.mxu0 0
      %1098 = vmatprep.subr.bf16.mxu0 0
      %1099 = vmatpush1.bf16.xpose.msra.mxu0 0
      %1100 = vmatprep.subr.bf16.mxu0 0
      %1101 = vmatpush1.bf16.xpose.msra.mxu0 0
      %1102 = vmatprep.subr.bf16.mxu0 0
      %1103 = vmatpush1.bf16.xpose.msra.mxu0 0
      %1104 = vmatprep.subr.bf16.mxu0 0
      %1105 = vmatpush1.bf16.xpose.msra.mxu0 0
      %1106 = vmatprep.subr.bf16.mxu0 0
      %1107 = vmatpush1.bf16.xpose.msra.mxu0 0
      %1108 = vmatprep.subr.bf16.mxu0 0
      %1109 = vmatpush1.bf16.xpose.msra.mxu0 0
      %1110 = vmatprep.subr.bf16.mxu0 0
      %1111 = vmatpush1.bf16.xpose.msra.mxu0 0
      %1112 = vmatprep.subr.bf16.mxu0 0
      %1113 = vmatpush1.bf16.xpose.msra.mxu0 0
      %1114 = vmatprep.subr.bf16.mxu0 0
      %1115 = vmatpush1.bf16.xpose.msra.mxu0 0
      %1116 = vmatprep.subr.bf16.mxu0 0
      %1117 = vmatpush1.bf16.xpose.msra.mxu0 0
      %1118 = vmatprep.subr.bf16.mxu0 0
      %1119 = vmatpush1.bf16.xpose.msra.mxu0 0
      %1120 = vmatprep.subr.bf16.mxu0 0
      %1121 = vmatpush1.bf16.xpose.msra.mxu0 0
      %1122 = vmatprep.subr.bf16.mxu0 0
      %1123 = vmatpush1.bf16.xpose.msra.mxu0 0
      %1124 = vmatprep.mubr.bf16.mxu0 0
      %1125 = vmatmul.mubr.bf16.gmra.mrb[0].mxu0 %v1087
      %v1126 = vpop.f32.mrb[0].mxu0
      %v1127 = vadd.f32 %v801, %v1126
      %v1128 = vpop.f32.mrb[0].mxu0
      %v1129 = vpop.f32.mrb[0].mxu0
      %v1130 = vpop.f32.mrb[0].mxu0
      %1131 = vdwg.mxu0
      %v1132 = vsel %vm811, %v1076, -inf
      %1133 = vmax.xlane.f32.xlu0 %v1132
      %v1134 = vpop.xlane.xlu0 %1133
      %v1135 = vsel %vm811, %v1127, -inf
      %1136 = vmax.xlane.f32.xlu0 %v1135
      %v1137 = vpop.xlane.xlu0 %1136
      %v1138 = vsub.f32 %v1076, %v1134
      %v1139 = vsub.f32 %v1127, %v1137
      %v1140 = vmul.f32 %v1138, 1.442695
      %v1141 = vpow.pop %v1140
      %v1142 = vmul.f32 %v1139, 1.442695
      %v1143 = vpow.pop %v1142
      %v1144 = vsel %vm811, %v1141, 0.0
      %1145 = vadd.xlane.f32.xlu0 %v1144
      %v1146 = vpop.xlane.xlu0 %1145
      %v1147 = vsel %vm811, %v1143, 0.0
      %1148 = vadd.xlane.f32.xlu0 %v1147
      %v1149 = vpop.xlane.xlu0 %1148
      %v1150 = vrcp.pop %v1146
      %v1151 = vrcp.pop %v1149
      %v1152 = vmul.f32 %v1141, %v1150
      %v1153 = vmul.f32 %v1143, %v1151
      %v1154 = vpack.c.bf16 %v1152, %v1152
      %v1155 = vpack.c.bf16 %v1153, %v1153
      %1156 = vrot.lane.b32.xlu0 %v806, 56
      %v1157 = vpop.permute.xlu0 %1156
      %v1159 = vsel %vm811, %v1154, 0
      %v1162 = vsel %vm936, %v1157, 0
      %1164 = vmatprep.subr.bf16.mxu0 0
      %1165 = vmatpush1.bf16.msra.mxu0 %v1162
      %1166 = vmatprep.subr.bf16.mxu0 0
      %1167 = vmatpush1.bf16.msra.mxu0 0
      %1168 = vmatprep.subr.bf16.mxu0 0
      %1169 = vmatpush1.bf16.msra.mxu0 0
      %1170 = vmatprep.subr.bf16.mxu0 0
      %1171 = vmatpush1.bf16.msra.mxu0 0
      %1172 = vmatprep.subr.bf16.mxu0 0
      %1173 = vmatpush1.bf16.msra.mxu0 0
      %1174 = vmatprep.subr.bf16.mxu0 0
      %1175 = vmatpush1.bf16.msra.mxu0 0
      %1176 = vmatprep.subr.bf16.mxu0 0
      %1177 = vmatpush1.bf16.msra.mxu0 0
      %1178 = vmatprep.subr.bf16.mxu0 0
      %1179 = vmatpush1.bf16.msra.mxu0 0
      %1180 = vmatprep.subr.bf16.mxu0 0
      %1181 = vmatpush1.bf16.msra.mxu0 0
      %1182 = vmatprep.subr.bf16.mxu0 0
      %1183 = vmatpush1.bf16.msra.mxu0 0
      %1184 = vmatprep.subr.bf16.mxu0 0
      %1185 = vmatpush1.bf16.msra.mxu0 0
      %1186 = vmatprep.subr.bf16.mxu0 0
      %1187 = vmatpush1.bf16.msra.mxu0 0
      %1188 = vmatprep.subr.bf16.mxu0 0
      %1189 = vmatpush1.bf16.msra.mxu0 0
      %1190 = vmatprep.subr.bf16.mxu0 0
      %1191 = vmatpush1.bf16.msra.mxu0 0
      %1192 = vmatprep.subr.bf16.mxu0 0
      %1193 = vmatpush1.bf16.msra.mxu0 0
      %1194 = vmatprep.subr.bf16.mxu0 0
      %1195 = vmatpush1.bf16.msra.mxu0 0
      %1196 = vmatprep.mubr.bf16.mxu0 0
      %1197 = vmatmul.mubr.bf16.gmra.mrb[0].mxu0 %v1159
      %v1198 = vpop.f32.mrb[0].mxu0
      %v1199 = vadd.f32 0.0, %v1198
      %v1200 = vpop.f32.mrb[0].mxu0
      %v1201 = vpop.f32.mrb[0].mxu0
      %v1202 = vpop.f32.mrb[0].mxu0
      %1203 = vdwg.mxu0
      %1204 = vrot.lane.b32.xlu0 %v807, 56
      %v1205 = vpop.permute.xlu0 %1204
      %v1207 = vsel %vm811, %v1155, 0
      %v1210 = vsel %vm936, %v1205, 0
      %1212 = vmatprep.subr.bf16.mxu0 0
      %1213 = vmatpush1.bf16.msra.mxu0 %v1210
      %1214 = vmatprep.subr.bf16.mxu0 0
      %1215 = vmatpush1.bf16.msra.mxu0 0
      %1216 = vmatprep.subr.bf16.mxu0 0
      %1217 = vmatpush1.bf16.msra.mxu0 0
      %1218 = vmatprep.subr.bf16.mxu0 0
      %1219 = vmatpush1.bf16.msra.mxu0 0
      %1220 = vmatprep.subr.bf16.mxu0 0
      %1221 = vmatpush1.bf16.msra.mxu0 0
      %1222 = vmatprep.subr.bf16.mxu0 0
      %1223 = vmatpush1.bf16.msra.mxu0 0
      %1224 = vmatprep.subr.bf16.mxu0 0
      %1225 = vmatpush1.bf16.msra.mxu0 0
      %1226 = vmatprep.subr.bf16.mxu0 0
      %1227 = vmatpush1.bf16.msra.mxu0 0
      %1228 = vmatprep.subr.bf16.mxu0 0
      %1229 = vmatpush1.bf16.msra.mxu0 0
      %1230 = vmatprep.subr.bf16.mxu0 0
      %1231 = vmatpush1.bf16.msra.mxu0 0
      %1232 = vmatprep.subr.bf16.mxu0 0
      %1233 = vmatpush1.bf16.msra.mxu0 0
      %1234 = vmatprep.subr.bf16.mxu0 0
      %1235 = vmatpush1.bf16.msra.mxu0 0
      %1236 = vmatprep.subr.bf16.mxu0 0
      %1237 = vmatpush1.bf16.msra.mxu0 0
      %1238 = vmatprep.subr.bf16.mxu0 0
      %1239 = vmatpush1.bf16.msra.mxu0 0
      %1240 = vmatprep.subr.bf16.mxu0 0
      %1241 = vmatpush1.bf16.msra.mxu0 0
      %1242 = vmatprep.subr.bf16.mxu0 0
      %1243 = vmatpush1.bf16.msra.mxu0 0
      %1244 = vmatprep.mubr.bf16.mxu0 0
      %1245 = vmatmul.mubr.bf16.gmra.mrb[0].mxu0 %v1207
      %v1246 = vpop.f32.mrb[0].mxu0
      %v1247 = vadd.f32 0.0, %v1246
      %v1248 = vpop.f32.mrb[0].mxu0
      %v1249 = vpop.f32.mrb[0].mxu0
      %v1250 = vpop.f32.mrb[0].mxu0
      %1251 = vdwg.mxu0
      %v1252 = vpack.c.bf16 %v1247, %v1199
      %s1253 = scalar_lea.vmem %s643, 4
      %v1254 = vld [vmem:[%s1253] sm:$0xf]
      %v1256 = vsel %vm811, %v1252, 0
      %v1259 = vsel %vm936, %v1254, 0
      %1261 = vmatprep.subr.bf16.mxu0 0
      %1262 = vmatpush1.bf16.msra.mxu0 %v1259
      %1263 = vmatprep.subr.bf16.mxu0 0
      %1264 = vmatpush1.bf16.msra.mxu0 0
      %1265 = vmatprep.subr.bf16.mxu0 0
      %1266 = vmatpush1.bf16.msra.mxu0 0
      %1267 = vmatprep.subr.bf16.mxu0 0
      %1268 = vmatpush1.bf16.msra.mxu0 0
      %1269 = vmatprep.subr.bf16.mxu0 0
      %1270 = vmatpush1.bf16.msra.mxu0 0
      %1271 = vmatprep.subr.bf16.mxu0 0
      %1272 = vmatpush1.bf16.msra.mxu0 0
      %1273 = vmatprep.subr.bf16.mxu0 0
      %1274 = vmatpush1.bf16.msra.mxu0 0
      %1275 = vmatprep.subr.bf16.mxu0 0
      %1276 = vmatpush1.bf16.msra.mxu0 0
      %1277 = vmatprep.subr.bf16.mxu0 0
      %1278 = vmatpush1.bf16.msra.mxu0 0
      %1279 = vmatprep.subr.bf16.mxu0 0
      %1280 = vmatpush1.bf16.msra.mxu0 0
      %1281 = vmatprep.subr.bf16.mxu0 0
      %1282 = vmatpush1.bf16.msra.mxu0 0
      %1283 = vmatprep.subr.bf16.mxu0 0
      %1284 = vmatpush1.bf16.msra.mxu0 0
      %1285 = vmatprep.subr.bf16.mxu0 0
      %1286 = vmatpush1.bf16.msra.mxu0 0
      %1287 = vmatprep.subr.bf16.mxu0 0
      %1288 = vmatpush1.bf16.msra.mxu0 0
      %1289 = vmatprep.subr.bf16.mxu0 0
      %1290 = vmatpush1.bf16.msra.mxu0 0
      %1291 = vmatprep.subr.bf16.mxu0 0
      %1292 = vmatpush1.bf16.msra.mxu0 0
      %1293 = vmatprep.mubr.bf16.mxu0 0
      %1294 = vmatmul.mubr.bf16.gmra.mrb[0].mxu0 %v1256
      %v1295 = vpop.f32.mrb[0].mxu0
      %v1296 = vadd.f32 0.0, %v1295
      %v1297 = vpop.f32.mrb[0].mxu0
      %v1298 = vpop.f32.mrb[0].mxu0
      %v1299 = vadd.f32 0.0, %v1298
      %v1300 = vpop.f32.mrb[0].mxu0
      %1301 = vdwg.mxu0
      %v1303 = vsel %vm811, %v1028, 0
      %v1306 = vsel %vm936, %v1029, 0
      %1308 = vmatprep.subr.bf16.mxu0 0
      %1309 = vmatpush1.bf16.msra.mxu0 %v1306
      %1310 = vmatprep.subr.bf16.mxu0 0
      %1311 = vmatpush1.bf16.msra.mxu0 0
      %1312 = vmatprep.subr.bf16.mxu0 0
      %1313 = vmatpush1.bf16.msra.mxu0 0
      %1314 = vmatprep.subr.bf16.mxu0 0
      %1315 = vmatpush1.bf16.msra.mxu0 0
      %1316 = vmatprep.subr.bf16.mxu0 0
      %1317 = vmatpush1.bf16.msra.mxu0 0
      %1318 = vmatprep.subr.bf16.mxu0 0
      %1319 = vmatpush1.bf16.msra.mxu0 0
      %1320 = vmatprep.subr.bf16.mxu0 0
      %1321 = vmatpush1.bf16.msra.mxu0 0
      %1322 = vmatprep.subr.bf16.mxu0 0
      %1323 = vmatpush1.bf16.msra.mxu0 0
      %1324 = vmatprep.subr.bf16.mxu0 0
      %1325 = vmatpush1.bf16.msra.mxu0 0
      %1326 = vmatprep.subr.bf16.mxu0 0
      %1327 = vmatpush1.bf16.msra.mxu0 0
      %1328 = vmatprep.subr.bf16.mxu0 0
      %1329 = vmatpush1.bf16.msra.mxu0 0
      %1330 = vmatprep.subr.bf16.mxu0 0
      %1331 = vmatpush1.bf16.msra.mxu0 0
      %1332 = vmatprep.subr.bf16.mxu0 0
      %1333 = vmatpush1.bf16.msra.mxu0 0
      %1334 = vmatprep.subr.bf16.mxu0 0
      %1335 = vmatpush1.bf16.msra.mxu0 0
      %1336 = vmatprep.subr.bf16.mxu0 0
      %1337 = vmatpush1.bf16.msra.mxu0 0
      %1338 = vmatprep.subr.bf16.mxu0 0
      %1339 = vmatpush1.bf16.msra.mxu0 0
      %1340 = vmatprep.mubr.bf16.mxu0 0
      %1341 = vmatmul.mubr.bf16.gmra.mrb[0].mxu0 %v1303
      %v1342 = vpop.f32.mrb[0].mxu0
      %v1343 = vadd.f32 %v1296, %v1342
      %v1344 = vpop.f32.mrb[0].mxu0
      %v1345 = vpop.f32.mrb[0].mxu0
      %v1346 = vadd.f32 %v1299, %v1345
      %v1347 = vpop.f32.mrb[0].mxu0
      %1348 = vdwg.mxu0
      %1349 = vrot.lane.b32.xlu0 %v804, 112
      %v1350 = vpop.permute.xlu0 %1349
      %1351 = vrot.lane.b32.xlu0 %v806, 80
      %v1352 = vpop.permute.xlu0 %1351
      %v1354 = vsel %vm811, %v1350, 0
      %v1357 = vsel %vm811, %v1352, 0
      %1359 = vmatprep.subr.bf16.mxu0 0
      %1360 = vmatpush1.bf16.xpose.msra.mxu0 %v1357
      %1361 = vmatprep.subr.bf16.mxu0 0
      %1362 = vmatpush1.bf16.xpose.msra.mxu0 0
      %1363 = vmatprep.subr.bf16.mxu0 0
      %1364 = vmatpush1.bf16.xpose.msra.mxu0 0
      %1365 = vmatprep.subr.bf16.mxu0 0
      %1366 = vmatpush1.bf16.xpose.msra.mxu0 0
      %1367 = vmatprep.subr.bf16.mxu0 0
      %1368 = vmatpush1.bf16.xpose.msra.mxu0 0
      %1369 = vmatprep.subr.bf16.mxu0 0
      %1370 = vmatpush1.bf16.xpose.msra.mxu0 0
      %1371 = vmatprep.subr.bf16.mxu0 0
      %1372 = vmatpush1.bf16.xpose.msra.mxu0 0
      %1373 = vmatprep.subr.bf16.mxu0 0
      %1374 = vmatpush1.bf16.xpose.msra.mxu0 0
      %1375 = vmatprep.subr.bf16.mxu0 0
      %1376 = vmatpush1.bf16.xpose.msra.mxu0 0
      %1377 = vmatprep.subr.bf16.mxu0 0
      %1378 = vmatpush1.bf16.xpose.msra.mxu0 0
      %1379 = vmatprep.subr.bf16.mxu0 0
      %1380 = vmatpush1.bf16.xpose.msra.mxu0 0
      %1381 = vmatprep.subr.bf16.mxu0 0
      %1382 = vmatpush1.bf16.xpose.msra.mxu0 0
      %1383 = vmatprep.subr.bf16.mxu0 0
      %1384 = vmatpush1.bf16.xpose.msra.mxu0 0
      %1385 = vmatprep.subr.bf16.mxu0 0
      %1386 = vmatpush1.bf16.xpose.msra.mxu0 0
      %1387 = vmatprep.subr.bf16.mxu0 0
      %1388 = vmatpush1.bf16.xpose.msra.mxu0 0
      %1389 = vmatprep.subr.bf16.mxu0 0
      %1390 = vmatpush1.bf16.xpose.msra.mxu0 0
      %1391 = vmatprep.mubr.bf16.mxu0 0
      %1392 = vmatmul.mubr.bf16.gmra.mrb[0].mxu0 %v1354
      %v1393 = vpop.f32.mrb[0].mxu0
      %v1394 = vadd.f32 %v801, %v1393
      %v1395 = vpop.f32.mrb[0].mxu0
      %v1396 = vpop.f32.mrb[0].mxu0
      %v1397 = vpop.f32.mrb[0].mxu0
      %1398 = vdwg.mxu0
      %1399 = vrot.lane.b32.xlu0 %v805, 112
      %v1400 = vpop.permute.xlu0 %1399
      %1401 = vrot.lane.b32.xlu0 %v807, 80
      %v1402 = vpop.permute.xlu0 %1401
      %v1404 = vsel %vm811, %v1400, 0
      %v1407 = vsel %vm811, %v1402, 0
      %1409 = vmatprep.subr.bf16.mxu0 0
      %1410 = vmatpush1.bf16.xpose.msra.mxu0 %v1407
      %1411 = vmatprep.subr.bf16.mxu0 0
      %1412 = vmatpush1.bf16.xpose.msra.mxu0 0
      %1413 = vmatprep.subr.bf16.mxu0 0
      %1414 = vmatpush1.bf16.xpose.msra.mxu0 0
      %1415 = vmatprep.subr.bf16.mxu0 0
      %1416 = vmatpush1.bf16.xpose.msra.mxu0 0
      %1417 = vmatprep.subr.bf16.mxu0 0
      %1418 = vmatpush1.bf16.xpose.msra.mxu0 0
      %1419 = vmatprep.subr.bf16.mxu0 0
      %1420 = vmatpush1.bf16.xpose.msra.mxu0 0
      %1421 = vmatprep.subr.bf16.mxu0 0
      %1422 = vmatpush1.bf16.xpose.msra.mxu0 0
      %1423 = vmatprep.subr.bf16.mxu0 0
      %1424 = vmatpush1.bf16.xpose.msra.mxu0 0
      %1425 = vmatprep.subr.bf16.mxu0 0
      %1426 = vmatpush1.bf16.xpose.msra.mxu0 0
      %1427 = vmatprep.subr.bf16.mxu0 0
      %1428 = vmatpush1.bf16.xpose.msra.mxu0 0
      %1429 = vmatprep.subr.bf16.mxu0 0
      %1430 = vmatpush1.bf16.xpose.msra.mxu0 0
      %1431 = vmatprep.subr.bf16.mxu0 0
      %1432 = vmatpush1.bf16.xpose.msra.mxu0 0
      %1433 = vmatprep.subr.bf16.mxu0 0
      %1434 = vmatpush1.bf16.xpose.msra.mxu0 0
      %1435 = vmatprep.subr.bf16.mxu0 0
      %1436 = vmatpush1.bf16.xpose.msra.mxu0 0
      %1437 = vmatprep.subr.bf16.mxu0 0
      %1438 = vmatpush1.bf16.xpose.msra.mxu0 0
      %1439 = vmatprep.subr.bf16.mxu0 0
      %1440 = vmatpush1.bf16.xpose.msra.mxu0 0
      %1441 = vmatprep.mubr.bf16.mxu0 0
      %1442 = vmatmul.mubr.bf16.gmra.mrb[0].mxu0 %v1404
      %v1443 = vpop.f32.mrb[0].mxu0
      %v1444 = vadd.f32 %v801, %v1443
      %v1445 = vpop.f32.mrb[0].mxu0
      %v1446 = vpop.f32.mrb[0].mxu0
      %v1447 = vpop.f32.mrb[0].mxu0
      %1448 = vdwg.mxu0
      %v1449 = vsel %vm811, %v1394, -inf
      %1450 = vmax.xlane.f32.xlu0 %v1449
      %v1451 = vpop.xlane.xlu0 %1450
      %v1452 = vsel %vm811, %v1444, -inf
      %1453 = vmax.xlane.f32.xlu0 %v1452
      %v1454 = vpop.xlane.xlu0 %1453
      %v1455 = vsub.f32 %v1394, %v1451
      %v1456 = vsub.f32 %v1444, %v1454
      %v1457 = vmul.f32 %v1455, 1.442695
      %v1458 = vpow.pop %v1457
      %v1459 = vmul.f32 %v1456, 1.442695
      %v1460 = vpow.pop %v1459
      %v1461 = vsel %vm811, %v1458, 0.0
      %1462 = vadd.xlane.f32.xlu0 %v1461
      %v1463 = vpop.xlane.xlu0 %1462
      %v1464 = vsel %vm811, %v1460, 0.0
      %1465 = vadd.xlane.f32.xlu0 %v1464
      %v1466 = vpop.xlane.xlu0 %1465
      %v1467 = vrcp.pop %v1463
      %v1468 = vrcp.pop %v1466
      %v1469 = vmul.f32 %v1458, %v1467
      %v1470 = vmul.f32 %v1460, %v1468
      %v1471 = vpack.c.bf16 %v1469, %v1469
      %v1472 = vpack.c.bf16 %v1470, %v1470
      %1473 = vrot.lane.b32.xlu0 %v806, 48
      %v1474 = vpop.permute.xlu0 %1473
      %v1476 = vsel %vm811, %v1471, 0
      %v1479 = vsel %vm936, %v1474, 0
      %1481 = vmatprep.subr.bf16.mxu0 0
      %1482 = vmatpush1.bf16.msra.mxu0 %v1479
      %1483 = vmatprep.subr.bf16.mxu0 0
      %1484 = vmatpush1.bf16.msra.mxu0 0
      %1485 = vmatprep.subr.bf16.mxu0 0
      %1486 = vmatpush1.bf16.msra.mxu0 0
      %1487 = vmatprep.subr.bf16.mxu0 0
      %1488 = vmatpush1.bf16.msra.mxu0 0
      %1489 = vmatprep.subr.bf16.mxu0 0
      %1490 = vmatpush1.bf16.msra.mxu0 0
      %1491 = vmatprep.subr.bf16.mxu0 0
      %1492 = vmatpush1.bf16.msra.mxu0 0
      %1493 = vmatprep.subr.bf16.mxu0 0
      %1494 = vmatpush1.bf16.msra.mxu0 0
      %1495 = vmatprep.subr.bf16.mxu0 0
      %1496 = vmatpush1.bf16.msra.mxu0 0
      %1497 = vmatprep.subr.bf16.mxu0 0
      %1498 = vmatpush1.bf16.msra.mxu0 0
      %1499 = vmatprep.subr.bf16.mxu0 0
      %1500 = vmatpush1.bf16.msra.mxu0 0
      %1501 = vmatprep.subr.bf16.mxu0 0
      %1502 = vmatpush1.bf16.msra.mxu0 0
      %1503 = vmatprep.subr.bf16.mxu0 0
      %1504 = vmatpush1.bf16.msra.mxu0 0
      %1505 = vmatprep.subr.bf16.mxu0 0
      %1506 = vmatpush1.bf16.msra.mxu0 0
      %1507 = vmatprep.subr.bf16.mxu0 0
      %1508 = vmatpush1.bf16.msra.mxu0 0
      %1509 = vmatprep.subr.bf16.mxu0 0
      %1510 = vmatpush1.bf16.msra.mxu0 0
      %1511 = vmatprep.subr.bf16.mxu0 0
      %1512 = vmatpush1.bf16.msra.mxu0 0
      %1513 = vmatprep.mubr.bf16.mxu0 0
      %1514 = vmatmul.mubr.bf16.gmra.mrb[0].mxu0 %v1476
      %v1515 = vpop.f32.mrb[0].mxu0
      %v1516 = vadd.f32 0.0, %v1515
      %v1517 = vpop.f32.mrb[0].mxu0
      %v1518 = vpop.f32.mrb[0].mxu0
      %v1519 = vpop.f32.mrb[0].mxu0
      %1520 = vdwg.mxu0
      %1521 = vrot.lane.b32.xlu0 %v807, 48
      %v1522 = vpop.permute.xlu0 %1521
      %v1524 = vsel %vm811, %v1472, 0
      %v1527 = vsel %vm936, %v1522, 0
      %1529 = vmatprep.subr.bf16.mxu0 0
      %1530 = vmatpush1.bf16.msra.mxu0 %v1527
      %1531 = vmatprep.subr.bf16.mxu0 0
      %1532 = vmatpush1.bf16.msra.mxu0 0
      %1533 = vmatprep.subr.bf16.mxu0 0
      %1534 = vmatpush1.bf16.msra.mxu0 0
      %1535 = vmatprep.subr.bf16.mxu0 0
      %1536 = vmatpush1.bf16.msra.mxu0 0
      %1537 = vmatprep.subr.bf16.mxu0 0
      %1538 = vmatpush1.bf16.msra.mxu0 0
      %1539 = vmatprep.subr.bf16.mxu0 0
      %1540 = vmatpush1.bf16.msra.mxu0 0
      %1541 = vmatprep.subr.bf16.mxu0 0
      %1542 = vmatpush1.bf16.msra.mxu0 0
      %1543 = vmatprep.subr.bf16.mxu0 0
      %1544 = vmatpush1.bf16.msra.mxu0 0
      %1545 = vmatprep.subr.bf16.mxu0 0
      %1546 = vmatpush1.bf16.msra.mxu0 0
      %1547 = vmatprep.subr.bf16.mxu0 0
      %1548 = vmatpush1.bf16.msra.mxu0 0
      %1549 = vmatprep.subr.bf16.mxu0 0
      %1550 = vmatpush1.bf16.msra.mxu0 0
      %1551 = vmatprep.subr.bf16.mxu0 0
      %1552 = vmatpush1.bf16.msra.mxu0 0
      %1553 = vmatprep.subr.bf16.mxu0 0
      %1554 = vmatpush1.bf16.msra.mxu0 0
      %1555 = vmatprep.subr.bf16.mxu0 0
      %1556 = vmatpush1.bf16.msra.mxu0 0
      %1557 = vmatprep.subr.bf16.mxu0 0
      %1558 = vmatpush1.bf16.msra.mxu0 0
      %1559 = vmatprep.subr.bf16.mxu0 0
      %1560 = vmatpush1.bf16.msra.mxu0 0
      %1561 = vmatprep.mubr.bf16.mxu0 0
      %1562 = vmatmul.mubr.bf16.gmra.mrb[0].mxu0 %v1524
      %v1563 = vpop.f32.mrb[0].mxu0
      %v1564 = vadd.f32 0.0, %v1563
      %v1565 = vpop.f32.mrb[0].mxu0
      %v1566 = vpop.f32.mrb[0].mxu0
      %v1567 = vpop.f32.mrb[0].mxu0
      %1568 = vdwg.mxu0
      %v1569 = vpack.c.bf16 %v1564, %v1516
      %s1570 = scalar_lea.vmem %s643, 8
      %v1571 = vld [vmem:[%s1570] sm:$0xf]
      %v1573 = vsel %vm811, %v1569, 0
      %v1576 = vsel %vm936, %v1571, 0
      %1578 = vmatprep.subr.bf16.mxu0 0
      %1579 = vmatpush1.bf16.msra.mxu0 %v1576
      %1580 = vmatprep.subr.bf16.mxu0 0
      %1581 = vmatpush1.bf16.msra.mxu0 0
      %1582 = vmatprep.subr.bf16.mxu0 0
      %1583 = vmatpush1.bf16.msra.mxu0 0
      %1584 = vmatprep.subr.bf16.mxu0 0
      %1585 = vmatpush1.bf16.msra.mxu0 0
      %1586 = vmatprep.subr.bf16.mxu0 0
      %1587 = vmatpush1.bf16.msra.mxu0 0
      %1588 = vmatprep.subr.bf16.mxu0 0
      %1589 = vmatpush1.bf16.msra.mxu0 0
      %1590 = vmatprep.subr.bf16.mxu0 0
      %1591 = vmatpush1.bf16.msra.mxu0 0
      %1592 = vmatprep.subr.bf16.mxu0 0
      %1593 = vmatpush1.bf16.msra.mxu0 0
      %1594 = vmatprep.subr.bf16.mxu0 0
      %1595 = vmatpush1.bf16.msra.mxu0 0
      %1596 = vmatprep.subr.bf16.mxu0 0
      %1597 = vmatpush1.bf16.msra.mxu0 0
      %1598 = vmatprep.subr.bf16.mxu0 0
      %1599 = vmatpush1.bf16.msra.mxu0 0
      %1600 = vmatprep.subr.bf16.mxu0 0
      %1601 = vmatpush1.bf16.msra.mxu0 0
      %1602 = vmatprep.subr.bf16.mxu0 0
      %1603 = vmatpush1.bf16.msra.mxu0 0
      %1604 = vmatprep.subr.bf16.mxu0 0
      %1605 = vmatpush1.bf16.msra.mxu0 0
      %1606 = vmatprep.subr.bf16.mxu0 0
      %1607 = vmatpush1.bf16.msra.mxu0 0
      %1608 = vmatprep.subr.bf16.mxu0 0
      %1609 = vmatpush1.bf16.msra.mxu0 0
      %1610 = vmatprep.mubr.bf16.mxu0 0
      %1611 = vmatmul.mubr.bf16.gmra.mrb[0].mxu0 %v1573
      %v1612 = vpop.f32.mrb[0].mxu0
      %v1613 = vadd.f32 0.0, %v1612
      %v1614 = vpop.f32.mrb[0].mxu0
      %v1615 = vpop.f32.mrb[0].mxu0
      %v1616 = vadd.f32 0.0, %v1615
      %v1617 = vpop.f32.mrb[0].mxu0
      %1618 = vdwg.mxu0
      %v1619 = vadd.f32 %v1343, %v1613
      %v1620 = vadd.f32 %v1346, %v1616
      %1621 = vrot.lane.b32.xlu0 %v804, 104
      %v1622 = vpop.permute.xlu0 %1621
      %1623 = vrot.lane.b32.xlu0 %v806, 72
      %v1624 = vpop.permute.xlu0 %1623
      %v1626 = vsel %vm811, %v1622, 0
      %v1629 = vsel %vm811, %v1624, 0
      %1631 = vmatprep.subr.bf16.mxu0 0
      %1632 = vmatpush1.bf16.xpose.msra.mxu0 %v1629
      %1633 = vmatprep.subr.bf16.mxu0 0
      %1634 = vmatpush1.bf16.xpose.msra.mxu0 0
      %1635 = vmatprep.subr.bf16.mxu0 0
      %1636 = vmatpush1.bf16.xpose.msra.mxu0 0
      %1637 = vmatprep.subr.bf16.mxu0 0
      %1638 = vmatpush1.bf16.xpose.msra.mxu0 0
      %1639 = vmatprep.subr.bf16.mxu0 0
      %1640 = vmatpush1.bf16.xpose.msra.mxu0 0
      %1641 = vmatprep.subr.bf16.mxu0 0
      %1642 = vmatpush1.bf16.xpose.msra.mxu0 0
      %1643 = vmatprep.subr.bf16.mxu0 0
      %1644 = vmatpush1.bf16.xpose.msra.mxu0 0
      %1645 = vmatprep.subr.bf16.mxu0 0
      %1646 = vmatpush1.bf16.xpose.msra.mxu0 0
      %1647 = vmatprep.subr.bf16.mxu0 0
      %1648 = vmatpush1.bf16.xpose.msra.mxu0 0
      %1649 = vmatprep.subr.bf16.mxu0 0
      %1650 = vmatpush1.bf16.xpose.msra.mxu0 0
      %1651 = vmatprep.subr.bf16.mxu0 0
      %1652 = vmatpush1.bf16.xpose.msra.mxu0 0
      %1653 = vmatprep.subr.bf16.mxu0 0
      %1654 = vmatpush1.bf16.xpose.msra.mxu0 0
      %1655 = vmatprep.subr.bf16.mxu0 0
      %1656 = vmatpush1.bf16.xpose.msra.mxu0 0
      %1657 = vmatprep.subr.bf16.mxu0 0
      %1658 = vmatpush1.bf16.xpose.msra.mxu0 0
      %1659 = vmatprep.subr.bf16.mxu0 0
      %1660 = vmatpush1.bf16.xpose.msra.mxu0 0
      %1661 = vmatprep.subr.bf16.mxu0 0
      %1662 = vmatpush1.bf16.xpose.msra.mxu0 0
      %1663 = vmatprep.mubr.bf16.mxu0 0
      %1664 = vmatmul.mubr.bf16.gmra.mrb[0].mxu0 %v1626
      %v1665 = vpop.f32.mrb[0].mxu0
      %v1666 = vadd.f32 %v801, %v1665
      %v1667 = vpop.f32.mrb[0].mxu0
      %v1668 = vpop.f32.mrb[0].mxu0
      %v1669 = vpop.f32.mrb[0].mxu0
      %1670 = vdwg.mxu0
      %1671 = vrot.lane.b32.xlu0 %v805, 104
      %v1672 = vpop.permute.xlu0 %1671
      %1673 = vrot.lane.b32.xlu0 %v807, 72
      %v1674 = vpop.permute.xlu0 %1673
      %v1676 = vsel %vm811, %v1672, 0
      %v1679 = vsel %vm811, %v1674, 0
      %1681 = vmatprep.subr.bf16.mxu0 0
      %1682 = vmatpush1.bf16.xpose.msra.mxu0 %v1679
      %1683 = vmatprep.subr.bf16.mxu0 0
      %1684 = vmatpush1.bf16.xpose.msra.mxu0 0
      %1685 = vmatprep.subr.bf16.mxu0 0
      %1686 = vmatpush1.bf16.xpose.msra.mxu0 0
      %1687 = vmatprep.subr.bf16.mxu0 0
      %1688 = vmatpush1.bf16.xpose.msra.mxu0 0
      %1689 = vmatprep.subr.bf16.mxu0 0
      %1690 = vmatpush1.bf16.xpose.msra.mxu0 0
      %1691 = vmatprep.subr.bf16.mxu0 0
      %1692 = vmatpush1.bf16.xpose.msra.mxu0 0
      %1693 = vmatprep.subr.bf16.mxu0 0
      %1694 = vmatpush1.bf16.xpose.msra.mxu0 0
      %1695 = vmatprep.subr.bf16.mxu0 0
      %1696 = vmatpush1.bf16.xpose.msra.mxu0 0
      %1697 = vmatprep.subr.bf16.mxu0 0
      %1698 = vmatpush1.bf16.xpose.msra.mxu0 0
      %1699 = vmatprep.subr.bf16.mxu0 0
      %1700 = vmatpush1.bf16.xpose.msra.mxu0 0
      %1701 = vmatprep.subr.bf16.mxu0 0
      %1702 = vmatpush1.bf16.xpose.msra.mxu0 0
      %1703 = vmatprep.subr.bf16.mxu0 0
      %1704 = vmatpush1.bf16.xpose.msra.mxu0 0
      %1705 = vmatprep.subr.bf16.mxu0 0
      %1706 = vmatpush1.bf16.xpose.msra.mxu0 0
      %1707 = vmatprep.subr.bf16.mxu0 0
      %1708 = vmatpush1.bf16.xpose.msra.mxu0 0
      %1709 = vmatprep.subr.bf16.mxu0 0
      %1710 = vmatpush1.bf16.xpose.msra.mxu0 0
      %1711 = vmatprep.subr.bf16.mxu0 0
      %1712 = vmatpush1.bf16.xpose.msra.mxu0 0
      %1713 = vmatprep.mubr.bf16.mxu0 0
      %1714 = vmatmul.mubr.bf16.gmra.mrb[0].mxu0 %v1676
      %v1715 = vpop.f32.mrb[0].mxu0
      %v1716 = vadd.f32 %v801, %v1715
      %v1717 = vpop.f32.mrb[0].mxu0
      %v1718 = vpop.f32.mrb[0].mxu0
      %v1719 = vpop.f32.mrb[0].mxu0
      %1720 = vdwg.mxu0
      %v1721 = vsel %vm811, %v1666, -inf
      %1722 = vmax.xlane.f32.xlu0 %v1721
      %v1723 = vpop.xlane.xlu0 %1722
      %v1724 = vsel %vm811, %v1716, -inf
      %1725 = vmax.xlane.f32.xlu0 %v1724
      %v1726 = vpop.xlane.xlu0 %1725
      %v1727 = vsub.f32 %v1666, %v1723
      %v1728 = vsub.f32 %v1716, %v1726
      %v1729 = vmul.f32 %v1727, 1.442695
      %v1730 = vpow.pop %v1729
      %v1731 = vmul.f32 %v1728, 1.442695
      %v1732 = vpow.pop %v1731
      %v1733 = vsel %vm811, %v1730, 0.0
      %1734 = vadd.xlane.f32.xlu0 %v1733
      %v1735 = vpop.xlane.xlu0 %1734
      %v1736 = vsel %vm811, %v1732, 0.0
      %1737 = vadd.xlane.f32.xlu0 %v1736
      %v1738 = vpop.xlane.xlu0 %1737
      %v1739 = vrcp.pop %v1735
      %v1740 = vrcp.pop %v1738
      %v1741 = vmul.f32 %v1730, %v1739
      %v1742 = vmul.f32 %v1732, %v1740
      %v1743 = vpack.c.bf16 %v1741, %v1741
      %v1744 = vpack.c.bf16 %v1742, %v1742
      %1745 = vrot.lane.b32.xlu0 %v806, 40
      %v1746 = vpop.permute.xlu0 %1745
      %v1748 = vsel %vm811, %v1743, 0
      %v1751 = vsel %vm936, %v1746, 0
      %1753 = vmatprep.subr.bf16.mxu0 0
      %1754 = vmatpush1.bf16.msra.mxu0 %v1751
      %1755 = vmatprep.subr.bf16.mxu0 0
      %1756 = vmatpush1.bf16.msra.mxu0 0
      %1757 = vmatprep.subr.bf16.mxu0 0
      %1758 = vmatpush1.bf16.msra.mxu0 0
      %1759 = vmatprep.subr.bf16.mxu0 0
      %1760 = vmatpush1.bf16.msra.mxu0 0
      %1761 = vmatprep.subr.bf16.mxu0 0
      %1762 = vmatpush1.bf16.msra.mxu0 0
      %1763 = vmatprep.subr.bf16.mxu0 0
      %1764 = vmatpush1.bf16.msra.mxu0 0
      %1765 = vmatprep.subr.bf16.mxu0 0
      %1766 = vmatpush1.bf16.msra.mxu0 0
      %1767 = vmatprep.subr.bf16.mxu0 0
      %1768 = vmatpush1.bf16.msra.mxu0 0
      %1769 = vmatprep.subr.bf16.mxu0 0
      %1770 = vmatpush1.bf16.msra.mxu0 0
      %1771 = vmatprep.subr.bf16.mxu0 0
      %1772 = vmatpush1.bf16.msra.mxu0 0
      %1773 = vmatprep.subr.bf16.mxu0 0
      %1774 = vmatpush1.bf16.msra.mxu0 0
      %1775 = vmatprep.subr.bf16.mxu0 0
      %1776 = vmatpush1.bf16.msra.mxu0 0
      %1777 = vmatprep.subr.bf16.mxu0 0
      %1778 = vmatpush1.bf16.msra.mxu0 0
      %1779 = vmatprep.subr.bf16.mxu0 0
      %1780 = vmatpush1.bf16.msra.mxu0 0
      %1781 = vmatprep.subr.bf16.mxu0 0
      %1782 = vmatpush1.bf16.msra.mxu0 0
      %1783 = vmatprep.subr.bf16.mxu0 0
      %1784 = vmatpush1.bf16.msra.mxu0 0
      %1785 = vmatprep.mubr.bf16.mxu0 0
      %1786 = vmatmul.mubr.bf16.gmra.mrb[0].mxu0 %v1748
      %v1787 = vpop.f32.mrb[0].mxu0
      %v1788 = vadd.f32 0.0, %v1787
      %v1789 = vpop.f32.mrb[0].mxu0
      %v1790 = vpop.f32.mrb[0].mxu0
      %v1791 = vpop.f32.mrb[0].mxu0
      %1792 = vdwg.mxu0
      %1793 = vrot.lane.b32.xlu0 %v807, 40
      %v1794 = vpop.permute.xlu0 %1793
      %v1796 = vsel %vm811, %v1744, 0
      %v1799 = vsel %vm936, %v1794, 0
      %1801 = vmatprep.subr.bf16.mxu0 0
      %1802 = vmatpush1.bf16.msra.mxu0 %v1799
      %1803 = vmatprep.subr.bf16.mxu0 0
      %1804 = vmatpush1.bf16.msra.mxu0 0
      %1805 = vmatprep.subr.bf16.mxu0 0
      %1806 = vmatpush1.bf16.msra.mxu0 0
      %1807 = vmatprep.subr.bf16.mxu0 0
      %1808 = vmatpush1.bf16.msra.mxu0 0
      %1809 = vmatprep.subr.bf16.mxu0 0
      %1810 = vmatpush1.bf16.msra.mxu0 0
      %1811 = vmatprep.subr.bf16.mxu0 0
      %1812 = vmatpush1.bf16.msra.mxu0 0
      %1813 = vmatprep.subr.bf16.mxu0 0
      %1814 = vmatpush1.bf16.msra.mxu0 0
      %1815 = vmatprep.subr.bf16.mxu0 0
      %1816 = vmatpush1.bf16.msra.mxu0 0
      %1817 = vmatprep.subr.bf16.mxu0 0
      %1818 = vmatpush1.bf16.msra.mxu0 0
      %1819 = vmatprep.subr.bf16.mxu0 0
      %1820 = vmatpush1.bf16.msra.mxu0 0
      %1821 = vmatprep.subr.bf16.mxu0 0
      %1822 = vmatpush1.bf16.msra.mxu0 0
      %1823 = vmatprep.subr.bf16.mxu0 0
      %1824 = vmatpush1.bf16.msra.mxu0 0
      %1825 = vmatprep.subr.bf16.mxu0 0
      %1826 = vmatpush1.bf16.msra.mxu0 0
      %1827 = vmatprep.subr.bf16.mxu0 0
      %1828 = vmatpush1.bf16.msra.mxu0 0
      %1829 = vmatprep.subr.bf16.mxu0 0
      %1830 = vmatpush1.bf16.msra.mxu0 0
      %1831 = vmatprep.subr.bf16.mxu0 0
      %1832 = vmatpush1.bf16.msra.mxu0 0
      %1833 = vmatprep.mubr.bf16.mxu0 0
      %1834 = vmatmul.mubr.bf16.gmra.mrb[0].mxu0 %v1796
      %v1835 = vpop.f32.mrb[0].mxu0
      %v1836 = vadd.f32 0.0, %v1835
      %v1837 = vpop.f32.mrb[0].mxu0
      %v1838 = vpop.f32.mrb[0].mxu0
      %v1839 = vpop.f32.mrb[0].mxu0
      %1840 = vdwg.mxu0
      %v1841 = vpack.c.bf16 %v1836, %v1788
      %s1842 = scalar_lea.vmem %s643, 12
      %v1843 = vld [vmem:[%s1842] sm:$0xf]
      %v1845 = vsel %vm811, %v1841, 0
      %v1848 = vsel %vm936, %v1843, 0
      %1850 = vmatprep.subr.bf16.mxu0 0
      %1851 = vmatpush1.bf16.msra.mxu0 %v1848
      %1852 = vmatprep.subr.bf16.mxu0 0
      %1853 = vmatpush1.bf16.msra.mxu0 0
      %1854 = vmatprep.subr.bf16.mxu0 0
      %1855 = vmatpush1.bf16.msra.mxu0 0
      %1856 = vmatprep.subr.bf16.mxu0 0
      %1857 = vmatpush1.bf16.msra.mxu0 0
      %1858 = vmatprep.subr.bf16.mxu0 0
      %1859 = vmatpush1.bf16.msra.mxu0 0
      %1860 = vmatprep.subr.bf16.mxu0 0
      %1861 = vmatpush1.bf16.msra.mxu0 0
      %1862 = vmatprep.subr.bf16.mxu0 0
      %1863 = vmatpush1.bf16.msra.mxu0 0
      %1864 = vmatprep.subr.bf16.mxu0 0
      %1865 = vmatpush1.bf16.msra.mxu0 0
      %1866 = vmatprep.subr.bf16.mxu0 0
      %1867 = vmatpush1.bf16.msra.mxu0 0
      %1868 = vmatprep.subr.bf16.mxu0 0
      %1869 = vmatpush1.bf16.msra.mxu0 0
      %1870 = vmatprep.subr.bf16.mxu0 0
      %1871 = vmatpush1.bf16.msra.mxu0 0
      %1872 = vmatprep.subr.bf16.mxu0 0
      %1873 = vmatpush1.bf16.msra.mxu0 0
      %1874 = vmatprep.subr.bf16.mxu0 0
      %1875 = vmatpush1.bf16.msra.mxu0 0
      %1876 = vmatprep.subr.bf16.mxu0 0
      %1877 = vmatpush1.bf16.msra.mxu0 0
      %1878 = vmatprep.subr.bf16.mxu0 0
      %1879 = vmatpush1.bf16.msra.mxu0 0
      %1880 = vmatprep.subr.bf16.mxu0 0
      %1881 = vmatpush1.bf16.msra.mxu0 0
      %1882 = vmatprep.mubr.bf16.mxu0 0
      %1883 = vmatmul.mubr.bf16.gmra.mrb[0].mxu0 %v1845
      %v1884 = vpop.f32.mrb[0].mxu0
      %v1885 = vadd.f32 0.0, %v1884
      %v1886 = vpop.f32.mrb[0].mxu0
      %v1887 = vpop.f32.mrb[0].mxu0
      %v1888 = vadd.f32 0.0, %v1887
      %v1889 = vpop.f32.mrb[0].mxu0
      %1890 = vdwg.mxu0
      %v1891 = vadd.f32 %v1619, %v1885
      %v1892 = vadd.f32 %v1620, %v1888
      %v1893 = vld [vmem:[%s646] sm:$0x1]
      %v1895 = vlaneseq
      %v1896 = vshrl.u32 %v1895, 7
      %v1897 = vsub.s32 0, %v1896
      %v1898 = vrot.slane %v1893, %v1897
      %v1900 = vadd.f32 %v1891, %v1898
      %v1901 = vadd.f32 %v1892, %v1898
      %v1902 = vadd.f32 %v731, %v1900
      %v1903 = vadd.f32 %v732, %v1901
      %v1904 = vld [vmem:[%s649] sm:$0x1]
      %v1905 = vld [vmem:[%s652] sm:$0x1]
      %v1906 = vsel %vm689, %v1902, 0.0
      %1907 = vadd.xlane.f32.xlu0 %v1906
      %v1908 = vpop.xlane.xlu0 %1907
      %v1909 = vsel %vm689, %v1903, 0.0
      %1910 = vadd.xlane.f32.xlu0 %v1909
      %v1911 = vpop.xlane.xlu0 %1910
      %v1912 = vmul.f32 %v1908, %v696
      %v1913 = vmul.f32 %v1911, %v696
      %v1914 = vsub.f32 %v1902, %v1912
      %v1915 = vsub.f32 %v1903, %v1913
      %v1916 = vmul.f32 %v1914, %v1914
      %v1917 = vmul.f32 %v1915, %v1915
      %v1918 = vsel %vm689, %v1916, 0.0
      %1919 = vadd.xlane.f32.xlu0 %v1918
      %v1920 = vpop.xlane.xlu0 %1919
      %v1921 = vsel %vm689, %v1917, 0.0
      %1922 = vadd.xlane.f32.xlu0 %v1921
      %v1923 = vpop.xlane.xlu0 %1922
      %v1924 = vmul.f32 %v1920, %v696
      %v1925 = vmul.f32 %v1923, %v696
      %v1926 = vadd.f32 %v1924, 1e-05
      %v1927 = vadd.f32 %v1925, 1e-05
      %v1928 = vrsqrt.pop %v1926
      %v1929 = vrsqrt.pop %v1927
      %v1930 = vmul.f32 %v1914, %v1928
      %v1931 = vmul.f32 %v1915, %v1929
      %v1933 = vlaneseq
      %v1934 = vshrl.u32 %v1933, 7
      %v1935 = vsub.s32 0, %v1934
      %v1936 = vrot.slane %v1904, %v1935
      %v1938 = vmul.f32 %v1930, %v1936
      %v1939 = vmul.f32 %v1931, %v1936
      %v1941 = vlaneseq
      %v1942 = vshrl.u32 %v1941, 7
      %v1943 = vsub.s32 0, %v1942
      %v1944 = vrot.slane %v1905, %v1943
      %v1946 = vadd.f32 %v1938, %v1944
      %v1947 = vadd.f32 %v1939, %v1944
      %v1948 = vpack.c.bf16 %v1947, %v1946
      %v1949 = vld [vmem:[%s657] sm:$0xf]
      %v1950 = vld [vmem:[%s657 + $0x4] sm:$0xf]
      %v1951 = vld [vmem:[%s657 + $0x8] sm:$0xf]
      %v1952 = vld [vmem:[%s657 + $0xc] sm:$0xf]
      %v1953 = vld [vmem:[%s660] sm:$0x1]
      %v1955 = vlaneseq
      %v1956 = vshrl.u32 %v1955, 7
      %v1957 = vsub.s32 0, %v1956
      %v1958 = vrot.slane %v1953, %v1957
      %v1964 = vunpack.c.l.b16 %v1949
      %v1965 = vunpack.c.l.b16 %v1950
      %v1966 = vunpack.c.l.b16 %v1951
      %v1967 = vunpack.c.l.b16 %v1952
      %v1968 = vpack.c.b16 %v1965, %v1964
      %v1969 = vpack.c.b16 %v1967, %v1966
      %v1973 = vsel %vm689, %v1948, 0
      %1975 = vmatprep.subr.bf16.mxu0 0
      %1976 = vmatpush1.bf16.msra.mxu0 %v1968
      %1977 = vmatprep.subr.bf16.mxu0 0
      %1978 = vmatpush1.bf16.msra.mxu0 %v1969
      %1979 = vmatprep.subr.bf16.mxu0 0
      %1980 = vmatpush1.bf16.msra.mxu0 0
      %1981 = vmatprep.subr.bf16.mxu0 0
      %1982 = vmatpush1.bf16.msra.mxu0 0
      %1983 = vmatprep.subr.bf16.mxu0 0
      %1984 = vmatpush1.bf16.msra.mxu0 0
      %1985 = vmatprep.subr.bf16.mxu0 0
      %1986 = vmatpush1.bf16.msra.mxu0 0
      %1987 = vmatprep.subr.bf16.mxu0 0
      %1988 = vmatpush1.bf16.msra.mxu0 0
      %1989 = vmatprep.subr.bf16.mxu0 0
      %1990 = vmatpush1.bf16.msra.mxu0 0
      %1991 = vmatprep.subr.bf16.mxu0 0
      %1992 = vmatpush1.bf16.msra.mxu0 0
      %1993 = vmatprep.subr.bf16.mxu0 0
      %1994 = vmatpush1.bf16.msra.mxu0 0
      %1995 = vmatprep.subr.bf16.mxu0 0
      %1996 = vmatpush1.bf16.msra.mxu0 0
      %1997 = vmatprep.subr.bf16.mxu0 0
      %1998 = vmatpush1.bf16.msra.mxu0 0
      %1999 = vmatprep.subr.bf16.mxu0 0
      %2000 = vmatpush1.bf16.msra.mxu0 0
      %2001 = vmatprep.subr.bf16.mxu0 0
      %2002 = vmatpush1.bf16.msra.mxu0 0
      %2003 = vmatprep.subr.bf16.mxu0 0
      %2004 = vmatpush1.bf16.msra.mxu0 0
      %2005 = vmatprep.subr.bf16.mxu0 0
      %2006 = vmatpush1.bf16.msra.mxu0 0
      %2007 = vmatprep.mubr.bf16.mxu0 0
      %2008 = vmatmul.mubr.bf16.gmra.mrb[0].mxu0 %v1973
      %v2009 = vpop.f32.mrb[0].mxu0
      %v2010 = vadd.f32 %v1958, %v2009
      %v2011 = vpop.f32.mrb[0].mxu0
      %v2012 = vpop.f32.mrb[0].mxu0
      %v2013 = vadd.f32 %v1958, %v2012
      %v2014 = vpop.f32.mrb[0].mxu0
      %2015 = vdwg.mxu0
      %v2016 = vmul.f32 %v2010, 0.5
      %v2017 = vmul.f32 %v2013, 0.5
      %v2018 = vmul.f32 %v2010, 0.70710677
      %v2019 = vmul.f32 %v2013, 0.70710677
      %v2020 = vand.u32 2147483647, %v2018
      %v2021 = vand.u32 2147483647, %v2019
      %v2022 = vmul.f32 %v2020, 0.3275911
      %v2023 = vmul.f32 %v2021, 0.3275911
      %v2024 = vadd.f32 %v2022, 1.0
      %v2025 = vadd.f32 %v2023, 1.0
      %v2026 = vrcp.pop %v2024
      %v2027 = vmul.f32 1.0, %v2026
      %v2028 = vrcp.pop %v2025
      %v2029 = vmul.f32 1.0, %v2028
      %v2030 = vmul.f32 %v2027, 1.0614054
      %v2031 = vmul.f32 %v2029, 1.0614054
      %v2032 = vadd.f32 %v2030, -1.4531521
      %v2033 = vadd.f32 %v2031, -1.4531521
      %v2034 = vmul.f32 %v2032, %v2027
      %v2035 = vmul.f32 %v2033, %v2029
      %v2036 = vadd.f32 %v2034, 1.4214138
      %v2037 = vadd.f32 %v2035, 1.4214138
      %v2038 = vmul.f32 %v2036, %v2027
      %v2039 = vmul.f32 %v2037, %v2029
      %v2040 = vadd.f32 %v2038, -0.28449672
      %v2041 = vadd.f32 %v2039, -0.28449672
      %v2042 = vmul.f32 %v2040, %v2027
      %v2043 = vmul.f32 %v2041, %v2029
      %v2044 = vadd.f32 %v2042, 0.2548296
      %v2045 = vadd.f32 %v2043, 0.2548296
      %v2046 = vmul.f32 %v2044, %v2027
      %v2047 = vmul.f32 %v2045, %v2029
      %v2048 = vsub.f32 0.0, %v2020
      %v2049 = vsub.f32 0.0, %v2021
      %v2050 = vmul.f32 %v2048, %v2020
      %v2051 = vmul.f32 %v2049, %v2021
      %v2052 = vmul.f32 %v2050, 1.442695
      %v2053 = vpow.pop %v2052
      %v2054 = vmul.f32 %v2051, 1.442695
      %v2055 = vpow.pop %v2054
      %v2056 = vmul.f32 %v2046, %v2053
      %v2057 = vmul.f32 %v2047, %v2055
      %v2058 = vsub.f32 1.0, %v2056
      %v2059 = vsub.f32 1.0, %v2057
      %vm2060 = vcmp.lt.f32.partialorder %v2018, 0.0
      %vm2061 = vcmp.lt.f32.partialorder %v2019, 0.0
      %v2062 = vsub.f32 0.0, %v2058
      %v2063 = vsub.f32 0.0, %v2059
      %v2064 = vsel %vm2060, %v2062, %v2058
      %v2065 = vsel %vm2061, %v2063, %v2059
      %v2066 = vadd.f32 %v2064, 1.0
      %v2067 = vadd.f32 %v2065, 1.0
      %v2068 = vmul.f32 %v2016, %v2066
      %v2069 = vmul.f32 %v2017, %v2067
      %v2070 = vpack.c.bf16 %v2069, %v2068
      %v2071 = vld [vmem:[%s665] sm:$0xf]
      %v2072 = vld [vmem:[%s665 + $0x4] sm:$0xf]
      %v2073 = vld [vmem:[%s665 + $0x8] sm:$0xf]
      %v2074 = vld [vmem:[%s665 + $0xc] sm:$0xf]
      %v2075 = vld [vmem:[%s665 + $0x10] sm:$0xf]
      %v2076 = vld [vmem:[%s665 + $0x14] sm:$0xf]
      %v2077 = vld [vmem:[%s665 + $0x18] sm:$0xf]
      %v2078 = vld [vmem:[%s665 + $0x1c] sm:$0xf]
      %v2079 = vld [vmem:[%s665 + $0x20] sm:$0xf]
      %v2080 = vld [vmem:[%s665 + $0x24] sm:$0xf]
      %v2081 = vld [vmem:[%s665 + $0x28] sm:$0xf]
      %v2082 = vld [vmem:[%s665 + $0x2c] sm:$0xf]
      %v2083 = vld [vmem:[%s665 + $0x30] sm:$0xf]
      %v2084 = vld [vmem:[%s665 + $0x34] sm:$0xf]
      %v2085 = vld [vmem:[%s665 + $0x38] sm:$0xf]
      %v2086 = vld [vmem:[%s665 + $0x3c] sm:$0xf]
      %v2087 = vld [vmem:[%s668] sm:$0x1]
      %v2089 = vlaneseq
      %v2090 = vshrl.u32 %v2089, 7
      %v2091 = vsub.s32 0, %v2090
      %v2092 = vrot.slane %v2087, %v2091
      %v2110 = vunpack.c.l.b16 %v2071
      %v2111 = vunpack.c.l.b16 %v2072
      %v2112 = vunpack.c.l.b16 %v2073
      %v2113 = vunpack.c.l.b16 %v2074
      %v2114 = vunpack.c.l.b16 %v2075
      %v2115 = vunpack.c.l.b16 %v2076
      %v2116 = vunpack.c.l.b16 %v2077
      %v2117 = vunpack.c.l.b16 %v2078
      %v2118 = vunpack.c.l.b16 %v2079
      %v2119 = vunpack.c.l.b16 %v2080
      %v2120 = vunpack.c.l.b16 %v2081
      %v2121 = vunpack.c.l.b16 %v2082
      %v2122 = vunpack.c.l.b16 %v2083
      %v2123 = vunpack.c.l.b16 %v2084
      %v2124 = vunpack.c.l.b16 %v2085
      %v2125 = vunpack.c.l.b16 %v2086
      %v2126 = vpack.c.b16 %v2111, %v2110
      %v2127 = vpack.c.b16 %v2113, %v2112
      %v2128 = vpack.c.b16 %v2115, %v2114
      %v2129 = vpack.c.b16 %v2117, %v2116
      %v2130 = vpack.c.b16 %v2119, %v2118
      %v2131 = vpack.c.b16 %v2121, %v2120
      %v2132 = vpack.c.b16 %v2123, %v2122
      %v2133 = vpack.c.b16 %v2125, %v2124
      %2142 = vmatprep.subr.bf16.mxu0 0
      %2143 = vmatpush1.bf16.msra.mxu0 %v2126
      %2144 = vmatprep.subr.bf16.mxu0 0
      %2145 = vmatpush1.bf16.msra.mxu0 %v2127
      %2146 = vmatprep.subr.bf16.mxu0 0
      %2147 = vmatpush1.bf16.msra.mxu0 %v2128
      %2148 = vmatprep.subr.bf16.mxu0 0
      %2149 = vmatpush1.bf16.msra.mxu0 %v2129
      %2150 = vmatprep.subr.bf16.mxu0 0
      %2151 = vmatpush1.bf16.msra.mxu0 %v2130
      %2152 = vmatprep.subr.bf16.mxu0 0
      %2153 = vmatpush1.bf16.msra.mxu0 %v2131
      %2154 = vmatprep.subr.bf16.mxu0 0
      %2155 = vmatpush1.bf16.msra.mxu0 %v2132
      %2156 = vmatprep.subr.bf16.mxu0 0
      %2157 = vmatpush1.bf16.msra.mxu0 %v2133
      %2158 = vmatprep.subr.bf16.mxu0 0
      %2159 = vmatpush1.bf16.msra.mxu0 0
      %2160 = vmatprep.subr.bf16.mxu0 0
      %2161 = vmatpush1.bf16.msra.mxu0 0
      %2162 = vmatprep.subr.bf16.mxu0 0
      %2163 = vmatpush1.bf16.msra.mxu0 0
      %2164 = vmatprep.subr.bf16.mxu0 0
      %2165 = vmatpush1.bf16.msra.mxu0 0
      %2166 = vmatprep.subr.bf16.mxu0 0
      %2167 = vmatpush1.bf16.msra.mxu0 0
      %2168 = vmatprep.subr.bf16.mxu0 0
      %2169 = vmatpush1.bf16.msra.mxu0 0
      %2170 = vmatprep.subr.bf16.mxu0 0
      %2171 = vmatpush1.bf16.msra.mxu0 0
      %2172 = vmatprep.subr.bf16.mxu0 0
      %2173 = vmatpush1.bf16.msra.mxu0 0
      %2174 = vmatprep.mubr.bf16.mxu0 0
      %2175 = vmatmul.mubr.bf16.gmra.mrb[0].mxu0 %v2070
      %v2176 = vpop.f32.mrb[0].mxu0
      %v2177 = vadd.f32 %v2092, %v2176
      %v2178 = vpop.f32.mrb[0].mxu0
      %v2179 = vpop.f32.mrb[0].mxu0
      %v2180 = vadd.f32 %v2092, %v2179
      %v2181 = vpop.f32.mrb[0].mxu0
      %2182 = vdwg.mxu0
      %v2183 = vadd.f32 %v1902, %v2177
      %v2184 = vadd.f32 %v1903, %v2180
      %2185 = vst.msk [vmem:[%s673] sm:$0xff] %vm689, %v2183
      %2186 = vst.msk [vmem:[%s673 + $0x8] sm:$0xff] %vm689, %v2184
      %s2187 = smul.u32 2, %s29
      %p2188 = scmp.lt.s32.totalorder %s2187, 1
      %s2189 = scalar_select %p2188, %s2187, 1
      %s2190 = smul.addr %s2189, 8
      %s2191 = scalar_lea.vmem %s14, %s2190
      // Predicated region
      $region81: #{gpt2_pallas.2} parent=75 // pred_check
        %p2192 = pneg %p414
      $region82: #{gpt2_pallas.2} parent=75 // pred_check_branch
        %2194 = sbr.rel (%p2192) target = $region84
      $region83: #{gpt2_pallas.2} parent=75 // pred_region
        %s2195 = smul.u32 2, %s29
      $region84: #{gpt2_pallas.2} parent=75 // pred_fallthru
        _
      // Predicated region
      $region85: #{gpt2_pallas.2} parent=75 // pred_check
        %p2196 = pneg %p414
      $region86: #{gpt2_pallas.2} parent=75 // pred_check_branch
        %2198 = sbr.rel (%p2196) target = $region88
      $region87: #{gpt2_pallas.2} parent=75 // pred_region
        %s2199 = smul.u32 2, %s29
        %p2200 = scmp.lt.s32.totalorder %s2199, 1
        %s2201 = scalar_select %p2200, %s2199, 1
        %s2202 = smul.addr %s2201, 8
        %s2203 = scalar_lea.vmem %s14, %s2202
      $region88: #{gpt2_pallas.2} parent=75 // pred_fallthru
        _
    $region76: #{gpt2_pallas.2} parent=5 // pred_fallthru
      _
    %p2204 = scmp.le.s32.totalorder 2, %s20
    // Predicated region
    $region89: #{gpt2_pallas.2} parent=5 // pred_check
      %p2205 = pneg %p2204
    $region90: #{gpt2_pallas.2} parent=5 // pred_check_branch
      %2207 = sbr.rel (%p2205) target = $region92
    $region91: #{gpt2_pallas.2} parent=5 // pred_region
      %s2208 = ssub.s32 %s20, 2
    $region92: #{gpt2_pallas.2} parent=5 // pred_fallthru
      _
  $region6: #{gpt2_pallas.2} parent=0 // loop_footer
    %s24 = sadd.s32 1, %s20
  $region7: #{gpt2_pallas.2} parent=0 // loop_footer_branch
    %19 = sbr.rel target = $region3
  $region8: #{gpt2_pallas.2} parent=0 // loop_exit
    _

</llo_original>
